<compile_context>
chip_gen: v7x
topology: tpu7x:2x2x1
jax: 0.10.0
libtpu: 0.0.40
codegen_flags: <defaults>
</compile_context>

<pallas_src>
import math

import jax
import jax.numpy as jnp
from jax import lax
from jax.experimental import pallas as pl
from jax.experimental.pallas import tpu as pltpu


def _round_up(x, m):
    return ((x + m - 1) // m) * m


# ------------------------------ fused kernel ---------------------------------
def _make_fused_kernel(num_layers, T, Bp, Hp, unroll):
    """Kernel over whole (padded) sequence: all LSTM layers + linear head."""
    H4 = 4 * Hp

    def kernel(*refs):
        x_ref = refs[0]                                  # (T*Bp, Dp)  bf16
        layer_refs = refs[1:1 + 3 * num_layers]          # per layer: wih, whh, b
        wpred_ref = refs[1 + 3 * num_layers]             # (Hp, Op)    bf16
        bpred_ref = refs[2 + 3 * num_layers]             # (1, Op)     f32
        hid_ref = refs[3 + 3 * num_layers]               # (T*Bp, Hp)  f32 out
        pred_ref = refs[4 + 3 * num_layers]              # (T*Bp, Op)  f32 out
        gx_scr = refs[5 + 3 * num_layers]                # (T*Bp, 4Hp) f32 scratch

        for l in range(num_layers):                      # static, small
            wih_ref, whh_ref, b_ref = layer_refs[3 * l:3 * l + 3]
            if l == 0:
                inp = x_ref[...]
            else:
                inp = hid_ref[...]                       # previous layer output (VMEM)

            # ---- hoisted input projection: ONE big matmul for all T steps ----
            gx = jnp.dot(inp.astype(jnp.bfloat16), wih_ref[...],
                         preferred_element_type=jnp.float32) + b_ref[...]
            gx_scr[...] = gx                             # (T*Bp, 4Hp) f32

            # ---- serial recurrence: only h @ W_hh + elementwise per step ----
            def step(t, carry):
                h, c = carry                             # f32 (Bp, Hp)
                base = pl.multiple_of(t * Bp, Bp)        # sublane-aligned row base
                g = gx_scr[pl.ds(base, Bp), :] + jnp.dot(
                    h.astype(jnp.bfloat16), whh_ref[...],
                    preferred_element_type=jnp.float32)  # (Bp, 4Hp)
                # PyTorch gate order i, f, g, o; each slab is 128-lane aligned.
                i_g = jax.nn.sigmoid(g[:, 0 * Hp:1 * Hp])
                f_g = jax.nn.sigmoid(g[:, 1 * Hp:2 * Hp])
                g_g = jnp.tanh(g[:, 2 * Hp:3 * Hp])
                o_g = jax.nn.sigmoid(g[:, 3 * Hp:4 * Hp])
                c_new = f_g * c + i_g * g_g
                h_new = o_g * jnp.tanh(c_new)
                hid_ref[pl.ds(base, Bp), :] = h_new      # lane-dense (8,128) store
                return h_new, c_new

            h0 = jnp.zeros((Bp, Hp), jnp.float32)
            c0 = jnp.zeros((Bp, Hp), jnp.float32)
            lax.fori_loop(0, T, step, (h0, c0), unroll=unroll)

        # ---- linear head fused as epilogue: one lane-dense matmul ----
        pred = jnp.dot(hid_ref[...].astype(jnp.bfloat16), wpred_ref[...],
                       preferred_element_type=jnp.float32) + bpred_ref[...]
        pred_ref[...] = pred

    return kernel


# --------------------------- parameter preparation ---------------------------
def _pad_gate_weight(w, in_dim, in_pad, H, Hp):
    """torch (4H, in) -> (in_pad, 4*Hp) bf16, each gate in its own Hp lane slab."""
    w4 = w.reshape(4, H, in_dim)
    w4 = jnp.pad(w4, ((0, 0), (0, Hp - H), (0, in_pad - in_dim)))
    return jnp.transpose(w4, (2, 0, 1)).reshape(in_pad, 4 * Hp).astype(jnp.bfloat16)


def _pad_gate_bias(b, H, Hp):
    """torch (4H,) -> (1, 4*Hp) f32 with per-gate Hp padding (padded lanes = 0)."""
    b4 = jnp.pad(b.reshape(4, H), ((0, 0), (0, Hp - H)))
    return b4.reshape(1, 4 * Hp).astype(jnp.float32)


def init_frm_lstm_params(key, input_size, hidden_size, output_size, num_layers):
    """Raw f32 parameters in torch layout, U(-1/sqrt(H), 1/sqrt(H)) init."""
    params = {"lstm": [], "input_size": input_size, "hidden_size": hidden_size,
              "output_size": output_size}
    k = 1.0 / math.sqrt(hidden_size)
    keys = jax.random.split(key, num_layers * 4 + 2)
    for layer in range(num_layers):
        in_dim = input_size if layer == 0 else hidden_size
        k0, k1, k2, k3 = keys[layer * 4:(layer + 1) * 4]
        params["lstm"].append({
            "w_ih": jax.random.uniform(k0, (4 * hidden_size, in_dim),
                                       minval=-k, maxval=k, dtype=jnp.float32),
            "w_hh": jax.random.uniform(k1, (4 * hidden_size, hidden_size),
                                       minval=-k, maxval=k, dtype=jnp.float32),
            "b_ih": jax.random.uniform(k2, (4 * hidden_size,),
                                       minval=-k, maxval=k, dtype=jnp.float32),
            "b_hh": jax.random.uniform(k3, (4 * hidden_size,),
                                       minval=-k, maxval=k, dtype=jnp.float32),
        })
    kw, kb = keys[-2:]
    params["w_pred"] = jax.random.uniform(kw, (output_size, hidden_size),
                                          minval=-k, maxval=k, dtype=jnp.float32)
    params["b_pred"] = jax.random.uniform(kb, (output_size,),
                                          minval=-k, maxval=k, dtype=jnp.float32)
    return params


# ------------------------------- forward pass ---------------------------------
def frm_lstm_forward(feat, params):
    """feat: (B, T, input_size) batch-first. Returns (hidden, pred)."""
    B, T, D = feat.shape
    H = params["hidden_size"]
    O = params["output_size"]
    num_layers = len(params["lstm"])

    Bp = _round_up(B, 8)          # sublane padding
    Dp = _round_up(D, 128)        # lane padding
    Hp = _round_up(H, 128)
    Op = _round_up(O, 128)
    H4 = 4 * Hp

    # One small boundary transpose to time-major; everything downstream
    # (all layers + head) stays inside a single kernel in VMEM.
    x = jnp.transpose(feat.astype(jnp.float32), (1, 0, 2))        # (T, B, D)
    x = jnp.pad(x, ((0, 0), (0, Bp - B), (0, Dp - D)))
    x = x.reshape(T * Bp, Dp).astype(jnp.bfloat16)

    inputs = [x]
    in_specs = [pl.BlockSpec((T * Bp, Dp), lambda: (0, 0))]
    for l, layer in enumerate(params["lstm"]):
        in_dim = D if l == 0 else H
        in_pad = Dp if l == 0 else Hp
        inputs += [
            _pad_gate_weight(layer["w_ih"], in_dim, in_pad, H, Hp),   # (in_pad, 4Hp) bf16
            _pad_gate_weight(layer["w_hh"], H, Hp, H, Hp),            # (Hp, 4Hp)     bf16
            _pad_gate_bias(layer["b_ih"] + layer["b_hh"], H, Hp),     # (1, 4Hp)      f32
        ]
        in_specs += [
            pl.BlockSpec((in_pad, H4), lambda: (0, 0)),
            pl.BlockSpec((Hp, H4), lambda: (0, 0)),
            pl.BlockSpec((1, H4), lambda: (0, 0)),
        ]
    w_pred_t = jnp.pad(params["w_pred"], ((0, Op - O), (0, Hp - H))).T.astype(jnp.bfloat16)
    b_pred = jnp.pad(params["b_pred"], (0, Op - O))[None, :].astype(jnp.float32)
    inputs += [w_pred_t, b_pred]
    in_specs += [pl.BlockSpec((Hp, Op), lambda: (0, 0)),
                 pl.BlockSpec((1, Op), lambda: (0, 0))]

    kernel = _make_fused_kernel(num_layers, T, Bp, Hp, unroll=bool(T <= 16))

    hid_p, pred_p = pl.pallas_call(
        kernel,
        out_shape=(jax.ShapeDtypeStruct((T * Bp, Hp), jnp.float32),
                   jax.ShapeDtypeStruct((T * Bp, Op), jnp.float32)),
        in_specs=in_specs,
        out_specs=(pl.BlockSpec((T * Bp, Hp), lambda: (0, 0)),
                   pl.BlockSpec((T * Bp, Op), lambda: (0, 0))),
        scratch_shapes=[pltpu.VMEM((T * Bp, H4), jnp.float32)],   # gates_x scratch
    )(*inputs)

    hidden = jnp.transpose(hid_p.reshape(T, Bp, Hp)[:, :B, :H], (1, 0, 2))
    pred = jnp.transpose(pred_p.reshape(T, Bp, Op)[:, :B, :O], (1, 0, 2))
    return hidden, pred


# ------------------------------ pure-JAX reference ----------------------------
def _reference_forward(feat, params):
    x = feat.astype(jnp.float32)
    B, T, _ = x.shape
    H = params["hidden_size"]
    h_seq = x
    for layer in params["lstm"]:
        w_ih, w_hh = layer["w_ih"], layer["w_hh"]
        bias = layer["b_ih"] + layer["b_hh"]

        def step(carry, x_t):
            h, c = carry
            g = x_t @ w_ih.T + h @ w_hh.T + bias
            i = jax.nn.sigmoid(g[:, 0:H])
            f = jax.nn.sigmoid(g[:, H:2 * H])
            gg = jnp.tanh(g[:, 2 * H:3 * H])
            o = jax.nn.sigmoid(g[:, 3 * H:4 * H])
            c = f * c + i * gg
            h = o * jnp.tanh(c)
            return (h, c), h

        init = (jnp.zeros((B, H), jnp.float32), jnp.zeros((B, H), jnp.float32))
        _, hs = lax.scan(step, init, jnp.transpose(h_seq, (1, 0, 2)))
        h_seq = jnp.transpose(hs, (1, 0, 2))
    pred = h_seq @ params["w_pred"].T + params["b_pred"]
    return h_seq, pred


if __name__ == "__main__":
    batch, seq, input_size, hidden_size, output_size, num_layers = 2, 8, 16, 32, 8, 2

    key = jax.random.PRNGKey(0)
    k_feat, k_params = jax.random.split(key)
    feat = jax.random.normal(k_feat, (batch, seq, input_size), dtype=jnp.float32)
    params = init_frm_lstm_params(k_params, input_size, hidden_size,
                                  output_size, num_layers)

    hidden, pred = frm_lstm_forward(feat, params)
    jax.block_until_ready(hidden)
    jax.block_until_ready(pred)

    assert hidden.shape == (batch, seq, hidden_size)
    assert pred.shape == (batch, seq, output_size)

    # Numerical sanity check vs pure-JAX f32 reference (bf16 matmuls -> loose tol).
    ref_hidden, ref_pred = _reference_forward(feat, params)
    assert jnp.allclose(hidden, ref_hidden, atol=5e-2, rtol=5e-2), "hidden mismatch"
    assert jnp.allclose(pred, ref_pred, atol=5e-2, rtol=5e-2), "pred mismatch"

    print("KERNEL_OK")
</pallas_src>

<mosaic_0001>
module attributes {stable_mosaic.version = 11 : i64} {
  func.func @kernel(%arg0: memref<64x128xbf16, #tpu.memory_space<vmem>>, %arg1: memref<128x512xbf16, #tpu.memory_space<vmem>>, %arg2: memref<128x512xbf16, #tpu.memory_space<vmem>>, %arg3: memref<1x512xf32, #tpu.memory_space<vmem>>, %arg4: memref<128x512xbf16, #tpu.memory_space<vmem>>, %arg5: memref<128x512xbf16, #tpu.memory_space<vmem>>, %arg6: memref<1x512xf32, #tpu.memory_space<vmem>>, %arg7: memref<128x128xbf16, #tpu.memory_space<vmem>>, %arg8: memref<1x128xf32, #tpu.memory_space<vmem>>, %arg9: memref<64x128xf32, #tpu.memory_space<vmem>>, %arg10: memref<64x128xf32, #tpu.memory_space<vmem>>, %arg11: memref<64x512xf32, #tpu.memory_space<vmem>>) attributes {dimension_semantics = [], scalar_prefetch = 0 : i64, scratch_operands = 1 : i64, tpu.core_type = #tpu.core_type<tc>} {
    %c0 = arith.constant 0 : index
    %c0_0 = arith.constant 0 : index
    %0 = vector.load %arg0[%c0, %c0_0] : memref<64x128xbf16, #tpu.memory_space<vmem>>, vector<64x128xbf16>
    %c0_1 = arith.constant 0 : index
    %c0_2 = arith.constant 0 : index
    %1 = vector.load %arg1[%c0_1, %c0_2] : memref<128x512xbf16, #tpu.memory_space<vmem>>, vector<128x512xbf16>
    %cst = arith.constant dense<0.000000e+00> : vector<64x512xf32>
    %2 = tpu.matmul %0, %1, %cst {dimension_numbers = #tpu.dot_dimension_numbers<[1], [0], [0], [1], [0, 0, 1, 1], [], []>} : vector<64x128xbf16>, vector<128x512xbf16>, vector<64x512xf32> -> vector<64x512xf32>
    %c0_3 = arith.constant 0 : index
    %c0_4 = arith.constant 0 : index
    %3 = vector.load %arg3[%c0_3, %c0_4] : memref<1x512xf32, #tpu.memory_space<vmem>>, vector<1x512xf32>
    %4 = vector.broadcast %3 : vector<1x512xf32> to vector<64x512xf32>
    %5 = arith.addf %2, %4 : vector<64x512xf32>
    %c0_5 = arith.constant 0 : index
    %c0_6 = arith.constant 0 : index
    %6 = vector.load %arg11[%c0_5, %c0_6] : memref<64x512xf32, #tpu.memory_space<vmem>>, vector<64x512xf32>
    tpu.vector_store %arg11[%c0_5, %c0_6], %5 {strides = array<i32>} : memref<64x512xf32, #tpu.memory_space<vmem>>, vector<64x512xf32>,
    %cst_7 = arith.constant 0.000000e+00 : f32
    %7 = vector.broadcast %cst_7 : f32 to vector<8x128xf32>
    %cst_8 = arith.constant 0.000000e+00 : f32
    %8 = vector.broadcast %cst_8 : f32 to vector<8x128xf32>
    %c0_i32 = arith.constant 0 : i32
    %c8_i32 = arith.constant 8 : i32
    %9 = arith.muli %c0_i32, %c8_i32 : i32
    %10 = tpu.assume_multiple %9, 8 : i32
    %11 = arith.index_cast %10 : i32 to index
    %c0_9 = arith.constant 0 : index
    %12 = vector.load %arg11[%11, %c0_9] : memref<64x512xf32, #tpu.memory_space<vmem>>, vector<8x512xf32>
    %13 = arith.truncf %7 : vector<8x128xf32> to vector<8x128xbf16>
    %c0_10 = arith.constant 0 : index
    %c0_11 = arith.constant 0 : index
    %14 = vector.load %arg2[%c0_10, %c0_11] : memref<128x512xbf16, #tpu.memory_space<vmem>>, vector<128x512xbf16>
    %cst_12 = arith.constant dense<0.000000e+00> : vector<8x512xf32>
    %15 = tpu.matmul %13, %14, %cst_12 {dimension_numbers = #tpu.dot_dimension_numbers<[1], [0], [0], [1], [0, 0, 1, 1], [], []>} : vector<8x128xbf16>, vector<128x512xbf16>, vector<8x512xf32> -> vector<8x512xf32>
    %16 = arith.addf %12, %15 : vector<8x512xf32>
    %17 = vector.extract_strided_slice %16 {offsets = [0, 0], sizes = [8, 128], strides = [1, 1]} : vector<8x512xf32> to vector<8x128xf32>
    %18 = arith.negf %17 : vector<8x128xf32>
    %19 = math.exp %18 : vector<8x128xf32>
    %cst_13 = arith.constant 1.000000e+00 : f32
    %20 = vector.broadcast %cst_13 : f32 to vector<8x128xf32>
    %21 = arith.addf %20, %19 : vector<8x128xf32>
    %22 = arith.divf %20, %21 : vector<8x128xf32>
    %23 = vector.extract_strided_slice %16 {offsets = [0, 128], sizes = [8, 128], strides = [1, 1]} : vector<8x512xf32> to vector<8x128xf32>
    %24 = arith.negf %23 : vector<8x128xf32>
    %25 = math.exp %24 : vector<8x128xf32>
    %cst_14 = arith.constant 1.000000e+00 : f32
    %26 = vector.broadcast %cst_14 : f32 to vector<8x128xf32>
    %27 = arith.addf %26, %25 : vector<8x128xf32>
    %28 = arith.divf %26, %27 : vector<8x128xf32>
    %29 = vector.extract_strided_slice %16 {offsets = [0, 256], sizes = [8, 128], strides = [1, 1]} : vector<8x512xf32> to vector<8x128xf32>
    %30 = math.tanh %29 : vector<8x128xf32>
    %31 = vector.extract_strided_slice %16 {offsets = [0, 384], sizes = [8, 128], strides = [1, 1]} : vector<8x512xf32> to vector<8x128xf32>
    %32 = arith.negf %31 : vector<8x128xf32>
    %33 = math.exp %32 : vector<8x128xf32>
    %cst_15 = arith.constant 1.000000e+00 : f32
    %34 = vector.broadcast %cst_15 : f32 to vector<8x128xf32>
    %35 = arith.addf %34, %33 : vector<8x128xf32>
    %36 = arith.divf %34, %35 : vector<8x128xf32>
    %37 = arith.mulf %28, %8 : vector<8x128xf32>
    %38 = arith.mulf %22, %30 : vector<8x128xf32>
    %39 = arith.addf %37, %38 : vector<8x128xf32>
    %40 = math.tanh %39 : vector<8x128xf32>
    %41 = arith.mulf %36, %40 : vector<8x128xf32>
    %42 = arith.index_cast %10 : i32 to index
    %c0_16 = arith.constant 0 : index
    %43 = vector.load %arg9[%42, %c0_16] : memref<64x128xf32, #tpu.memory_space<vmem>>, vector<8x128xf32>
    tpu.vector_store %arg9[%42, %c0_16], %41 {strides = array<i32>} : memref<64x128xf32, #tpu.memory_space<vmem>>, vector<8x128xf32>,
    %c1_i32 = arith.constant 1 : i32
    %c8_i32_17 = arith.constant 8 : i32
    %44 = arith.muli %c1_i32, %c8_i32_17 : i32
    %45 = tpu.assume_multiple %44, 8 : i32
    %46 = arith.index_cast %45 : i32 to index
    %c0_18 = arith.constant 0 : index
    %47 = vector.load %arg11[%46, %c0_18] : memref<64x512xf32, #tpu.memory_space<vmem>>, vector<8x512xf32>
    %48 = arith.truncf %41 : vector<8x128xf32> to vector<8x128xbf16>
    %c0_19 = arith.constant 0 : index
    %c0_20 = arith.constant 0 : index
    %49 = vector.load %arg2[%c0_19, %c0_20] : memref<128x512xbf16, #tpu.memory_space<vmem>>, vector<128x512xbf16>
    %cst_21 = arith.constant dense<0.000000e+00> : vector<8x512xf32>
    %50 = tpu.matmul %48, %49, %cst_21 {dimension_numbers = #tpu.dot_dimension_numbers<[1], [0], [0], [1], [0, 0, 1, 1], [], []>} : vector<8x128xbf16>, vector<128x512xbf16>, vector<8x512xf32> -> vector<8x512xf32>
    %51 = arith.addf %47, %50 : vector<8x512xf32>
    %52 = vector.extract_strided_slice %51 {offsets = [0, 0], sizes = [8, 128], strides = [1, 1]} : vector<8x512xf32> to vector<8x128xf32>
    %53 = arith.negf %52 : vector<8x128xf32>
    %54 = math.exp %53 : vector<8x128xf32>
    %cst_22 = arith.constant 1.000000e+00 : f32
    %55 = vector.broadcast %cst_22 : f32 to vector<8x128xf32>
    %56 = arith.addf %55, %54 : vector<8x128xf32>
    %57 = arith.divf %55, %56 : vector<8x128xf32>
    %58 = vector.extract_strided_slice %51 {offsets = [0, 128], sizes = [8, 128], strides = [1, 1]} : vector<8x512xf32> to vector<8x128xf32>
    %59 = arith.negf %58 : vector<8x128xf32>
    %60 = math.exp %59 : vector<8x128xf32>
    %cst_23 = arith.constant 1.000000e+00 : f32
    %61 = vector.broadcast %cst_23 : f32 to vector<8x128xf32>
    %62 = arith.addf %61, %60 : vector<8x128xf32>
    %63 = arith.divf %61, %62 : vector<8x128xf32>
    %64 = vector.extract_strided_slice %51 {offsets = [0, 256], sizes = [8, 128], strides = [1, 1]} : vector<8x512xf32> to vector<8x128xf32>
    %65 = math.tanh %64 : vector<8x128xf32>
    %66 = vector.extract_strided_slice %51 {offsets = [0, 384], sizes = [8, 128], strides = [1, 1]} : vector<8x512xf32> to vector<8x128xf32>
    %67 = arith.negf %66 : vector<8x128xf32>
    %68 = math.exp %67 : vector<8x128xf32>
    %cst_24 = arith.constant 1.000000e+00 : f32
    %69 = vector.broadcast %cst_24 : f32 to vector<8x128xf32>
    %70 = arith.addf %69, %68 : vector<8x128xf32>
    %71 = arith.divf %69, %70 : vector<8x128xf32>
    %72 = arith.mulf %63, %39 : vector<8x128xf32>
    %73 = arith.mulf %57, %65 : vector<8x128xf32>
    %74 = arith.addf %72, %73 : vector<8x128xf32>
    %75 = math.tanh %74 : vector<8x128xf32>
    %76 = arith.mulf %71, %75 : vector<8x128xf32>
    %77 = arith.index_cast %45 : i32 to index
    %c0_25 = arith.constant 0 : index
    %78 = vector.load %arg9[%77, %c0_25] : memref<64x128xf32, #tpu.memory_space<vmem>>, vector<8x128xf32>
    tpu.vector_store %arg9[%77, %c0_25], %76 {strides = array<i32>} : memref<64x128xf32, #tpu.memory_space<vmem>>, vector<8x128xf32>,
    %c2_i32 = arith.constant 2 : i32
    %c8_i32_26 = arith.constant 8 : i32
    %79 = arith.muli %c2_i32, %c8_i32_26 : i32
    %80 = tpu.assume_multiple %79, 8 : i32
    %81 = arith.index_cast %80 : i32 to index
    %c0_27 = arith.constant 0 : index
    %82 = vector.load %arg11[%81, %c0_27] : memref<64x512xf32, #tpu.memory_space<vmem>>, vector<8x512xf32>
    %83 = arith.truncf %76 : vector<8x128xf32> to vector<8x128xbf16>
    %c0_28 = arith.constant 0 : index
    %c0_29 = arith.constant 0 : index
    %84 = vector.load %arg2[%c0_28, %c0_29] : memref<128x512xbf16, #tpu.memory_space<vmem>>, vector<128x512xbf16>
    %cst_30 = arith.constant dense<0.000000e+00> : vector<8x512xf32>
    %85 = tpu.matmul %83, %84, %cst_30 {dimension_numbers = #tpu.dot_dimension_numbers<[1], [0], [0], [1], [0, 0, 1, 1], [], []>} : vector<8x128xbf16>, vector<128x512xbf16>, vector<8x512xf32> -> vector<8x512xf32>
    %86 = arith.addf %82, %85 : vector<8x512xf32>
    %87 = vector.extract_strided_slice %86 {offsets = [0, 0], sizes = [8, 128], strides = [1, 1]} : vector<8x512xf32> to vector<8x128xf32>
    %88 = arith.negf %87 : vector<8x128xf32>
    %89 = math.exp %88 : vector<8x128xf32>
    %cst_31 = arith.constant 1.000000e+00 : f32
    %90 = vector.broadcast %cst_31 : f32 to vector<8x128xf32>
    %91 = arith.addf %90, %89 : vector<8x128xf32>
    %92 = arith.divf %90, %91 : vector<8x128xf32>
    %93 = vector.extract_strided_slice %86 {offsets = [0, 128], sizes = [8, 128], strides = [1, 1]} : vector<8x512xf32> to vector<8x128xf32>
    %94 = arith.negf %93 : vector<8x128xf32>
    %95 = math.exp %94 : vector<8x128xf32>
    %cst_32 = arith.constant 1.000000e+00 : f32
    %96 = vector.broadcast %cst_32 : f32 to vector<8x128xf32>
    %97 = arith.addf %96, %95 : vector<8x128xf32>
    %98 = arith.divf %96, %97 : vector<8x128xf32>
    %99 = vector.extract_strided_slice %86 {offsets = [0, 256], sizes = [8, 128], strides = [1, 1]} : vector<8x512xf32> to vector<8x128xf32>
    %100 = math.tanh %99 : vector<8x128xf32>
    %101 = vector.extract_strided_slice %86 {offsets = [0, 384], sizes = [8, 128], strides = [1, 1]} : vector<8x512xf32> to vector<8x128xf32>
    %102 = arith.negf %101 : vector<8x128xf32>
    %103 = math.exp %102 : vector<8x128xf32>
    %cst_33 = arith.constant 1.000000e+00 : f32
    %104 = vector.broadcast %cst_33 : f32 to vector<8x128xf32>
    %105 = arith.addf %104, %103 : vector<8x128xf32>
    %106 = arith.divf %104, %105 : vector<8x128xf32>
    %107 = arith.mulf %98, %74 : vector<8x128xf32>
    %108 = arith.mulf %92, %100 : vector<8x128xf32>
    %109 = arith.addf %107, %108 : vector<8x128xf32>
    %110 = math.tanh %109 : vector<8x128xf32>
    %111 = arith.mulf %106, %110 : vector<8x128xf32>
    %112 = arith.index_cast %80 : i32 to index
    %c0_34 = arith.constant 0 : index
    %113 = vector.load %arg9[%112, %c0_34] : memref<64x128xf32, #tpu.memory_space<vmem>>, vector<8x128xf32>
    tpu.vector_store %arg9[%112, %c0_34], %111 {strides = array<i32>} : memref<64x128xf32, #tpu.memory_space<vmem>>, vector<8x128xf32>,
    %c3_i32 = arith.constant 3 : i32
    %c8_i32_35 = arith.constant 8 : i32
    %114 = arith.muli %c3_i32, %c8_i32_35 : i32
    %115 = tpu.assume_multiple %114, 8 : i32
    %116 = arith.index_cast %115 : i32 to index
    %c0_36 = arith.constant 0 : index
    %117 = vector.load %arg11[%116, %c0_36] : memref<64x512xf32, #tpu.memory_space<vmem>>, vector<8x512xf32>
    %118 = arith.truncf %111 : vector<8x128xf32> to vector<8x128xbf16>
    %c0_37 = arith.constant 0 : index
    %c0_38 = arith.constant 0 : index
    %119 = vector.load %arg2[%c0_37, %c0_38] : memref<128x512xbf16, #tpu.memory_space<vmem>>, vector<128x512xbf16>
    %cst_39 = arith.constant dense<0.000000e+00> : vector<8x512xf32>
    %120 = tpu.matmul %118, %119, %cst_39 {dimension_numbers = #tpu.dot_dimension_numbers<[1], [0], [0], [1], [0, 0, 1, 1], [], []>} : vector<8x128xbf16>, vector<128x512xbf16>, vector<8x512xf32> -> vector<8x512xf32>
    %121 = arith.addf %117, %120 : vector<8x512xf32>
    %122 = vector.extract_strided_slice %121 {offsets = [0, 0], sizes = [8, 128], strides = [1, 1]} : vector<8x512xf32> to vector<8x128xf32>
    %123 = arith.negf %122 : vector<8x128xf32>
    %124 = math.exp %123 : vector<8x128xf32>
    %cst_40 = arith.constant 1.000000e+00 : f32
    %125 = vector.broadcast %cst_40 : f32 to vector<8x128xf32>
    %126 = arith.addf %125, %124 : vector<8x128xf32>
    %127 = arith.divf %125, %126 : vector<8x128xf32>
    %128 = vector.extract_strided_slice %121 {offsets = [0, 128], sizes = [8, 128], strides = [1, 1]} : vector<8x512xf32> to vector<8x128xf32>
    %129 = arith.negf %128 : vector<8x128xf32>
    %130 = math.exp %129 : vector<8x128xf32>
    %cst_41 = arith.constant 1.000000e+00 : f32
    %131 = vector.broadcast %cst_41 : f32 to vector<8x128xf32>
    %132 = arith.addf %131, %130 : vector<8x128xf32>
    %133 = arith.divf %131, %132 : vector<8x128xf32>
    %134 = vector.extract_strided_slice %121 {offsets = [0, 256], sizes = [8, 128], strides = [1, 1]} : vector<8x512xf32> to vector<8x128xf32>
    %135 = math.tanh %134 : vector<8x128xf32>
    %136 = vector.extract_strided_slice %121 {offsets = [0, 384], sizes = [8, 128], strides = [1, 1]} : vector<8x512xf32> to vector<8x128xf32>
    %137 = arith.negf %136 : vector<8x128xf32>
    %138 = math.exp %137 : vector<8x128xf32>
    %cst_42 = arith.constant 1.000000e+00 : f32
    %139 = vector.broadcast %cst_42 : f32 to vector<8x128xf32>
    %140 = arith.addf %139, %138 : vector<8x128xf32>
    %141 = arith.divf %139, %140 : vector<8x128xf32>
    %142 = arith.mulf %133, %109 : vector<8x128xf32>
    %143 = arith.mulf %127, %135 : vector<8x128xf32>
    %144 = arith.addf %142, %143 : vector<8x128xf32>
    %145 = math.tanh %144 : vector<8x128xf32>
    %146 = arith.mulf %141, %145 : vector<8x128xf32>
    %147 = arith.index_cast %115 : i32 to index
    %c0_43 = arith.constant 0 : index
    %148 = vector.load %arg9[%147, %c0_43] : memref<64x128xf32, #tpu.memory_space<vmem>>, vector<8x128xf32>
    tpu.vector_store %arg9[%147, %c0_43], %146 {strides = array<i32>} : memref<64x128xf32, #tpu.memory_space<vmem>>, vector<8x128xf32>,
    %c4_i32 = arith.constant 4 : i32
    %c8_i32_44 = arith.constant 8 : i32
    %149 = arith.muli %c4_i32, %c8_i32_44 : i32
    %150 = tpu.assume_multiple %149, 8 : i32
    %151 = arith.index_cast %150 : i32 to index
    %c0_45 = arith.constant 0 : index
    %152 = vector.load %arg11[%151, %c0_45] : memref<64x512xf32, #tpu.memory_space<vmem>>, vector<8x512xf32>
    %153 = arith.truncf %146 : vector<8x128xf32> to vector<8x128xbf16>
    %c0_46 = arith.constant 0 : index
    %c0_47 = arith.constant 0 : index
    %154 = vector.load %arg2[%c0_46, %c0_47] : memref<128x512xbf16, #tpu.memory_space<vmem>>, vector<128x512xbf16>
    %cst_48 = arith.constant dense<0.000000e+00> : vector<8x512xf32>
    %155 = tpu.matmul %153, %154, %cst_48 {dimension_numbers = #tpu.dot_dimension_numbers<[1], [0], [0], [1], [0, 0, 1, 1], [], []>} : vector<8x128xbf16>, vector<128x512xbf16>, vector<8x512xf32> -> vector<8x512xf32>
    %156 = arith.addf %152, %155 : vector<8x512xf32>
    %157 = vector.extract_strided_slice %156 {offsets = [0, 0], sizes = [8, 128], strides = [1, 1]} : vector<8x512xf32> to vector<8x128xf32>
    %158 = arith.negf %157 : vector<8x128xf32>
    %159 = math.exp %158 : vector<8x128xf32>
    %cst_49 = arith.constant 1.000000e+00 : f32
    %160 = vector.broadcast %cst_49 : f32 to vector<8x128xf32>
    %161 = arith.addf %160, %159 : vector<8x128xf32>
    %162 = arith.divf %160, %161 : vector<8x128xf32>
    %163 = vector.extract_strided_slice %156 {offsets = [0, 128], sizes = [8, 128], strides = [1, 1]} : vector<8x512xf32> to vector<8x128xf32>
    %164 = arith.negf %163 : vector<8x128xf32>
    %165 = math.exp %164 : vector<8x128xf32>
    %cst_50 = arith.constant 1.000000e+00 : f32
    %166 = vector.broadcast %cst_50 : f32 to vector<8x128xf32>
    %167 = arith.addf %166, %165 : vector<8x128xf32>
    %168 = arith.divf %166, %167 : vector<8x128xf32>
    %169 = vector.extract_strided_slice %156 {offsets = [0, 256], sizes = [8, 128], strides = [1, 1]} : vector<8x512xf32> to vector<8x128xf32>
    %170 = math.tanh %169 : vector<8x128xf32>
    %171 = vector.extract_strided_slice %156 {offsets = [0, 384], sizes = [8, 128], strides = [1, 1]} : vector<8x512xf32> to vector<8x128xf32>
    %172 = arith.negf %171 : vector<8x128xf32>
    %173 = math.exp %172 : vector<8x128xf32>
    %cst_51 = arith.constant 1.000000e+00 : f32
    %174 = vector.broadcast %cst_51 : f32 to vector<8x128xf32>
    %175 = arith.addf %174, %173 : vector<8x128xf32>
    %176 = arith.divf %174, %175 : vector<8x128xf32>
    %177 = arith.mulf %168, %144 : vector<8x128xf32>
    %178 = arith.mulf %162, %170 : vector<8x128xf32>
    %179 = arith.addf %177, %178 : vector<8x128xf32>
    %180 = math.tanh %179 : vector<8x128xf32>
    %181 = arith.mulf %176, %180 : vector<8x128xf32>
    %182 = arith.index_cast %150 : i32 to index
    %c0_52 = arith.constant 0 : index
    %183 = vector.load %arg9[%182, %c0_52] : memref<64x128xf32, #tpu.memory_space<vmem>>, vector<8x128xf32>
    tpu.vector_store %arg9[%182, %c0_52], %181 {strides = array<i32>} : memref<64x128xf32, #tpu.memory_space<vmem>>, vector<8x128xf32>,
    %c5_i32 = arith.constant 5 : i32
    %c8_i32_53 = arith.constant 8 : i32
    %184 = arith.muli %c5_i32, %c8_i32_53 : i32
    %185 = tpu.assume_multiple %184, 8 : i32
    %186 = arith.index_cast %185 : i32 to index
    %c0_54 = arith.constant 0 : index
    %187 = vector.load %arg11[%186, %c0_54] : memref<64x512xf32, #tpu.memory_space<vmem>>, vector<8x512xf32>
    %188 = arith.truncf %181 : vector<8x128xf32> to vector<8x128xbf16>
    %c0_55 = arith.constant 0 : index
    %c0_56 = arith.constant 0 : index
    %189 = vector.load %arg2[%c0_55, %c0_56] : memref<128x512xbf16, #tpu.memory_space<vmem>>, vector<128x512xbf16>
    %cst_57 = arith.constant dense<0.000000e+00> : vector<8x512xf32>
    %190 = tpu.matmul %188, %189, %cst_57 {dimension_numbers = #tpu.dot_dimension_numbers<[1], [0], [0], [1], [0, 0, 1, 1], [], []>} : vector<8x128xbf16>, vector<128x512xbf16>, vector<8x512xf32> -> vector<8x512xf32>
    %191 = arith.addf %187, %190 : vector<8x512xf32>
    %192 = vector.extract_strided_slice %191 {offsets = [0, 0], sizes = [8, 128], strides = [1, 1]} : vector<8x512xf32> to vector<8x128xf32>
    %193 = arith.negf %192 : vector<8x128xf32>
    %194 = math.exp %193 : vector<8x128xf32>
    %cst_58 = arith.constant 1.000000e+00 : f32
    %195 = vector.broadcast %cst_58 : f32 to vector<8x128xf32>
    %196 = arith.addf %195, %194 : vector<8x128xf32>
    %197 = arith.divf %195, %196 : vector<8x128xf32>
    %198 = vector.extract_strided_slice %191 {offsets = [0, 128], sizes = [8, 128], strides = [1, 1]} : vector<8x512xf32> to vector<8x128xf32>
    %199 = arith.negf %198 : vector<8x128xf32>
    %200 = math.exp %199 : vector<8x128xf32>
    %cst_59 = arith.constant 1.000000e+00 : f32
    %201 = vector.broadcast %cst_59 : f32 to vector<8x128xf32>
    %202 = arith.addf %201, %200 : vector<8x128xf32>
    %203 = arith.divf %201, %202 : vector<8x128xf32>
    %204 = vector.extract_strided_slice %191 {offsets = [0, 256], sizes = [8, 128], strides = [1, 1]} : vector<8x512xf32> to vector<8x128xf32>
    %205 = math.tanh %204 : vector<8x128xf32>
    %206 = vector.extract_strided_slice %191 {offsets = [0, 384], sizes = [8, 128], strides = [1, 1]} : vector<8x512xf32> to vector<8x128xf32>
    %207 = arith.negf %206 : vector<8x128xf32>
    %208 = math.exp %207 : vector<8x128xf32>
    %cst_60 = arith.constant 1.000000e+00 : f32
    %209 = vector.broadcast %cst_60 : f32 to vector<8x128xf32>
    %210 = arith.addf %209, %208 : vector<8x128xf32>
    %211 = arith.divf %209, %210 : vector<8x128xf32>
    %212 = arith.mulf %203, %179 : vector<8x128xf32>
    %213 = arith.mulf %197, %205 : vector<8x128xf32>
    %214 = arith.addf %212, %213 : vector<8x128xf32>
    %215 = math.tanh %214 : vector<8x128xf32>
    %216 = arith.mulf %211, %215 : vector<8x128xf32>
    %217 = arith.index_cast %185 : i32 to index
    %c0_61 = arith.constant 0 : index
    %218 = vector.load %arg9[%217, %c0_61] : memref<64x128xf32, #tpu.memory_space<vmem>>, vector<8x128xf32>
    tpu.vector_store %arg9[%217, %c0_61], %216 {strides = array<i32>} : memref<64x128xf32, #tpu.memory_space<vmem>>, vector<8x128xf32>,
    %c6_i32 = arith.constant 6 : i32
    %c8_i32_62 = arith.constant 8 : i32
    %219 = arith.muli %c6_i32, %c8_i32_62 : i32
    %220 = tpu.assume_multiple %219, 8 : i32
    %221 = arith.index_cast %220 : i32 to index
    %c0_63 = arith.constant 0 : index
    %222 = vector.load %arg11[%221, %c0_63] : memref<64x512xf32, #tpu.memory_space<vmem>>, vector<8x512xf32>
    %223 = arith.truncf %216 : vector<8x128xf32> to vector<8x128xbf16>
    %c0_64 = arith.constant 0 : index
    %c0_65 = arith.constant 0 : index
    %224 = vector.load %arg2[%c0_64, %c0_65] : memref<128x512xbf16, #tpu.memory_space<vmem>>, vector<128x512xbf16>
    %cst_66 = arith.constant dense<0.000000e+00> : vector<8x512xf32>
    %225 = tpu.matmul %223, %224, %cst_66 {dimension_numbers = #tpu.dot_dimension_numbers<[1], [0], [0], [1], [0, 0, 1, 1], [], []>} : vector<8x128xbf16>, vector<128x512xbf16>, vector<8x512xf32> -> vector<8x512xf32>
    %226 = arith.addf %222, %225 : vector<8x512xf32>
    %227 = vector.extract_strided_slice %226 {offsets = [0, 0], sizes = [8, 128], strides = [1, 1]} : vector<8x512xf32> to vector<8x128xf32>
    %228 = arith.negf %227 : vector<8x128xf32>
    %229 = math.exp %228 : vector<8x128xf32>
    %cst_67 = arith.constant 1.000000e+00 : f32
    %230 = vector.broadcast %cst_67 : f32 to vector<8x128xf32>
    %231 = arith.addf %230, %229 : vector<8x128xf32>
    %232 = arith.divf %230, %231 : vector<8x128xf32>
    %233 = vector.extract_strided_slice %226 {offsets = [0, 128], sizes = [8, 128], strides = [1, 1]} : vector<8x512xf32> to vector<8x128xf32>
    %234 = arith.negf %233 : vector<8x128xf32>
    %235 = math.exp %234 : vector<8x128xf32>
    %cst_68 = arith.constant 1.000000e+00 : f32
    %236 = vector.broadcast %cst_68 : f32 to vector<8x128xf32>
    %237 = arith.addf %236, %235 : vector<8x128xf32>
    %238 = arith.divf %236, %237 : vector<8x128xf32>
    %239 = vector.extract_strided_slice %226 {offsets = [0, 256], sizes = [8, 128], strides = [1, 1]} : vector<8x512xf32> to vector<8x128xf32>
    %240 = math.tanh %239 : vector<8x128xf32>
    %241 = vector.extract_strided_slice %226 {offsets = [0, 384], sizes = [8, 128], strides = [1, 1]} : vector<8x512xf32> to vector<8x128xf32>
    %242 = arith.negf %241 : vector<8x128xf32>
    %243 = math.exp %242 : vector<8x128xf32>
    %cst_69 = arith.constant 1.000000e+00 : f32
    %244 = vector.broadcast %cst_69 : f32 to vector<8x128xf32>
    %245 = arith.addf %244, %243 : vector<8x128xf32>
    %246 = arith.divf %244, %245 : vector<8x128xf32>
    %247 = arith.mulf %238, %214 : vector<8x128xf32>
    %248 = arith.mulf %232, %240 : vector<8x128xf32>
    %249 = arith.addf %247, %248 : vector<8x128xf32>
    %250 = math.tanh %249 : vector<8x128xf32>
    %251 = arith.mulf %246, %250 : vector<8x128xf32>
    %252 = arith.index_cast %220 : i32 to index
    %c0_70 = arith.constant 0 : index
    %253 = vector.load %arg9[%252, %c0_70] : memref<64x128xf32, #tpu.memory_space<vmem>>, vector<8x128xf32>
    tpu.vector_store %arg9[%252, %c0_70], %251 {strides = array<i32>} : memref<64x128xf32, #tpu.memory_space<vmem>>, vector<8x128xf32>,
    %c7_i32 = arith.constant 7 : i32
    %c8_i32_71 = arith.constant 8 : i32
    %254 = arith.muli %c7_i32, %c8_i32_71 : i32
    %255 = tpu.assume_multiple %254, 8 : i32
    %256 = arith.index_cast %255 : i32 to index
    %c0_72 = arith.constant 0 : index
    %257 = vector.load %arg11[%256, %c0_72] : memref<64x512xf32, #tpu.memory_space<vmem>>, vector<8x512xf32>
    %258 = arith.truncf %251 : vector<8x128xf32> to vector<8x128xbf16>
    %c0_73 = arith.constant 0 : index
    %c0_74 = arith.constant 0 : index
    %259 = vector.load %arg2[%c0_73, %c0_74] : memref<128x512xbf16, #tpu.memory_space<vmem>>, vector<128x512xbf16>
    %cst_75 = arith.constant dense<0.000000e+00> : vector<8x512xf32>
    %260 = tpu.matmul %258, %259, %cst_75 {dimension_numbers = #tpu.dot_dimension_numbers<[1], [0], [0], [1], [0, 0, 1, 1], [], []>} : vector<8x128xbf16>, vector<128x512xbf16>, vector<8x512xf32> -> vector<8x512xf32>
    %261 = arith.addf %257, %260 : vector<8x512xf32>
    %262 = vector.extract_strided_slice %261 {offsets = [0, 0], sizes = [8, 128], strides = [1, 1]} : vector<8x512xf32> to vector<8x128xf32>
    %263 = arith.negf %262 : vector<8x128xf32>
    %264 = math.exp %263 : vector<8x128xf32>
    %cst_76 = arith.constant 1.000000e+00 : f32
    %265 = vector.broadcast %cst_76 : f32 to vector<8x128xf32>
    %266 = arith.addf %265, %264 : vector<8x128xf32>
    %267 = arith.divf %265, %266 : vector<8x128xf32>
    %268 = vector.extract_strided_slice %261 {offsets = [0, 128], sizes = [8, 128], strides = [1, 1]} : vector<8x512xf32> to vector<8x128xf32>
    %269 = arith.negf %268 : vector<8x128xf32>
    %270 = math.exp %269 : vector<8x128xf32>
    %cst_77 = arith.constant 1.000000e+00 : f32
    %271 = vector.broadcast %cst_77 : f32 to vector<8x128xf32>
    %272 = arith.addf %271, %270 : vector<8x128xf32>
    %273 = arith.divf %271, %272 : vector<8x128xf32>
    %274 = vector.extract_strided_slice %261 {offsets = [0, 256], sizes = [8, 128], strides = [1, 1]} : vector<8x512xf32> to vector<8x128xf32>
    %275 = math.tanh %274 : vector<8x128xf32>
    %276 = vector.extract_strided_slice %261 {offsets = [0, 384], sizes = [8, 128], strides = [1, 1]} : vector<8x512xf32> to vector<8x128xf32>
    %277 = arith.negf %276 : vector<8x128xf32>
    %278 = math.exp %277 : vector<8x128xf32>
    %cst_78 = arith.constant 1.000000e+00 : f32
    %279 = vector.broadcast %cst_78 : f32 to vector<8x128xf32>
    %280 = arith.addf %279, %278 : vector<8x128xf32>
    %281 = arith.divf %279, %280 : vector<8x128xf32>
    %282 = arith.mulf %273, %249 : vector<8x128xf32>
    %283 = arith.mulf %267, %275 : vector<8x128xf32>
    %284 = arith.addf %282, %283 : vector<8x128xf32>
    %285 = math.tanh %284 : vector<8x128xf32>
    %286 = arith.mulf %281, %285 : vector<8x128xf32>
    %287 = arith.index_cast %255 : i32 to index
    %c0_79 = arith.constant 0 : index
    %288 = vector.load %arg9[%287, %c0_79] : memref<64x128xf32, #tpu.memory_space<vmem>>, vector<8x128xf32>
    tpu.vector_store %arg9[%287, %c0_79], %286 {strides = array<i32>} : memref<64x128xf32, #tpu.memory_space<vmem>>, vector<8x128xf32>,
    %c8_i32_80 = arith.constant 8 : i32
    %c0_81 = arith.constant 0 : index
    %c0_82 = arith.constant 0 : index
    %289 = vector.load %arg9[%c0_81, %c0_82] : memref<64x128xf32, #tpu.memory_space<vmem>>, vector<64x128xf32>
    %290 = arith.truncf %289 : vector<64x128xf32> to vector<64x128xbf16>
    %c0_83 = arith.constant 0 : index
    %c0_84 = arith.constant 0 : index
    %291 = vector.load %arg4[%c0_83, %c0_84] : memref<128x512xbf16, #tpu.memory_space<vmem>>, vector<128x512xbf16>
    %cst_85 = arith.constant dense<0.000000e+00> : vector<64x512xf32>
    %292 = tpu.matmul %290, %291, %cst_85 {dimension_numbers = #tpu.dot_dimension_numbers<[1], [0], [0], [1], [0, 0, 1, 1], [], []>} : vector<64x128xbf16>, vector<128x512xbf16>, vector<64x512xf32> -> vector<64x512xf32>
    %c0_86 = arith.constant 0 : index
    %c0_87 = arith.constant 0 : index
    %293 = vector.load %arg6[%c0_86, %c0_87] : memref<1x512xf32, #tpu.memory_space<vmem>>, vector<1x512xf32>
    %294 = vector.broadcast %293 : vector<1x512xf32> to vector<64x512xf32>
    %295 = arith.addf %292, %294 : vector<64x512xf32>
    %c0_88 = arith.constant 0 : index
    %c0_89 = arith.constant 0 : index
    %296 = vector.load %arg11[%c0_88, %c0_89] : memref<64x512xf32, #tpu.memory_space<vmem>>, vector<64x512xf32>
    tpu.vector_store %arg11[%c0_88, %c0_89], %295 {strides = array<i32>} : memref<64x512xf32, #tpu.memory_space<vmem>>, vector<64x512xf32>,
    %cst_90 = arith.constant 0.000000e+00 : f32
    %297 = vector.broadcast %cst_90 : f32 to vector<8x128xf32>
    %cst_91 = arith.constant 0.000000e+00 : f32
    %298 = vector.broadcast %cst_91 : f32 to vector<8x128xf32>
    %c0_i32_92 = arith.constant 0 : i32
    %c8_i32_93 = arith.constant 8 : i32
    %299 = arith.muli %c0_i32_92, %c8_i32_93 : i32
    %300 = tpu.assume_multiple %299, 8 : i32
    %301 = arith.index_cast %300 : i32 to index
    %c0_94 = arith.constant 0 : index
    %302 = vector.load %arg11[%301, %c0_94] : memref<64x512xf32, #tpu.memory_space<vmem>>, vector<8x512xf32>
    %303 = arith.truncf %297 : vector<8x128xf32> to vector<8x128xbf16>
    %c0_95 = arith.constant 0 : index
    %c0_96 = arith.constant 0 : index
    %304 = vector.load %arg5[%c0_95, %c0_96] : memref<128x512xbf16, #tpu.memory_space<vmem>>, vector<128x512xbf16>
    %cst_97 = arith.constant dense<0.000000e+00> : vector<8x512xf32>
    %305 = tpu.matmul %303, %304, %cst_97 {dimension_numbers = #tpu.dot_dimension_numbers<[1], [0], [0], [1], [0, 0, 1, 1], [], []>} : vector<8x128xbf16>, vector<128x512xbf16>, vector<8x512xf32> -> vector<8x512xf32>
    %306 = arith.addf %302, %305 : vector<8x512xf32>
    %307 = vector.extract_strided_slice %306 {offsets = [0, 0], sizes = [8, 128], strides = [1, 1]} : vector<8x512xf32> to vector<8x128xf32>
    %308 = arith.negf %307 : vector<8x128xf32>
    %309 = math.exp %308 : vector<8x128xf32>
    %cst_98 = arith.constant 1.000000e+00 : f32
    %310 = vector.broadcast %cst_98 : f32 to vector<8x128xf32>
    %311 = arith.addf %310, %309 : vector<8x128xf32>
    %312 = arith.divf %310, %311 : vector<8x128xf32>
    %313 = vector.extract_strided_slice %306 {offsets = [0, 128], sizes = [8, 128], strides = [1, 1]} : vector<8x512xf32> to vector<8x128xf32>
    %314 = arith.negf %313 : vector<8x128xf32>
    %315 = math.exp %314 : vector<8x128xf32>
    %cst_99 = arith.constant 1.000000e+00 : f32
    %316 = vector.broadcast %cst_99 : f32 to vector<8x128xf32>
    %317 = arith.addf %316, %315 : vector<8x128xf32>
    %318 = arith.divf %316, %317 : vector<8x128xf32>
    %319 = vector.extract_strided_slice %306 {offsets = [0, 256], sizes = [8, 128], strides = [1, 1]} : vector<8x512xf32> to vector<8x128xf32>
    %320 = math.tanh %319 : vector<8x128xf32>
    %321 = vector.extract_strided_slice %306 {offsets = [0, 384], sizes = [8, 128], strides = [1, 1]} : vector<8x512xf32> to vector<8x128xf32>
    %322 = arith.negf %321 : vector<8x128xf32>
    %323 = math.exp %322 : vector<8x128xf32>
    %cst_100 = arith.constant 1.000000e+00 : f32
    %324 = vector.broadcast %cst_100 : f32 to vector<8x128xf32>
    %325 = arith.addf %324, %323 : vector<8x128xf32>
    %326 = arith.divf %324, %325 : vector<8x128xf32>
    %327 = arith.mulf %318, %298 : vector<8x128xf32>
    %328 = arith.mulf %312, %320 : vector<8x128xf32>
    %329 = arith.addf %327, %328 : vector<8x128xf32>
    %330 = math.tanh %329 : vector<8x128xf32>
    %331 = arith.mulf %326, %330 : vector<8x128xf32>
    %332 = arith.index_cast %300 : i32 to index
    %c0_101 = arith.constant 0 : index
    %333 = vector.load %arg9[%332, %c0_101] : memref<64x128xf32, #tpu.memory_space<vmem>>, vector<8x128xf32>
    tpu.vector_store %arg9[%332, %c0_101], %331 {strides = array<i32>} : memref<64x128xf32, #tpu.memory_space<vmem>>, vector<8x128xf32>,
    %c1_i32_102 = arith.constant 1 : i32
    %c8_i32_103 = arith.constant 8 : i32
    %334 = arith.muli %c1_i32_102, %c8_i32_103 : i32
    %335 = tpu.assume_multiple %334, 8 : i32
    %336 = arith.index_cast %335 : i32 to index
    %c0_104 = arith.constant 0 : index
    %337 = vector.load %arg11[%336, %c0_104] : memref<64x512xf32, #tpu.memory_space<vmem>>, vector<8x512xf32>
    %338 = arith.truncf %331 : vector<8x128xf32> to vector<8x128xbf16>
    %c0_105 = arith.constant 0 : index
    %c0_106 = arith.constant 0 : index
    %339 = vector.load %arg5[%c0_105, %c0_106] : memref<128x512xbf16, #tpu.memory_space<vmem>>, vector<128x512xbf16>
    %cst_107 = arith.constant dense<0.000000e+00> : vector<8x512xf32>
    %340 = tpu.matmul %338, %339, %cst_107 {dimension_numbers = #tpu.dot_dimension_numbers<[1], [0], [0], [1], [0, 0, 1, 1], [], []>} : vector<8x128xbf16>, vector<128x512xbf16>, vector<8x512xf32> -> vector<8x512xf32>
    %341 = arith.addf %337, %340 : vector<8x512xf32>
    %342 = vector.extract_strided_slice %341 {offsets = [0, 0], sizes = [8, 128], strides = [1, 1]} : vector<8x512xf32> to vector<8x128xf32>
    %343 = arith.negf %342 : vector<8x128xf32>
    %344 = math.exp %343 : vector<8x128xf32>
    %cst_108 = arith.constant 1.000000e+00 : f32
    %345 = vector.broadcast %cst_108 : f32 to vector<8x128xf32>
    %346 = arith.addf %345, %344 : vector<8x128xf32>
    %347 = arith.divf %345, %346 : vector<8x128xf32>
    %348 = vector.extract_strided_slice %341 {offsets = [0, 128], sizes = [8, 128], strides = [1, 1]} : vector<8x512xf32> to vector<8x128xf32>
    %349 = arith.negf %348 : vector<8x128xf32>
    %350 = math.exp %349 : vector<8x128xf32>
    %cst_109 = arith.constant 1.000000e+00 : f32
    %351 = vector.broadcast %cst_109 : f32 to vector<8x128xf32>
    %352 = arith.addf %351, %350 : vector<8x128xf32>
    %353 = arith.divf %351, %352 : vector<8x128xf32>
    %354 = vector.extract_strided_slice %341 {offsets = [0, 256], sizes = [8, 128], strides = [1, 1]} : vector<8x512xf32> to vector<8x128xf32>
    %355 = math.tanh %354 : vector<8x128xf32>
    %356 = vector.extract_strided_slice %341 {offsets = [0, 384], sizes = [8, 128], strides = [1, 1]} : vector<8x512xf32> to vector<8x128xf32>
    %357 = arith.negf %356 : vector<8x128xf32>
    %358 = math.exp %357 : vector<8x128xf32>
    %cst_110 = arith.constant 1.000000e+00 : f32
    %359 = vector.broadcast %cst_110 : f32 to vector<8x128xf32>
    %360 = arith.addf %359, %358 : vector<8x128xf32>
    %361 = arith.divf %359, %360 : vector<8x128xf32>
    %362 = arith.mulf %353, %329 : vector<8x128xf32>
    %363 = arith.mulf %347, %355 : vector<8x128xf32>
    %364 = arith.addf %362, %363 : vector<8x128xf32>
    %365 = math.tanh %364 : vector<8x128xf32>
    %366 = arith.mulf %361, %365 : vector<8x128xf32>
    %367 = arith.index_cast %335 : i32 to index
    %c0_111 = arith.constant 0 : index
    %368 = vector.load %arg9[%367, %c0_111] : memref<64x128xf32, #tpu.memory_space<vmem>>, vector<8x128xf32>
    tpu.vector_store %arg9[%367, %c0_111], %366 {strides = array<i32>} : memref<64x128xf32, #tpu.memory_space<vmem>>, vector<8x128xf32>,
    %c2_i32_112 = arith.constant 2 : i32
    %c8_i32_113 = arith.constant 8 : i32
    %369 = arith.muli %c2_i32_112, %c8_i32_113 : i32
    %370 = tpu.assume_multiple %369, 8 : i32
    %371 = arith.index_cast %370 : i32 to index
    %c0_114 = arith.constant 0 : index
    %372 = vector.load %arg11[%371, %c0_114] : memref<64x512xf32, #tpu.memory_space<vmem>>, vector<8x512xf32>
    %373 = arith.truncf %366 : vector<8x128xf32> to vector<8x128xbf16>
    %c0_115 = arith.constant 0 : index
    %c0_116 = arith.constant 0 : index
    %374 = vector.load %arg5[%c0_115, %c0_116] : memref<128x512xbf16, #tpu.memory_space<vmem>>, vector<128x512xbf16>
    %cst_117 = arith.constant dense<0.000000e+00> : vector<8x512xf32>
    %375 = tpu.matmul %373, %374, %cst_117 {dimension_numbers = #tpu.dot_dimension_numbers<[1], [0], [0], [1], [0, 0, 1, 1], [], []>} : vector<8x128xbf16>, vector<128x512xbf16>, vector<8x512xf32> -> vector<8x512xf32>
    %376 = arith.addf %372, %375 : vector<8x512xf32>
    %377 = vector.extract_strided_slice %376 {offsets = [0, 0], sizes = [8, 128], strides = [1, 1]} : vector<8x512xf32> to vector<8x128xf32>
    %378 = arith.negf %377 : vector<8x128xf32>
    %379 = math.exp %378 : vector<8x128xf32>
    %cst_118 = arith.constant 1.000000e+00 : f32
    %380 = vector.broadcast %cst_118 : f32 to vector<8x128xf32>
    %381 = arith.addf %380, %379 : vector<8x128xf32>
    %382 = arith.divf %380, %381 : vector<8x128xf32>
    %383 = vector.extract_strided_slice %376 {offsets = [0, 128], sizes = [8, 128], strides = [1, 1]} : vector<8x512xf32> to vector<8x128xf32>
    %384 = arith.negf %383 : vector<8x128xf32>
    %385 = math.exp %384 : vector<8x128xf32>
    %cst_119 = arith.constant 1.000000e+00 : f32
    %386 = vector.broadcast %cst_119 : f32 to vector<8x128xf32>
    %387 = arith.addf %386, %385 : vector<8x128xf32>
    %388 = arith.divf %386, %387 : vector<8x128xf32>
    %389 = vector.extract_strided_slice %376 {offsets = [0, 256], sizes = [8, 128], strides = [1, 1]} : vector<8x512xf32> to vector<8x128xf32>
    %390 = math.tanh %389 : vector<8x128xf32>
    %391 = vector.extract_strided_slice %376 {offsets = [0, 384], sizes = [8, 128], strides = [1, 1]} : vector<8x512xf32> to vector<8x128xf32>
    %392 = arith.negf %391 : vector<8x128xf32>
    %393 = math.exp %392 : vector<8x128xf32>
    %cst_120 = arith.constant 1.000000e+00 : f32
    %394 = vector.broadcast %cst_120 : f32 to vector<8x128xf32>
    %395 = arith.addf %394, %393 : vector<8x128xf32>
    %396 = arith.divf %394, %395 : vector<8x128xf32>
    %397 = arith.mulf %388, %364 : vector<8x128xf32>
    %398 = arith.mulf %382, %390 : vector<8x128xf32>
    %399 = arith.addf %397, %398 : vector<8x128xf32>
    %400 = math.tanh %399 : vector<8x128xf32>
    %401 = arith.mulf %396, %400 : vector<8x128xf32>
    %402 = arith.index_cast %370 : i32 to index
    %c0_121 = arith.constant 0 : index
    %403 = vector.load %arg9[%402, %c0_121] : memref<64x128xf32, #tpu.memory_space<vmem>>, vector<8x128xf32>
    tpu.vector_store %arg9[%402, %c0_121], %401 {strides = array<i32>} : memref<64x128xf32, #tpu.memory_space<vmem>>, vector<8x128xf32>,
    %c3_i32_122 = arith.constant 3 : i32
    %c8_i32_123 = arith.constant 8 : i32
    %404 = arith.muli %c3_i32_122, %c8_i32_123 : i32
    %405 = tpu.assume_multiple %404, 8 : i32
    %406 = arith.index_cast %405 : i32 to index
    %c0_124 = arith.constant 0 : index
    %407 = vector.load %arg11[%406, %c0_124] : memref<64x512xf32, #tpu.memory_space<vmem>>, vector<8x512xf32>
    %408 = arith.truncf %401 : vector<8x128xf32> to vector<8x128xbf16>
    %c0_125 = arith.constant 0 : index
    %c0_126 = arith.constant 0 : index
    %409 = vector.load %arg5[%c0_125, %c0_126] : memref<128x512xbf16, #tpu.memory_space<vmem>>, vector<128x512xbf16>
    %cst_127 = arith.constant dense<0.000000e+00> : vector<8x512xf32>
    %410 = tpu.matmul %408, %409, %cst_127 {dimension_numbers = #tpu.dot_dimension_numbers<[1], [0], [0], [1], [0, 0, 1, 1], [], []>} : vector<8x128xbf16>, vector<128x512xbf16>, vector<8x512xf32> -> vector<8x512xf32>
    %411 = arith.addf %407, %410 : vector<8x512xf32>
    %412 = vector.extract_strided_slice %411 {offsets = [0, 0], sizes = [8, 128], strides = [1, 1]} : vector<8x512xf32> to vector<8x128xf32>
    %413 = arith.negf %412 : vector<8x128xf32>
    %414 = math.exp %413 : vector<8x128xf32>
    %cst_128 = arith.constant 1.000000e+00 : f32
    %415 = vector.broadcast %cst_128 : f32 to vector<8x128xf32>
    %416 = arith.addf %415, %414 : vector<8x128xf32>
    %417 = arith.divf %415, %416 : vector<8x128xf32>
    %418 = vector.extract_strided_slice %411 {offsets = [0, 128], sizes = [8, 128], strides = [1, 1]} : vector<8x512xf32> to vector<8x128xf32>
    %419 = arith.negf %418 : vector<8x128xf32>
    %420 = math.exp %419 : vector<8x128xf32>
    %cst_129 = arith.constant 1.000000e+00 : f32
    %421 = vector.broadcast %cst_129 : f32 to vector<8x128xf32>
    %422 = arith.addf %421, %420 : vector<8x128xf32>
    %423 = arith.divf %421, %422 : vector<8x128xf32>
    %424 = vector.extract_strided_slice %411 {offsets = [0, 256], sizes = [8, 128], strides = [1, 1]} : vector<8x512xf32> to vector<8x128xf32>
    %425 = math.tanh %424 : vector<8x128xf32>
    %426 = vector.extract_strided_slice %411 {offsets = [0, 384], sizes = [8, 128], strides = [1, 1]} : vector<8x512xf32> to vector<8x128xf32>
    %427 = arith.negf %426 : vector<8x128xf32>
    %428 = math.exp %427 : vector<8x128xf32>
    %cst_130 = arith.constant 1.000000e+00 : f32
    %429 = vector.broadcast %cst_130 : f32 to vector<8x128xf32>
    %430 = arith.addf %429, %428 : vector<8x128xf32>
    %431 = arith.divf %429, %430 : vector<8x128xf32>
    %432 = arith.mulf %423, %399 : vector<8x128xf32>
    %433 = arith.mulf %417, %425 : vector<8x128xf32>
    %434 = arith.addf %432, %433 : vector<8x128xf32>
    %435 = math.tanh %434 : vector<8x128xf32>
    %436 = arith.mulf %431, %435 : vector<8x128xf32>
    %437 = arith.index_cast %405 : i32 to index
    %c0_131 = arith.constant 0 : index
    %438 = vector.load %arg9[%437, %c0_131] : memref<64x128xf32, #tpu.memory_space<vmem>>, vector<8x128xf32>
    tpu.vector_store %arg9[%437, %c0_131], %436 {strides = array<i32>} : memref<64x128xf32, #tpu.memory_space<vmem>>, vector<8x128xf32>,
    %c4_i32_132 = arith.constant 4 : i32
    %c8_i32_133 = arith.constant 8 : i32
    %439 = arith.muli %c4_i32_132, %c8_i32_133 : i32
    %440 = tpu.assume_multiple %439, 8 : i32
    %441 = arith.index_cast %440 : i32 to index
    %c0_134 = arith.constant 0 : index
    %442 = vector.load %arg11[%441, %c0_134] : memref<64x512xf32, #tpu.memory_space<vmem>>, vector<8x512xf32>
    %443 = arith.truncf %436 : vector<8x128xf32> to vector<8x128xbf16>
    %c0_135 = arith.constant 0 : index
    %c0_136 = arith.constant 0 : index
    %444 = vector.load %arg5[%c0_135, %c0_136] : memref<128x512xbf16, #tpu.memory_space<vmem>>, vector<128x512xbf16>
    %cst_137 = arith.constant dense<0.000000e+00> : vector<8x512xf32>
    %445 = tpu.matmul %443, %444, %cst_137 {dimension_numbers = #tpu.dot_dimension_numbers<[1], [0], [0], [1], [0, 0, 1, 1], [], []>} : vector<8x128xbf16>, vector<128x512xbf16>, vector<8x512xf32> -> vector<8x512xf32>
    %446 = arith.addf %442, %445 : vector<8x512xf32>
    %447 = vector.extract_strided_slice %446 {offsets = [0, 0], sizes = [8, 128], strides = [1, 1]} : vector<8x512xf32> to vector<8x128xf32>
    %448 = arith.negf %447 : vector<8x128xf32>
    %449 = math.exp %448 : vector<8x128xf32>
    %cst_138 = arith.constant 1.000000e+00 : f32
    %450 = vector.broadcast %cst_138 : f32 to vector<8x128xf32>
    %451 = arith.addf %450, %449 : vector<8x128xf32>
    %452 = arith.divf %450, %451 : vector<8x128xf32>
    %453 = vector.extract_strided_slice %446 {offsets = [0, 128], sizes = [8, 128], strides = [1, 1]} : vector<8x512xf32> to vector<8x128xf32>
    %454 = arith.negf %453 : vector<8x128xf32>
    %455 = math.exp %454 : vector<8x128xf32>
    %cst_139 = arith.constant 1.000000e+00 : f32
    %456 = vector.broadcast %cst_139 : f32 to vector<8x128xf32>
    %457 = arith.addf %456, %455 : vector<8x128xf32>
    %458 = arith.divf %456, %457 : vector<8x128xf32>
    %459 = vector.extract_strided_slice %446 {offsets = [0, 256], sizes = [8, 128], strides = [1, 1]} : vector<8x512xf32> to vector<8x128xf32>
    %460 = math.tanh %459 : vector<8x128xf32>
    %461 = vector.extract_strided_slice %446 {offsets = [0, 384], sizes = [8, 128], strides = [1, 1]} : vector<8x512xf32> to vector<8x128xf32>
    %462 = arith.negf %461 : vector<8x128xf32>
    %463 = math.exp %462 : vector<8x128xf32>
    %cst_140 = arith.constant 1.000000e+00 : f32
    %464 = vector.broadcast %cst_140 : f32 to vector<8x128xf32>
    %465 = arith.addf %464, %463 : vector<8x128xf32>
    %466 = arith.divf %464, %465 : vector<8x128xf32>
    %467 = arith.mulf %458, %434 : vector<8x128xf32>
    %468 = arith.mulf %452, %460 : vector<8x128xf32>
    %469 = arith.addf %467, %468 : vector<8x128xf32>
    %470 = math.tanh %469 : vector<8x128xf32>
    %471 = arith.mulf %466, %470 : vector<8x128xf32>
    %472 = arith.index_cast %440 : i32 to index
    %c0_141 = arith.constant 0 : index
    %473 = vector.load %arg9[%472, %c0_141] : memref<64x128xf32, #tpu.memory_space<vmem>>, vector<8x128xf32>
    tpu.vector_store %arg9[%472, %c0_141], %471 {strides = array<i32>} : memref<64x128xf32, #tpu.memory_space<vmem>>, vector<8x128xf32>,
    %c5_i32_142 = arith.constant 5 : i32
    %c8_i32_143 = arith.constant 8 : i32
    %474 = arith.muli %c5_i32_142, %c8_i32_143 : i32
    %475 = tpu.assume_multiple %474, 8 : i32
    %476 = arith.index_cast %475 : i32 to index
    %c0_144 = arith.constant 0 : index
    %477 = vector.load %arg11[%476, %c0_144] : memref<64x512xf32, #tpu.memory_space<vmem>>, vector<8x512xf32>
    %478 = arith.truncf %471 : vector<8x128xf32> to vector<8x128xbf16>
    %c0_145 = arith.constant 0 : index
    %c0_146 = arith.constant 0 : index
    %479 = vector.load %arg5[%c0_145, %c0_146] : memref<128x512xbf16, #tpu.memory_space<vmem>>, vector<128x512xbf16>
    %cst_147 = arith.constant dense<0.000000e+00> : vector<8x512xf32>
    %480 = tpu.matmul %478, %479, %cst_147 {dimension_numbers = #tpu.dot_dimension_numbers<[1], [0], [0], [1], [0, 0, 1, 1], [], []>} : vector<8x128xbf16>, vector<128x512xbf16>, vector<8x512xf32> -> vector<8x512xf32>
    %481 = arith.addf %477, %480 : vector<8x512xf32>
    %482 = vector.extract_strided_slice %481 {offsets = [0, 0], sizes = [8, 128], strides = [1, 1]} : vector<8x512xf32> to vector<8x128xf32>
    %483 = arith.negf %482 : vector<8x128xf32>
    %484 = math.exp %483 : vector<8x128xf32>
    %cst_148 = arith.constant 1.000000e+00 : f32
    %485 = vector.broadcast %cst_148 : f32 to vector<8x128xf32>
    %486 = arith.addf %485, %484 : vector<8x128xf32>
    %487 = arith.divf %485, %486 : vector<8x128xf32>
    %488 = vector.extract_strided_slice %481 {offsets = [0, 128], sizes = [8, 128], strides = [1, 1]} : vector<8x512xf32> to vector<8x128xf32>
    %489 = arith.negf %488 : vector<8x128xf32>
    %490 = math.exp %489 : vector<8x128xf32>
    %cst_149 = arith.constant 1.000000e+00 : f32
    %491 = vector.broadcast %cst_149 : f32 to vector<8x128xf32>
    %492 = arith.addf %491, %490 : vector<8x128xf32>
    %493 = arith.divf %491, %492 : vector<8x128xf32>
    %494 = vector.extract_strided_slice %481 {offsets = [0, 256], sizes = [8, 128], strides = [1, 1]} : vector<8x512xf32> to vector<8x128xf32>
    %495 = math.tanh %494 : vector<8x128xf32>
    %496 = vector.extract_strided_slice %481 {offsets = [0, 384], sizes = [8, 128], strides = [1, 1]} : vector<8x512xf32> to vector<8x128xf32>
    %497 = arith.negf %496 : vector<8x128xf32>
    %498 = math.exp %497 : vector<8x128xf32>
    %cst_150 = arith.constant 1.000000e+00 : f32
    %499 = vector.broadcast %cst_150 : f32 to vector<8x128xf32>
    %500 = arith.addf %499, %498 : vector<8x128xf32>
    %501 = arith.divf %499, %500 : vector<8x128xf32>
    %502 = arith.mulf %493, %469 : vector<8x128xf32>
    %503 = arith.mulf %487, %495 : vector<8x128xf32>
    %504 = arith.addf %502, %503 : vector<8x128xf32>
    %505 = math.tanh %504 : vector<8x128xf32>
    %506 = arith.mulf %501, %505 : vector<8x128xf32>
    %507 = arith.index_cast %475 : i32 to index
    %c0_151 = arith.constant 0 : index
    %508 = vector.load %arg9[%507, %c0_151] : memref<64x128xf32, #tpu.memory_space<vmem>>, vector<8x128xf32>
    tpu.vector_store %arg9[%507, %c0_151], %506 {strides = array<i32>} : memref<64x128xf32, #tpu.memory_space<vmem>>, vector<8x128xf32>,
    %c6_i32_152 = arith.constant 6 : i32
    %c8_i32_153 = arith.constant 8 : i32
    %509 = arith.muli %c6_i32_152, %c8_i32_153 : i32
    %510 = tpu.assume_multiple %509, 8 : i32
    %511 = arith.index_cast %510 : i32 to index
    %c0_154 = arith.constant 0 : index
    %512 = vector.load %arg11[%511, %c0_154] : memref<64x512xf32, #tpu.memory_space<vmem>>, vector<8x512xf32>
    %513 = arith.truncf %506 : vector<8x128xf32> to vector<8x128xbf16>
    %c0_155 = arith.constant 0 : index
    %c0_156 = arith.constant 0 : index
    %514 = vector.load %arg5[%c0_155, %c0_156] : memref<128x512xbf16, #tpu.memory_space<vmem>>, vector<128x512xbf16>
    %cst_157 = arith.constant dense<0.000000e+00> : vector<8x512xf32>
    %515 = tpu.matmul %513, %514, %cst_157 {dimension_numbers = #tpu.dot_dimension_numbers<[1], [0], [0], [1], [0, 0, 1, 1], [], []>} : vector<8x128xbf16>, vector<128x512xbf16>, vector<8x512xf32> -> vector<8x512xf32>
    %516 = arith.addf %512, %515 : vector<8x512xf32>
    %517 = vector.extract_strided_slice %516 {offsets = [0, 0], sizes = [8, 128], strides = [1, 1]} : vector<8x512xf32> to vector<8x128xf32>
    %518 = arith.negf %517 : vector<8x128xf32>
    %519 = math.exp %518 : vector<8x128xf32>
    %cst_158 = arith.constant 1.000000e+00 : f32
    %520 = vector.broadcast %cst_158 : f32 to vector<8x128xf32>
    %521 = arith.addf %520, %519 : vector<8x128xf32>
    %522 = arith.divf %520, %521 : vector<8x128xf32>
    %523 = vector.extract_strided_slice %516 {offsets = [0, 128], sizes = [8, 128], strides = [1, 1]} : vector<8x512xf32> to vector<8x128xf32>
    %524 = arith.negf %523 : vector<8x128xf32>
    %525 = math.exp %524 : vector<8x128xf32>
    %cst_159 = arith.constant 1.000000e+00 : f32
    %526 = vector.broadcast %cst_159 : f32 to vector<8x128xf32>
    %527 = arith.addf %526, %525 : vector<8x128xf32>
    %528 = arith.divf %526, %527 : vector<8x128xf32>
    %529 = vector.extract_strided_slice %516 {offsets = [0, 256], sizes = [8, 128], strides = [1, 1]} : vector<8x512xf32> to vector<8x128xf32>
    %530 = math.tanh %529 : vector<8x128xf32>
    %531 = vector.extract_strided_slice %516 {offsets = [0, 384], sizes = [8, 128], strides = [1, 1]} : vector<8x512xf32> to vector<8x128xf32>
    %532 = arith.negf %531 : vector<8x128xf32>
    %533 = math.exp %532 : vector<8x128xf32>
    %cst_160 = arith.constant 1.000000e+00 : f32
    %534 = vector.broadcast %cst_160 : f32 to vector<8x128xf32>
    %535 = arith.addf %534, %533 : vector<8x128xf32>
    %536 = arith.divf %534, %535 : vector<8x128xf32>
    %537 = arith.mulf %528, %504 : vector<8x128xf32>
    %538 = arith.mulf %522, %530 : vector<8x128xf32>
    %539 = arith.addf %537, %538 : vector<8x128xf32>
    %540 = math.tanh %539 : vector<8x128xf32>
    %541 = arith.mulf %536, %540 : vector<8x128xf32>
    %542 = arith.index_cast %510 : i32 to index
    %c0_161 = arith.constant 0 : index
    %543 = vector.load %arg9[%542, %c0_161] : memref<64x128xf32, #tpu.memory_space<vmem>>, vector<8x128xf32>
    tpu.vector_store %arg9[%542, %c0_161], %541 {strides = array<i32>} : memref<64x128xf32, #tpu.memory_space<vmem>>, vector<8x128xf32>,
    %c7_i32_162 = arith.constant 7 : i32
    %c8_i32_163 = arith.constant 8 : i32
    %544 = arith.muli %c7_i32_162, %c8_i32_163 : i32
    %545 = tpu.assume_multiple %544, 8 : i32
    %546 = arith.index_cast %545 : i32 to index
    %c0_164 = arith.constant 0 : index
    %547 = vector.load %arg11[%546, %c0_164] : memref<64x512xf32, #tpu.memory_space<vmem>>, vector<8x512xf32>
    %548 = arith.truncf %541 : vector<8x128xf32> to vector<8x128xbf16>
    %c0_165 = arith.constant 0 : index
    %c0_166 = arith.constant 0 : index
    %549 = vector.load %arg5[%c0_165, %c0_166] : memref<128x512xbf16, #tpu.memory_space<vmem>>, vector<128x512xbf16>
    %cst_167 = arith.constant dense<0.000000e+00> : vector<8x512xf32>
    %550 = tpu.matmul %548, %549, %cst_167 {dimension_numbers = #tpu.dot_dimension_numbers<[1], [0], [0], [1], [0, 0, 1, 1], [], []>} : vector<8x128xbf16>, vector<128x512xbf16>, vector<8x512xf32> -> vector<8x512xf32>
    %551 = arith.addf %547, %550 : vector<8x512xf32>
    %552 = vector.extract_strided_slice %551 {offsets = [0, 0], sizes = [8, 128], strides = [1, 1]} : vector<8x512xf32> to vector<8x128xf32>
    %553 = arith.negf %552 : vector<8x128xf32>
    %554 = math.exp %553 : vector<8x128xf32>
    %cst_168 = arith.constant 1.000000e+00 : f32
    %555 = vector.broadcast %cst_168 : f32 to vector<8x128xf32>
    %556 = arith.addf %555, %554 : vector<8x128xf32>
    %557 = arith.divf %555, %556 : vector<8x128xf32>
    %558 = vector.extract_strided_slice %551 {offsets = [0, 128], sizes = [8, 128], strides = [1, 1]} : vector<8x512xf32> to vector<8x128xf32>
    %559 = arith.negf %558 : vector<8x128xf32>
    %560 = math.exp %559 : vector<8x128xf32>
    %cst_169 = arith.constant 1.000000e+00 : f32
    %561 = vector.broadcast %cst_169 : f32 to vector<8x128xf32>
    %562 = arith.addf %561, %560 : vector<8x128xf32>
    %563 = arith.divf %561, %562 : vector<8x128xf32>
    %564 = vector.extract_strided_slice %551 {offsets = [0, 256], sizes = [8, 128], strides = [1, 1]} : vector<8x512xf32> to vector<8x128xf32>
    %565 = math.tanh %564 : vector<8x128xf32>
    %566 = vector.extract_strided_slice %551 {offsets = [0, 384], sizes = [8, 128], strides = [1, 1]} : vector<8x512xf32> to vector<8x128xf32>
    %567 = arith.negf %566 : vector<8x128xf32>
    %568 = math.exp %567 : vector<8x128xf32>
    %cst_170 = arith.constant 1.000000e+00 : f32
    %569 = vector.broadcast %cst_170 : f32 to vector<8x128xf32>
    %570 = arith.addf %569, %568 : vector<8x128xf32>
    %571 = arith.divf %569, %570 : vector<8x128xf32>
    %572 = arith.mulf %563, %539 : vector<8x128xf32>
    %573 = arith.mulf %557, %565 : vector<8x128xf32>
    %574 = arith.addf %572, %573 : vector<8x128xf32>
    %575 = math.tanh %574 : vector<8x128xf32>
    %576 = arith.mulf %571, %575 : vector<8x128xf32>
    %577 = arith.index_cast %545 : i32 to index
    %c0_171 = arith.constant 0 : index
    %578 = vector.load %arg9[%577, %c0_171] : memref<64x128xf32, #tpu.memory_space<vmem>>, vector<8x128xf32>
    tpu.vector_store %arg9[%577, %c0_171], %576 {strides = array<i32>} : memref<64x128xf32, #tpu.memory_space<vmem>>, vector<8x128xf32>,
    %c8_i32_172 = arith.constant 8 : i32
    %c0_173 = arith.constant 0 : index
    %c0_174 = arith.constant 0 : index
    %579 = vector.load %arg9[%c0_173, %c0_174] : memref<64x128xf32, #tpu.memory_space<vmem>>, vector<64x128xf32>
    %580 = arith.truncf %579 : vector<64x128xf32> to vector<64x128xbf16>
    %c0_175 = arith.constant 0 : index
    %c0_176 = arith.constant 0 : index
    %581 = vector.load %arg7[%c0_175, %c0_176] : memref<128x128xbf16, #tpu.memory_space<vmem>>, vector<128x128xbf16>
    %cst_177 = arith.constant dense<0.000000e+00> : vector<64x128xf32>
    %582 = tpu.matmul %580, %581, %cst_177 {dimension_numbers = #tpu.dot_dimension_numbers<[1], [0], [0], [1], [0, 0, 1, 1], [], []>} : vector<64x128xbf16>, vector<128x128xbf16>, vector<64x128xf32> -> vector<64x128xf32>
    %c0_178 = arith.constant 0 : index
    %c0_179 = arith.constant 0 : index
    %583 = vector.load %arg8[%c0_178, %c0_179] : memref<1x128xf32, #tpu.memory_space<vmem>>, vector<1x128xf32>
    %584 = vector.broadcast %583 : vector<1x128xf32> to vector<64x128xf32>
    %585 = arith.addf %582, %584 : vector<64x128xf32>
    %c0_180 = arith.constant 0 : index
    %c0_181 = arith.constant 0 : index
    %586 = vector.load %arg10[%c0_180, %c0_181] : memref<64x128xf32, #tpu.memory_space<vmem>>, vector<64x128xf32>
    tpu.vector_store %arg10[%c0_180, %c0_181], %585 {strides = array<i32>} : memref<64x128xf32, #tpu.memory_space<vmem>>, vector<64x128xf32>,
    return
  }
}

</mosaic_0001>

<llo_original>
// kernel: tpu_custom_call.1
$region0: #{tpu_custom_call.1}
  #allocation0 [shape = 'u32[]', space=smem, size = 0x4, offset = 0x4, fixed_abs, tag = 'smem constant byte address 0x4 - core index']
  #allocation1 [shape = 'u32[144,128]{1,0:T(1,128)}', space=vmem, size = 0x12000, scoped, tag = 'internal scratch']
  #allocation2 [shape = 'f32[64,512]{1,0:T(8,128)}', space=vmem, size = 0x20000, scoped, tag = 'scratch operand']
  %s0 = inlined_call_operand.hbm [shape: bf16[64,128], index: 0, kind: input, shape index: {}]
  %s1 = inlined_call_operand.hbm [shape: bf16[128,512], index: 1, kind: input, shape index: {}]
  %s2 = inlined_call_operand.hbm [shape: bf16[128,512], index: 2, kind: input, shape index: {}]
  %s3 = inlined_call_operand.vmem [shape: f32[1,512], index: 3, kind: input, shape index: {}]
  %s4 = inlined_call_operand.hbm [shape: bf16[128,512], index: 4, kind: input, shape index: {}]
  %s5 = inlined_call_operand.hbm [shape: bf16[128,512], index: 5, kind: input, shape index: {}]
  %s6 = inlined_call_operand.vmem [shape: f32[1,512], index: 6, kind: input, shape index: {}]
  %s7 = inlined_call_operand.hbm [shape: bf16[128,128], index: 7, kind: input, shape index: {}]
  %s8 = inlined_call_operand.vmem [shape: f32[1,128], index: 8, kind: input, shape index: {}]
  %s9 = inlined_call_operand.hbm [shape: f32[64,128], index: 9, kind: output, shape index: {0}]
  %s10 = inlined_call_operand.hbm [shape: f32[64,128], index: 10, kind: output, shape index: {1}]
  %11 = xla_tuple %s9, %s10
  %s12 = sld [smem:[#allocation0]]
  $region78: #{tpu_custom_call.1} parent=0
    _
  %s14 = ssub.s32 1, %s12
  %s15 = scalar_select 0, %s14, %s12
  $region1: #{tpu_custom_call.1} parent=0
    #allocation3 [shape = 'u8[16384]{0}', space=vmem, size = 0x4000, scoped, tag = 'input window, operand 0, single buffered']
    #allocation4 [shape = 's32[1]{0}', space=sflag, size = 0x4, scoped, tag = 'scoped memory for tpu_custom_call.1']
    #allocation5 [shape = 's32[1]{0}', space=sflag, size = 0x4, scoped, tag = 'scoped memory for tpu_custom_call.1']
    #allocation6 [shape = 'u8[131072]{0}', space=vmem, size = 0x20000, scoped, tag = 'input window, operand 1, single buffered']
    #allocation7 [shape = 's32[1]{0}', space=sflag, size = 0x4, scoped, tag = 'scoped memory for tpu_custom_call.1']
    #allocation8 [shape = 'u8[131072]{0}', space=vmem, size = 0x20000, scoped, tag = 'input window, operand 2, single buffered']
    #allocation9 [shape = 'u8[131072]{0}', space=vmem, size = 0x20000, scoped, tag = 'input window, operand 4, single buffered']
    #allocation10 [shape = 's32[1]{0}', space=sflag, size = 0x4, scoped, tag = 'scoped memory for tpu_custom_call.1']
    #allocation11 [shape = 'u8[131072]{0}', space=vmem, size = 0x20000, scoped, tag = 'input window, operand 5, single buffered']
    #allocation12 [shape = 'u8[32768]{0}', space=vmem, size = 0x8000, scoped, tag = 'input window, operand 7, single buffered']
    #allocation13 [shape = 's32[1]{0}', space=sflag, size = 0x4, scoped, tag = 'scoped memory for tpu_custom_call.1']
    #allocation14 [shape = 'u8[32768]{0}', space=vmem, size = 0x8000, scoped, tag = 'output window, operand 0, single buffered']
    #allocation15 [shape = 'u8[32768]{0}', space=vmem, size = 0x8000, scoped, tag = 'output window, operand 1, single buffered']
    #allocation16 [shape = 's32[1]{0}', space=sflag, size = 0x4, scoped, tag = 'scoped memory for tpu_custom_call.1']
    %16 = vsyncpa [#allocation4], 0
    %17 = vsyncpa [#allocation7], 0
    %18 = vsyncpa [#allocation10], 0
    %19 = vsyncpa [#allocation13], 0
    %20 = vsyncpa [#allocation5], 0
    %21 = vsyncpa [#allocation16], 0
    // Predicated region
    $region2: #{tpu_custom_call.1} parent=1 // pred_check
      _
    $region3: #{tpu_custom_call.1} parent=1 // pred_check_branch
      %23 = sbr.rel (0) target = $region5
    $region4: #{tpu_custom_call.1} parent=1 // pred_region
      %s25 = ssub.s32 512, 512
      %26 = vsyncadd [#allocation4], %s25
      %s27 = sshll.u32 [#allocation3], 4
      %s28 = int_to_ptr.vmem [resolvable:$true] %s27
      %33 = dma.hbm_to_vmem [thread:$0]  %s0, 512, %s28, [#allocation4], 64, 64, 4
    $region5: #{tpu_custom_call.1} parent=1 // pred_fallthru
      _
    // Predicated region
    $region6: #{tpu_custom_call.1} parent=1 // pred_check
      _
    $region7: #{tpu_custom_call.1} parent=1 // pred_check_branch
      %35 = sbr.rel (0) target = $region9
    $region8: #{tpu_custom_call.1} parent=1 // pred_region
      %s37 = ssub.s32 4096, 4096
      %38 = vsyncadd [#allocation7], %s37
      %s39 = sshll.u32 [#allocation6], 4
      %s40 = int_to_ptr.vmem [resolvable:$true] %s39
      %45 = dma.hbm_to_vmem [thread:$0]  %s1, 4096, %s40, [#allocation7], 256, 256, 16
    $region9: #{tpu_custom_call.1} parent=1 // pred_fallthru
      _
    // Predicated region
    $region10: #{tpu_custom_call.1} parent=1 // pred_check
      _
    $region11: #{tpu_custom_call.1} parent=1 // pred_check_branch
      %47 = sbr.rel (0) target = $region13
    $region12: #{tpu_custom_call.1} parent=1 // pred_region
      %s49 = ssub.s32 4096, 4096
      %50 = vsyncadd [#allocation7], %s49
      %s51 = sshll.u32 [#allocation8], 4
      %s52 = int_to_ptr.vmem [resolvable:$true] %s51
      %57 = dma.hbm_to_vmem [thread:$0]  %s2, 4096, %s52, [#allocation7], 256, 256, 16
    $region13: #{tpu_custom_call.1} parent=1 // pred_fallthru
      _
    // Predicated region
    $region14: #{tpu_custom_call.1} parent=1 // pred_check
      _
    $region15: #{tpu_custom_call.1} parent=1 // pred_check_branch
      %59 = sbr.rel (0) target = $region17
    $region16: #{tpu_custom_call.1} parent=1 // pred_region
      _
    $region17: #{tpu_custom_call.1} parent=1 // pred_fallthru
      _
    // Predicated region
    $region18: #{tpu_custom_call.1} parent=1 // pred_check
      _
    $region19: #{tpu_custom_call.1} parent=1 // pred_check_branch
      %61 = sbr.rel (0) target = $region21
    $region20: #{tpu_custom_call.1} parent=1 // pred_region
      %s63 = ssub.s32 4096, 4096
      %64 = vsyncadd [#allocation10], %s63
      %s65 = sshll.u32 [#allocation9], 4
      %s66 = int_to_ptr.vmem [resolvable:$true] %s65
      %71 = dma.hbm_to_vmem [thread:$0]  %s4, 4096, %s66, [#allocation10], 256, 256, 16
    $region21: #{tpu_custom_call.1} parent=1 // pred_fallthru
      _
    // Predicated region
    $region22: #{tpu_custom_call.1} parent=1 // pred_check
      _
    $region23: #{tpu_custom_call.1} parent=1 // pred_check_branch
      %73 = sbr.rel (0) target = $region25
    $region24: #{tpu_custom_call.1} parent=1 // pred_region
      %s75 = ssub.s32 4096, 4096
      %76 = vsyncadd [#allocation10], %s75
      %s77 = sshll.u32 [#allocation11], 4
      %s78 = int_to_ptr.vmem [resolvable:$true] %s77
      %83 = dma.hbm_to_vmem [thread:$0]  %s5, 4096, %s78, [#allocation10], 256, 256, 16
    $region25: #{tpu_custom_call.1} parent=1 // pred_fallthru
      _
    // Predicated region
    $region26: #{tpu_custom_call.1} parent=1 // pred_check
      _
    $region27: #{tpu_custom_call.1} parent=1 // pred_check_branch
      %85 = sbr.rel (0) target = $region29
    $region28: #{tpu_custom_call.1} parent=1 // pred_region
      _
    $region29: #{tpu_custom_call.1} parent=1 // pred_fallthru
      _
    // Predicated region
    $region30: #{tpu_custom_call.1} parent=1 // pred_check
      _
    $region31: #{tpu_custom_call.1} parent=1 // pred_check_branch
      %87 = sbr.rel (0) target = $region33
    $region32: #{tpu_custom_call.1} parent=1 // pred_region
      %s89 = ssub.s32 1024, 1024
      %90 = vsyncadd [#allocation13], %s89
      %s91 = sshll.u32 [#allocation12], 4
      %s92 = int_to_ptr.vmem [resolvable:$true] %s91
      %97 = dma.hbm_to_vmem [thread:$0]  %s7, 1024, %s92, [#allocation13], 64, 64, 4
    $region33: #{tpu_custom_call.1} parent=1 // pred_fallthru
      _
    // Predicated region
    $region34: #{tpu_custom_call.1} parent=1 // pred_check
      _
    $region35: #{tpu_custom_call.1} parent=1 // pred_check_branch
      %99 = sbr.rel (0) target = $region37
    $region36: #{tpu_custom_call.1} parent=1 // pred_region
      _
    $region37: #{tpu_custom_call.1} parent=1 // pred_fallthru
      _
    // Predicated region
    $region38: #{tpu_custom_call.1} parent=1 // pred_check
      _
    $region39: #{tpu_custom_call.1} parent=1 // pred_check_branch
      %101 = sbr.rel (0) target = $region41
    $region40: #{tpu_custom_call.1} parent=1 // pred_region
      %102 = dma.done [#allocation4], 512
    $region41: #{tpu_custom_call.1} parent=1 // pred_fallthru
      _
    // Predicated region
    $region42: #{tpu_custom_call.1} parent=1 // pred_check
      _
    $region43: #{tpu_custom_call.1} parent=1 // pred_check_branch
      %104 = sbr.rel (0) target = $region45
    $region44: #{tpu_custom_call.1} parent=1 // pred_region
      %105 = dma.done [#allocation7], 4096
    $region45: #{tpu_custom_call.1} parent=1 // pred_fallthru
      _
    // Predicated region
    $region46: #{tpu_custom_call.1} parent=1 // pred_check
      _
    $region47: #{tpu_custom_call.1} parent=1 // pred_check_branch
      %107 = sbr.rel (0) target = $region49
    $region48: #{tpu_custom_call.1} parent=1 // pred_region
      %108 = dma.done [#allocation7], 4096
    $region49: #{tpu_custom_call.1} parent=1 // pred_fallthru
      _
    // Predicated region
    $region50: #{tpu_custom_call.1} parent=1 // pred_check
      _
    $region51: #{tpu_custom_call.1} parent=1 // pred_check_branch
      %110 = sbr.rel (0) target = $region53
    $region52: #{tpu_custom_call.1} parent=1 // pred_region
      %111 = dma.done [#allocation10], 4096
    $region53: #{tpu_custom_call.1} parent=1 // pred_fallthru
      _
    // Predicated region
    $region54: #{tpu_custom_call.1} parent=1 // pred_check
      _
    $region55: #{tpu_custom_call.1} parent=1 // pred_check_branch
      %113 = sbr.rel (0) target = $region57
    $region56: #{tpu_custom_call.1} parent=1 // pred_region
      %114 = dma.done [#allocation10], 4096
    $region57: #{tpu_custom_call.1} parent=1 // pred_fallthru
      _
    // Predicated region
    $region58: #{tpu_custom_call.1} parent=1 // pred_check
      _
    $region59: #{tpu_custom_call.1} parent=1 // pred_check_branch
      %116 = sbr.rel (0) target = $region61
    $region60: #{tpu_custom_call.1} parent=1 // pred_region
      %117 = dma.done [#allocation13], 1024
    $region61: #{tpu_custom_call.1} parent=1 // pred_fallthru
      _
    %v119 = vld [vmem:[#allocation3] sm:$0xf]
    %v120 = vld [vmem:[#allocation3 + $0x4] sm:$0xf]
    %v121 = vld [vmem:[#allocation3 + $0x8] sm:$0xf]
    %v122 = vld [vmem:[#allocation3 + $0xc] sm:$0xf]
    %v123 = vld [vmem:[#allocation3 + $0x10] sm:$0xf]
    %v124 = vld [vmem:[#allocation3 + $0x14] sm:$0xf]
    %v125 = vld [vmem:[#allocation3 + $0x18] sm:$0xf]
    %v126 = vld [vmem:[#allocation3 + $0x1c] sm:$0xf]
    %v127 = vld [vmem:[#allocation6] sm:$0xff]
    %v128 = vld [vmem:[#allocation6 + $0x8] sm:$0xff]
    %v129 = vld [vmem:[#allocation6 + $0x10] sm:$0xff]
    %v130 = vld [vmem:[#allocation6 + $0x18] sm:$0xff]
    %v131 = vld [vmem:[#allocation6 + $0x20] sm:$0xff]
    %v132 = vld [vmem:[#allocation6 + $0x28] sm:$0xff]
    %v133 = vld [vmem:[#allocation6 + $0x30] sm:$0xff]
    %v134 = vld [vmem:[#allocation6 + $0x38] sm:$0xff]
    %v135 = vld [vmem:[#allocation6 + $0x40] sm:$0xff]
    %v136 = vld [vmem:[#allocation6 + $0x48] sm:$0xff]
    %v137 = vld [vmem:[#allocation6 + $0x50] sm:$0xff]
    %v138 = vld [vmem:[#allocation6 + $0x58] sm:$0xff]
    %v139 = vld [vmem:[#allocation6 + $0x60] sm:$0xff]
    %v140 = vld [vmem:[#allocation6 + $0x68] sm:$0xff]
    %v141 = vld [vmem:[#allocation6 + $0x70] sm:$0xff]
    %v142 = vld [vmem:[#allocation6 + $0x78] sm:$0xff]
    %v143 = vld [vmem:[#allocation6 + $0x80] sm:$0xff]
    %v144 = vld [vmem:[#allocation6 + $0x88] sm:$0xff]
    %v145 = vld [vmem:[#allocation6 + $0x90] sm:$0xff]
    %v146 = vld [vmem:[#allocation6 + $0x98] sm:$0xff]
    %v147 = vld [vmem:[#allocation6 + $0xa0] sm:$0xff]
    %v148 = vld [vmem:[#allocation6 + $0xa8] sm:$0xff]
    %v149 = vld [vmem:[#allocation6 + $0xb0] sm:$0xff]
    %v150 = vld [vmem:[#allocation6 + $0xb8] sm:$0xff]
    %v151 = vld [vmem:[#allocation6 + $0xc0] sm:$0xff]
    %v152 = vld [vmem:[#allocation6 + $0xc8] sm:$0xff]
    %v153 = vld [vmem:[#allocation6 + $0xd0] sm:$0xff]
    %v154 = vld [vmem:[#allocation6 + $0xd8] sm:$0xff]
    %v155 = vld [vmem:[#allocation6 + $0xe0] sm:$0xff]
    %v156 = vld [vmem:[#allocation6 + $0xe8] sm:$0xff]
    %v157 = vld [vmem:[#allocation6 + $0xf0] sm:$0xff]
    %v158 = vld [vmem:[#allocation6 + $0xf8] sm:$0xff]
    %v159 = vld [vmem:[%s3] sm:$0xf]
    %v161 = vlaneseq
    %v162 = vshrl.u32 %v161, 7
    %v163 = vsub.s32 0, %v162
    %v164 = vrot.slane %v159, %v163
    %v165 = vlaneseq
    %v166 = vshrl.u32 %v165, 7
    %v167 = vsub.s32 1, %v166
    %v168 = vrot.slane %v159, %v167
    %v169 = vlaneseq
    %v170 = vshrl.u32 %v169, 7
    %v171 = vsub.s32 2, %v170
    %v172 = vrot.slane %v159, %v171
    %v173 = vlaneseq
    %v174 = vshrl.u32 %v173, 7
    %v175 = vsub.s32 3, %v174
    %v176 = vrot.slane %v159, %v175
    %v189 = vunpack.c.l.b16 %v119
    %v190 = vunpack.c.l.b16 %v120
    %v191 = vunpack.c.l.b16 %v121
    %v192 = vunpack.c.l.b16 %v122
    %v193 = vunpack.c.l.b16 %v123
    %v194 = vunpack.c.l.b16 %v124
    %v195 = vunpack.c.l.b16 %v125
    %v196 = vunpack.c.l.b16 %v126
    %v197 = vpack.c.b16 %v190, %v189
    %v198 = vpack.c.b16 %v192, %v191
    %v199 = vpack.c.b16 %v194, %v193
    %v200 = vpack.c.b16 %v196, %v195
    %v237 = vunpack.c.l.b16 %v127
    %v238 = vunpack.c.h.b16 %v127
    %v239 = vunpack.c.l.b16 %v128
    %v240 = vunpack.c.h.b16 %v128
    %v241 = vunpack.c.l.b16 %v129
    %v242 = vunpack.c.h.b16 %v129
    %v243 = vunpack.c.l.b16 %v130
    %v244 = vunpack.c.h.b16 %v130
    %v245 = vunpack.c.l.b16 %v131
    %v246 = vunpack.c.h.b16 %v131
    %v247 = vunpack.c.l.b16 %v132
    %v248 = vunpack.c.h.b16 %v132
    %v249 = vunpack.c.l.b16 %v133
    %v250 = vunpack.c.h.b16 %v133
    %v251 = vunpack.c.l.b16 %v134
    %v252 = vunpack.c.h.b16 %v134
    %v253 = vunpack.c.l.b16 %v135
    %v254 = vunpack.c.h.b16 %v135
    %v255 = vunpack.c.l.b16 %v136
    %v256 = vunpack.c.h.b16 %v136
    %v257 = vunpack.c.l.b16 %v137
    %v258 = vunpack.c.h.b16 %v137
    %v259 = vunpack.c.l.b16 %v138
    %v260 = vunpack.c.h.b16 %v138
    %v261 = vunpack.c.l.b16 %v139
    %v262 = vunpack.c.h.b16 %v139
    %v263 = vunpack.c.l.b16 %v140
    %v264 = vunpack.c.h.b16 %v140
    %v265 = vunpack.c.l.b16 %v141
    %v266 = vunpack.c.h.b16 %v141
    %v267 = vunpack.c.l.b16 %v142
    %v268 = vunpack.c.h.b16 %v142
    %v269 = vunpack.c.l.b16 %v143
    %v270 = vunpack.c.h.b16 %v143
    %v271 = vunpack.c.l.b16 %v144
    %v272 = vunpack.c.h.b16 %v144
    %v273 = vunpack.c.l.b16 %v145
    %v274 = vunpack.c.h.b16 %v145
    %v275 = vunpack.c.l.b16 %v146
    %v276 = vunpack.c.h.b16 %v146
    %v277 = vunpack.c.l.b16 %v147
    %v278 = vunpack.c.h.b16 %v147
    %v279 = vunpack.c.l.b16 %v148
    %v280 = vunpack.c.h.b16 %v148
    %v281 = vunpack.c.l.b16 %v149
    %v282 = vunpack.c.h.b16 %v149
    %v283 = vunpack.c.l.b16 %v150
    %v284 = vunpack.c.h.b16 %v150
    %v285 = vunpack.c.l.b16 %v151
    %v286 = vunpack.c.h.b16 %v151
    %v287 = vunpack.c.l.b16 %v152
    %v288 = vunpack.c.h.b16 %v152
    %v289 = vunpack.c.l.b16 %v153
    %v290 = vunpack.c.h.b16 %v153
    %v291 = vunpack.c.l.b16 %v154
    %v292 = vunpack.c.h.b16 %v154
    %v293 = vunpack.c.l.b16 %v155
    %v294 = vunpack.c.h.b16 %v155
    %v295 = vunpack.c.l.b16 %v156
    %v296 = vunpack.c.h.b16 %v156
    %v297 = vunpack.c.l.b16 %v157
    %v298 = vunpack.c.h.b16 %v157
    %v299 = vunpack.c.l.b16 %v158
    %v300 = vunpack.c.h.b16 %v158
    %v301 = vpack.c.b16 %v241, %v237
    %v302 = vpack.c.b16 %v242, %v238
    %v303 = vpack.c.b16 %v243, %v239
    %v304 = vpack.c.b16 %v244, %v240
    %v305 = vpack.c.b16 %v249, %v245
    %v306 = vpack.c.b16 %v250, %v246
    %v307 = vpack.c.b16 %v251, %v247
    %v308 = vpack.c.b16 %v252, %v248
    %v309 = vpack.c.b16 %v257, %v253
    %v310 = vpack.c.b16 %v258, %v254
    %v311 = vpack.c.b16 %v259, %v255
    %v312 = vpack.c.b16 %v260, %v256
    %v313 = vpack.c.b16 %v265, %v261
    %v314 = vpack.c.b16 %v266, %v262
    %v315 = vpack.c.b16 %v267, %v263
    %v316 = vpack.c.b16 %v268, %v264
    %v317 = vpack.c.b16 %v273, %v269
    %v318 = vpack.c.b16 %v274, %v270
    %v319 = vpack.c.b16 %v275, %v271
    %v320 = vpack.c.b16 %v276, %v272
    %v321 = vpack.c.b16 %v281, %v277
    %v322 = vpack.c.b16 %v282, %v278
    %v323 = vpack.c.b16 %v283, %v279
    %v324 = vpack.c.b16 %v284, %v280
    %v325 = vpack.c.b16 %v289, %v285
    %v326 = vpack.c.b16 %v290, %v286
    %v327 = vpack.c.b16 %v291, %v287
    %v328 = vpack.c.b16 %v292, %v288
    %v329 = vpack.c.b16 %v297, %v293
    %v330 = vpack.c.b16 %v298, %v294
    %v331 = vpack.c.b16 %v299, %v295
    %v332 = vpack.c.b16 %v300, %v296
    %365 = vmatprep.subr.bf16.mxu0 %v302
    %366 = vmatpush1.bf16.msra.mxu0 %v301
    %367 = vmatprep.subr.bf16.mxu0 %v306
    %368 = vmatpush1.bf16.msra.mxu0 %v305
    %369 = vmatprep.subr.bf16.mxu0 %v310
    %370 = vmatpush1.bf16.msra.mxu0 %v309
    %371 = vmatprep.subr.bf16.mxu0 %v314
    %372 = vmatpush1.bf16.msra.mxu0 %v313
    %373 = vmatprep.subr.bf16.mxu0 %v318
    %374 = vmatpush1.bf16.msra.mxu0 %v317
    %375 = vmatprep.subr.bf16.mxu0 %v322
    %376 = vmatpush1.bf16.msra.mxu0 %v321
    %377 = vmatprep.subr.bf16.mxu0 %v326
    %378 = vmatpush1.bf16.msra.mxu0 %v325
    %379 = vmatprep.subr.bf16.mxu0 %v330
    %380 = vmatpush1.bf16.msra.mxu0 %v329
    %381 = vmatprep.subr.bf16.mxu0 0
    %382 = vmatpush1.bf16.msra.mxu0 0
    %383 = vmatprep.subr.bf16.mxu0 0
    %384 = vmatpush1.bf16.msra.mxu0 0
    %385 = vmatprep.subr.bf16.mxu0 0
    %386 = vmatpush1.bf16.msra.mxu0 0
    %387 = vmatprep.subr.bf16.mxu0 0
    %388 = vmatpush1.bf16.msra.mxu0 0
    %389 = vmatprep.subr.bf16.mxu0 0
    %390 = vmatpush1.bf16.msra.mxu0 0
    %391 = vmatprep.subr.bf16.mxu0 0
    %392 = vmatpush1.bf16.msra.mxu0 0
    %393 = vmatprep.subr.bf16.mxu0 0
    %394 = vmatpush1.bf16.msra.mxu0 0
    %395 = vmatprep.subr.bf16.mxu0 0
    %396 = vmatpush1.bf16.msra.mxu0 0
    %397 = vmatprep.mubr.bf16.mxu0 0
    %398 = vmatmul.mubr.bf16.gmra.mrb[0].mxu0 %v197
    %v399 = vpop.f32.mrb[0].mxu0
    %v400 = vadd.f32 %v164, %v399
    %v401 = vpop.f32.mrb[0].mxu0
    %v402 = vadd.f32 %v168, %v401
    %v403 = vpop.f32.mrb[0].mxu0
    %v404 = vadd.f32 %v164, %v403
    %v405 = vpop.f32.mrb[0].mxu0
    %v406 = vadd.f32 %v168, %v405
    %407 = vmatprep.mubr.bf16.mxu0 0
    %408 = vmatmul.mubr.bf16.gmra.mrb[0].mxu0 %v198
    %v409 = vpop.f32.mrb[0].mxu0
    %v410 = vadd.f32 %v164, %v409
    %v411 = vpop.f32.mrb[0].mxu0
    %v412 = vadd.f32 %v168, %v411
    %v413 = vpop.f32.mrb[0].mxu0
    %v414 = vadd.f32 %v164, %v413
    %v415 = vpop.f32.mrb[0].mxu0
    %v416 = vadd.f32 %v168, %v415
    %417 = vmatprep.mubr.bf16.mxu0 0
    %418 = vmatmul.mubr.bf16.gmra.mrb[0].mxu0 %v199
    %v419 = vpop.f32.mrb[0].mxu0
    %v420 = vadd.f32 %v164, %v419
    %v421 = vpop.f32.mrb[0].mxu0
    %v422 = vadd.f32 %v168, %v421
    %v423 = vpop.f32.mrb[0].mxu0
    %v424 = vadd.f32 %v164, %v423
    %v425 = vpop.f32.mrb[0].mxu0
    %v426 = vadd.f32 %v168, %v425
    %427 = vmatprep.mubr.bf16.mxu0 0
    %428 = vmatmul.mubr.bf16.gmra.mrb[0].mxu0 %v200
    %v429 = vpop.f32.mrb[0].mxu0
    %v430 = vadd.f32 %v164, %v429
    %v431 = vpop.f32.mrb[0].mxu0
    %v432 = vadd.f32 %v168, %v431
    %v433 = vpop.f32.mrb[0].mxu0
    %v434 = vadd.f32 %v164, %v433
    %v435 = vpop.f32.mrb[0].mxu0
    %v436 = vadd.f32 %v168, %v435
    %437 = vdwg.mxu0
    %438 = vmatprep.subr.bf16.mxu0 %v304
    %439 = vmatpush1.bf16.msra.mxu0 %v303
    %440 = vmatprep.subr.bf16.mxu0 %v308
    %441 = vmatpush1.bf16.msra.mxu0 %v307
    %442 = vmatprep.subr.bf16.mxu0 %v312
    %443 = vmatpush1.bf16.msra.mxu0 %v311
    %444 = vmatprep.subr.bf16.mxu0 %v316
    %445 = vmatpush1.bf16.msra.mxu0 %v315
    %446 = vmatprep.subr.bf16.mxu0 %v320
    %447 = vmatpush1.bf16.msra.mxu0 %v319
    %448 = vmatprep.subr.bf16.mxu0 %v324
    %449 = vmatpush1.bf16.msra.mxu0 %v323
    %450 = vmatprep.subr.bf16.mxu0 %v328
    %451 = vmatpush1.bf16.msra.mxu0 %v327
    %452 = vmatprep.subr.bf16.mxu0 %v332
    %453 = vmatpush1.bf16.msra.mxu0 %v331
    %454 = vmatprep.subr.bf16.mxu0 0
    %455 = vmatpush1.bf16.msra.mxu0 0
    %456 = vmatprep.subr.bf16.mxu0 0
    %457 = vmatpush1.bf16.msra.mxu0 0
    %458 = vmatprep.subr.bf16.mxu0 0
    %459 = vmatpush1.bf16.msra.mxu0 0
    %460 = vmatprep.subr.bf16.mxu0 0
    %461 = vmatpush1.bf16.msra.mxu0 0
    %462 = vmatprep.subr.bf16.mxu0 0
    %463 = vmatpush1.bf16.msra.mxu0 0
    %464 = vmatprep.subr.bf16.mxu0 0
    %465 = vmatpush1.bf16.msra.mxu0 0
    %466 = vmatprep.subr.bf16.mxu0 0
    %467 = vmatpush1.bf16.msra.mxu0 0
    %468 = vmatprep.subr.bf16.mxu0 0
    %469 = vmatpush1.bf16.msra.mxu0 0
    %470 = vmatprep.mubr.bf16.mxu0 0
    %471 = vmatmul.mubr.bf16.gmra.mrb[0].mxu0 %v197
    %v472 = vpop.f32.mrb[0].mxu0
    %v473 = vadd.f32 %v172, %v472
    %v474 = vpop.f32.mrb[0].mxu0
    %v475 = vadd.f32 %v176, %v474
    %v476 = vpop.f32.mrb[0].mxu0
    %v477 = vadd.f32 %v172, %v476
    %v478 = vpop.f32.mrb[0].mxu0
    %v479 = vadd.f32 %v176, %v478
    %480 = vmatprep.mubr.bf16.mxu0 0
    %481 = vmatmul.mubr.bf16.gmra.mrb[0].mxu0 %v198
    %v482 = vpop.f32.mrb[0].mxu0
    %v483 = vadd.f32 %v172, %v482
    %v484 = vpop.f32.mrb[0].mxu0
    %v485 = vadd.f32 %v176, %v484
    %v486 = vpop.f32.mrb[0].mxu0
    %v487 = vadd.f32 %v172, %v486
    %v488 = vpop.f32.mrb[0].mxu0
    %v489 = vadd.f32 %v176, %v488
    %490 = vmatprep.mubr.bf16.mxu0 0
    %491 = vmatmul.mubr.bf16.gmra.mrb[0].mxu0 %v199
    %v492 = vpop.f32.mrb[0].mxu0
    %v493 = vadd.f32 %v172, %v492
    %v494 = vpop.f32.mrb[0].mxu0
    %v495 = vadd.f32 %v176, %v494
    %v496 = vpop.f32.mrb[0].mxu0
    %v497 = vadd.f32 %v172, %v496
    %v498 = vpop.f32.mrb[0].mxu0
    %v499 = vadd.f32 %v176, %v498
    %500 = vmatprep.mubr.bf16.mxu0 0
    %501 = vmatmul.mubr.bf16.gmra.mrb[0].mxu0 %v200
    %v502 = vpop.f32.mrb[0].mxu0
    %v503 = vadd.f32 %v172, %v502
    %v504 = vpop.f32.mrb[0].mxu0
    %v505 = vadd.f32 %v176, %v504
    %v506 = vpop.f32.mrb[0].mxu0
    %v507 = vadd.f32 %v172, %v506
    %v508 = vpop.f32.mrb[0].mxu0
    %v509 = vadd.f32 %v176, %v508
    %510 = vdwg.mxu0
    %511 = vst [vmem:[#allocation2] sm:$0xff] %v400
    %512 = vst [vmem:[#allocation2 + $0x8] sm:$0xff] %v402
    %513 = vst [vmem:[#allocation2 + $0x10] sm:$0xff] %v473
    %514 = vst [vmem:[#allocation2 + $0x18] sm:$0xff] %v475
    %515 = vst [vmem:[#allocation2 + $0x20] sm:$0xff] %v404
    %516 = vst [vmem:[#allocation2 + $0x28] sm:$0xff] %v406
    %517 = vst [vmem:[#allocation2 + $0x30] sm:$0xff] %v477
    %518 = vst [vmem:[#allocation2 + $0x38] sm:$0xff] %v479
    %519 = vst [vmem:[#allocation2 + $0x40] sm:$0xff] %v410
    %520 = vst [vmem:[#allocation2 + $0x48] sm:$0xff] %v412
    %521 = vst [vmem:[#allocation2 + $0x50] sm:$0xff] %v483
    %522 = vst [vmem:[#allocation2 + $0x58] sm:$0xff] %v485
    %523 = vst [vmem:[#allocation2 + $0x60] sm:$0xff] %v414
    %524 = vst [vmem:[#allocation2 + $0x68] sm:$0xff] %v416
    %525 = vst [vmem:[#allocation2 + $0x70] sm:$0xff] %v487
    %526 = vst [vmem:[#allocation2 + $0x78] sm:$0xff] %v489
    %527 = vst [vmem:[#allocation2 + $0x80] sm:$0xff] %v420
    %528 = vst [vmem:[#allocation2 + $0x88] sm:$0xff] %v422
    %529 = vst [vmem:[#allocation2 + $0x90] sm:$0xff] %v493
    %530 = vst [vmem:[#allocation2 + $0x98] sm:$0xff] %v495
    %531 = vst [vmem:[#allocation2 + $0xa0] sm:$0xff] %v424
    %532 = vst [vmem:[#allocation2 + $0xa8] sm:$0xff] %v426
    %533 = vst [vmem:[#allocation2 + $0xb0] sm:$0xff] %v497
    %534 = vst [vmem:[#allocation2 + $0xb8] sm:$0xff] %v499
    %535 = vst [vmem:[#allocation2 + $0xc0] sm:$0xff] %v430
    %536 = vst [vmem:[#allocation2 + $0xc8] sm:$0xff] %v432
    %537 = vst [vmem:[#allocation2 + $0xd0] sm:$0xff] %v503
    %538 = vst [vmem:[#allocation2 + $0xd8] sm:$0xff] %v505
    %539 = vst [vmem:[#allocation2 + $0xe0] sm:$0xff] %v434
    %540 = vst [vmem:[#allocation2 + $0xe8] sm:$0xff] %v436
    %541 = vst [vmem:[#allocation2 + $0xf0] sm:$0xff] %v507
    %542 = vst [vmem:[#allocation2 + $0xf8] sm:$0xff] %v509
    %s543 = smul.u32 0, 4
    %s544 = smul.addr %s543, 8
    %s545 = scalar_lea.vmem [#allocation2], %s544
    %v546 = vld [vmem:[%s545] sm:$0xff]
    %v547 = vld [vmem:[%s545 + $0x8] sm:$0xff]
    %v548 = vld [vmem:[%s545 + $0x10] sm:$0xff]
    %v549 = vld [vmem:[%s545 + $0x18] sm:$0xff]
    %v550 = vld [vmem:[#allocation8] sm:$0xff]
    %v551 = vld [vmem:[#allocation8 + $0x8] sm:$0xff]
    %v552 = vld [vmem:[#allocation8 + $0x10] sm:$0xff]
    %v553 = vld [vmem:[#allocation8 + $0x18] sm:$0xff]
    %v554 = vld [vmem:[#allocation8 + $0x20] sm:$0xff]
    %v555 = vld [vmem:[#allocation8 + $0x28] sm:$0xff]
    %v556 = vld [vmem:[#allocation8 + $0x30] sm:$0xff]
    %v557 = vld [vmem:[#allocation8 + $0x38] sm:$0xff]
    %v558 = vld [vmem:[#allocation8 + $0x40] sm:$0xff]
    %v559 = vld [vmem:[#allocation8 + $0x48] sm:$0xff]
    %v560 = vld [vmem:[#allocation8 + $0x50] sm:$0xff]
    %v561 = vld [vmem:[#allocation8 + $0x58] sm:$0xff]
    %v562 = vld [vmem:[#allocation8 + $0x60] sm:$0xff]
    %v563 = vld [vmem:[#allocation8 + $0x68] sm:$0xff]
    %v564 = vld [vmem:[#allocation8 + $0x70] sm:$0xff]
    %v565 = vld [vmem:[#allocation8 + $0x78] sm:$0xff]
    %v566 = vld [vmem:[#allocation8 + $0x80] sm:$0xff]
    %v567 = vld [vmem:[#allocation8 + $0x88] sm:$0xff]
    %v568 = vld [vmem:[#allocation8 + $0x90] sm:$0xff]
    %v569 = vld [vmem:[#allocation8 + $0x98] sm:$0xff]
    %v570 = vld [vmem:[#allocation8 + $0xa0] sm:$0xff]
    %v571 = vld [vmem:[#allocation8 + $0xa8] sm:$0xff]
    %v572 = vld [vmem:[#allocation8 + $0xb0] sm:$0xff]
    %v573 = vld [vmem:[#allocation8 + $0xb8] sm:$0xff]
    %v574 = vld [vmem:[#allocation8 + $0xc0] sm:$0xff]
    %v575 = vld [vmem:[#allocation8 + $0xc8] sm:$0xff]
    %v576 = vld [vmem:[#allocation8 + $0xd0] sm:$0xff]
    %v577 = vld [vmem:[#allocation8 + $0xd8] sm:$0xff]
    %v578 = vld [vmem:[#allocation8 + $0xe0] sm:$0xff]
    %v579 = vld [vmem:[#allocation8 + $0xe8] sm:$0xff]
    %v580 = vld [vmem:[#allocation8 + $0xf0] sm:$0xff]
    %v581 = vld [vmem:[#allocation8 + $0xf8] sm:$0xff]
    %v614 = vunpack.c.l.b16 %v550
    %v615 = vunpack.c.h.b16 %v550
    %v616 = vunpack.c.l.b16 %v551
    %v617 = vunpack.c.h.b16 %v551
    %v618 = vunpack.c.l.b16 %v552
    %v619 = vunpack.c.h.b16 %v552
    %v620 = vunpack.c.l.b16 %v553
    %v621 = vunpack.c.h.b16 %v553
    %v622 = vunpack.c.l.b16 %v554
    %v623 = vunpack.c.h.b16 %v554
    %v624 = vunpack.c.l.b16 %v555
    %v625 = vunpack.c.h.b16 %v555
    %v626 = vunpack.c.l.b16 %v556
    %v627 = vunpack.c.h.b16 %v556
    %v628 = vunpack.c.l.b16 %v557
    %v629 = vunpack.c.h.b16 %v557
    %v630 = vunpack.c.l.b16 %v558
    %v631 = vunpack.c.h.b16 %v558
    %v632 = vunpack.c.l.b16 %v559
    %v633 = vunpack.c.h.b16 %v559
    %v634 = vunpack.c.l.b16 %v560
    %v635 = vunpack.c.h.b16 %v560
    %v636 = vunpack.c.l.b16 %v561
    %v637 = vunpack.c.h.b16 %v561
    %v638 = vunpack.c.l.b16 %v562
    %v639 = vunpack.c.h.b16 %v562
    %v640 = vunpack.c.l.b16 %v563
    %v641 = vunpack.c.h.b16 %v563
    %v642 = vunpack.c.l.b16 %v564
    %v643 = vunpack.c.h.b16 %v564
    %v644 = vunpack.c.l.b16 %v565
    %v645 = vunpack.c.h.b16 %v565
    %v646 = vunpack.c.l.b16 %v566
    %v647 = vunpack.c.h.b16 %v566
    %v648 = vunpack.c.l.b16 %v567
    %v649 = vunpack.c.h.b16 %v567
    %v650 = vunpack.c.l.b16 %v568
    %v651 = vunpack.c.h.b16 %v568
    %v652 = vunpack.c.l.b16 %v569
    %v653 = vunpack.c.h.b16 %v569
    %v654 = vunpack.c.l.b16 %v570
    %v655 = vunpack.c.h.b16 %v570
    %v656 = vunpack.c.l.b16 %v571
    %v657 = vunpack.c.h.b16 %v571
    %v658 = vunpack.c.l.b16 %v572
    %v659 = vunpack.c.h.b16 %v572
    %v660 = vunpack.c.l.b16 %v573
    %v661 = vunpack.c.h.b16 %v573
    %v662 = vunpack.c.l.b16 %v574
    %v663 = vunpack.c.h.b16 %v574
    %v664 = vunpack.c.l.b16 %v575
    %v665 = vunpack.c.h.b16 %v575
    %v666 = vunpack.c.l.b16 %v576
    %v667 = vunpack.c.h.b16 %v576
    %v668 = vunpack.c.l.b16 %v577
    %v669 = vunpack.c.h.b16 %v577
    %v670 = vunpack.c.l.b16 %v578
    %v671 = vunpack.c.h.b16 %v578
    %v672 = vunpack.c.l.b16 %v579
    %v673 = vunpack.c.h.b16 %v579
    %v674 = vunpack.c.l.b16 %v580
    %v675 = vunpack.c.h.b16 %v580
    %v676 = vunpack.c.l.b16 %v581
    %v677 = vunpack.c.h.b16 %v581
    %v678 = vpack.c.b16 %v618, %v614
    %v679 = vpack.c.b16 %v619, %v615
    %v680 = vpack.c.b16 %v620, %v616
    %v681 = vpack.c.b16 %v621, %v617
    %v682 = vpack.c.b16 %v626, %v622
    %v683 = vpack.c.b16 %v627, %v623
    %v684 = vpack.c.b16 %v628, %v624
    %v685 = vpack.c.b16 %v629, %v625
    %v686 = vpack.c.b16 %v634, %v630
    %v687 = vpack.c.b16 %v635, %v631
    %v688 = vpack.c.b16 %v636, %v632
    %v689 = vpack.c.b16 %v637, %v633
    %v690 = vpack.c.b16 %v642, %v638
    %v691 = vpack.c.b16 %v643, %v639
    %v692 = vpack.c.b16 %v644, %v640
    %v693 = vpack.c.b16 %v645, %v641
    %v694 = vpack.c.b16 %v650, %v646
    %v695 = vpack.c.b16 %v651, %v647
    %v696 = vpack.c.b16 %v652, %v648
    %v697 = vpack.c.b16 %v653, %v649
    %v698 = vpack.c.b16 %v658, %v654
    %v699 = vpack.c.b16 %v659, %v655
    %v700 = vpack.c.b16 %v660, %v656
    %v701 = vpack.c.b16 %v661, %v657
    %v702 = vpack.c.b16 %v666, %v662
    %v703 = vpack.c.b16 %v667, %v663
    %v704 = vpack.c.b16 %v668, %v664
    %v705 = vpack.c.b16 %v669, %v665
    %v706 = vpack.c.b16 %v674, %v670
    %v707 = vpack.c.b16 %v675, %v671
    %v708 = vpack.c.b16 %v676, %v672
    %v709 = vpack.c.b16 %v677, %v673
    %742 = vmatprep.subr.bf16.mxu0 %v679
    %743 = vmatpush1.bf16.msra.mxu0 %v678
    %744 = vmatprep.subr.bf16.mxu0 %v683
    %745 = vmatpush1.bf16.msra.mxu0 %v682
    %746 = vmatprep.subr.bf16.mxu0 %v687
    %747 = vmatpush1.bf16.msra.mxu0 %v686
    %748 = vmatprep.subr.bf16.mxu0 %v691
    %749 = vmatpush1.bf16.msra.mxu0 %v690
    %750 = vmatprep.subr.bf16.mxu0 %v695
    %751 = vmatpush1.bf16.msra.mxu0 %v694
    %752 = vmatprep.subr.bf16.mxu0 %v699
    %753 = vmatpush1.bf16.msra.mxu0 %v698
    %754 = vmatprep.subr.bf16.mxu0 %v703
    %755 = vmatpush1.bf16.msra.mxu0 %v702
    %756 = vmatprep.subr.bf16.mxu0 %v707
    %757 = vmatpush1.bf16.msra.mxu0 %v706
    %758 = vmatprep.subr.bf16.mxu0 0
    %759 = vmatpush1.bf16.msra.mxu0 0
    %760 = vmatprep.subr.bf16.mxu0 0
    %761 = vmatpush1.bf16.msra.mxu0 0
    %762 = vmatprep.subr.bf16.mxu0 0
    %763 = vmatpush1.bf16.msra.mxu0 0
    %764 = vmatprep.subr.bf16.mxu0 0
    %765 = vmatpush1.bf16.msra.mxu0 0
    %766 = vmatprep.subr.bf16.mxu0 0
    %767 = vmatpush1.bf16.msra.mxu0 0
    %768 = vmatprep.subr.bf16.mxu0 0
    %769 = vmatpush1.bf16.msra.mxu0 0
    %770 = vmatprep.subr.bf16.mxu0 0
    %771 = vmatpush1.bf16.msra.mxu0 0
    %772 = vmatprep.subr.bf16.mxu0 0
    %773 = vmatpush1.bf16.msra.mxu0 0
    %774 = vmatprep.mubr.bf16.mxu0 0
    %775 = vmatmul.mubr.bf16.gmra.mrb[0].mxu0 0
    %v776 = vpop.f32.mrb[0].mxu0
    %v777 = vadd.f32 0.0, %v776
    %v778 = vpop.f32.mrb[0].mxu0
    %v779 = vadd.f32 0.0, %v778
    %v780 = vpop.f32.mrb[0].mxu0
    %v781 = vpop.f32.mrb[0].mxu0
    %782 = vdwg.mxu0
    %783 = vmatprep.subr.bf16.mxu0 %v681
    %784 = vmatpush1.bf16.msra.mxu0 %v680
    %785 = vmatprep.subr.bf16.mxu0 %v685
    %786 = vmatpush1.bf16.msra.mxu0 %v684
    %787 = vmatprep.subr.bf16.mxu0 %v689
    %788 = vmatpush1.bf16.msra.mxu0 %v688
    %789 = vmatprep.subr.bf16.mxu0 %v693
    %790 = vmatpush1.bf16.msra.mxu0 %v692
    %791 = vmatprep.subr.bf16.mxu0 %v697
    %792 = vmatpush1.bf16.msra.mxu0 %v696
    %793 = vmatprep.subr.bf16.mxu0 %v701
    %794 = vmatpush1.bf16.msra.mxu0 %v700
    %795 = vmatprep.subr.bf16.mxu0 %v705
    %796 = vmatpush1.bf16.msra.mxu0 %v704
    %797 = vmatprep.subr.bf16.mxu0 %v709
    %798 = vmatpush1.bf16.msra.mxu0 %v708
    %799 = vmatprep.subr.bf16.mxu0 0
    %800 = vmatpush1.bf16.msra.mxu0 0
    %801 = vmatprep.subr.bf16.mxu0 0
    %802 = vmatpush1.bf16.msra.mxu0 0
    %803 = vmatprep.subr.bf16.mxu0 0
    %804 = vmatpush1.bf16.msra.mxu0 0
    %805 = vmatprep.subr.bf16.mxu0 0
    %806 = vmatpush1.bf16.msra.mxu0 0
    %807 = vmatprep.subr.bf16.mxu0 0
    %808 = vmatpush1.bf16.msra.mxu0 0
    %809 = vmatprep.subr.bf16.mxu0 0
    %810 = vmatpush1.bf16.msra.mxu0 0
    %811 = vmatprep.subr.bf16.mxu0 0
    %812 = vmatpush1.bf16.msra.mxu0 0
    %813 = vmatprep.subr.bf16.mxu0 0
    %814 = vmatpush1.bf16.msra.mxu0 0
    %815 = vmatprep.mubr.bf16.mxu0 0
    %816 = vmatmul.mubr.bf16.gmra.mrb[0].mxu0 0
    %v817 = vpop.f32.mrb[0].mxu0
    %v818 = vadd.f32 0.0, %v817
    %v819 = vpop.f32.mrb[0].mxu0
    %v820 = vadd.f32 0.0, %v819
    %v821 = vpop.f32.mrb[0].mxu0
    %v822 = vpop.f32.mrb[0].mxu0
    %823 = vdwg.mxu0
    %v824 = vadd.f32 %v546, %v777
    %v825 = vadd.f32 %v547, %v779
    %v826 = vadd.f32 %v548, %v818
    %v827 = vadd.f32 %v549, %v820
    %v828 = vxor.u32 %v824, 2147483648
    %v829 = vmul.f32 %v828, 1.442695
    %v830 = vpow.pop %v829
    %v831 = vadd.f32 %v830, 1.0
    %v832 = vrcp.pop %v831
    %v833 = vmul.f32 1.0, %v832
    %v834 = vxor.u32 %v825, 2147483648
    %v835 = vmul.f32 %v834, 1.442695
    %v836 = vpow.pop %v835
    %v837 = vadd.f32 %v836, 1.0
    %v838 = vrcp.pop %v837
    %v839 = vmul.f32 1.0, %v838
    %v840 = vtanh.pop %v826
    %v841 = vxor.u32 %v827, 2147483648
    %v842 = vmul.f32 %v841, 1.442695
    %v843 = vpow.pop %v842
    %v844 = vadd.f32 %v843, 1.0
    %v845 = vrcp.pop %v844
    %v846 = vmul.f32 1.0, %v845
    %v847 = vmul.f32 %v839, 0.0
    %v848 = vmul.f32 %v833, %v840
    %v849 = vadd.f32 %v847, %v848
    %v850 = vtanh.pop %v849
    %v851 = vmul.f32 %v846, %v850
    %852 = vst [vmem:[#allocation14] sm:$0xff] %v851
    %s853 = smul.u32 1, 4
    %s854 = smul.addr %s853, 8
    %s855 = scalar_lea.vmem [#allocation2], %s854
    %v856 = vld [vmem:[%s855] sm:$0xff]
    %v857 = vld [vmem:[%s855 + $0x8] sm:$0xff]
    %v858 = vld [vmem:[%s855 + $0x10] sm:$0xff]
    %v859 = vld [vmem:[%s855 + $0x18] sm:$0xff]
    %v860 = vpack.c.bf16 %v851, %v851
    %v861 = vld [vmem:[#allocation8] sm:$0xff]
    %v862 = vld [vmem:[#allocation8 + $0x8] sm:$0xff]
    %v863 = vld [vmem:[#allocation8 + $0x10] sm:$0xff]
    %v864 = vld [vmem:[#allocation8 + $0x18] sm:$0xff]
    %v865 = vld [vmem:[#allocation8 + $0x20] sm:$0xff]
    %v866 = vld [vmem:[#allocation8 + $0x28] sm:$0xff]
    %v867 = vld [vmem:[#allocation8 + $0x30] sm:$0xff]
    %v868 = vld [vmem:[#allocation8 + $0x38] sm:$0xff]
    %v869 = vld [vmem:[#allocation8 + $0x40] sm:$0xff]
    %v870 = vld [vmem:[#allocation8 + $0x48] sm:$0xff]
    %v871 = vld [vmem:[#allocation8 + $0x50] sm:$0xff]
    %v872 = vld [vmem:[#allocation8 + $0x58] sm:$0xff]
    %v873 = vld [vmem:[#allocation8 + $0x60] sm:$0xff]
    %v874 = vld [vmem:[#allocation8 + $0x68] sm:$0xff]
    %v875 = vld [vmem:[#allocation8 + $0x70] sm:$0xff]
    %v876 = vld [vmem:[#allocation8 + $0x78] sm:$0xff]
    %v877 = vld [vmem:[#allocation8 + $0x80] sm:$0xff]
    %v878 = vld [vmem:[#allocation8 + $0x88] sm:$0xff]
    %v879 = vld [vmem:[#allocation8 + $0x90] sm:$0xff]
    %v880 = vld [vmem:[#allocation8 + $0x98] sm:$0xff]
    %v881 = vld [vmem:[#allocation8 + $0xa0] sm:$0xff]
    %v882 = vld [vmem:[#allocation8 + $0xa8] sm:$0xff]
    %v883 = vld [vmem:[#allocation8 + $0xb0] sm:$0xff]
    %v884 = vld [vmem:[#allocation8 + $0xb8] sm:$0xff]
    %v885 = vld [vmem:[#allocation8 + $0xc0] sm:$0xff]
    %v886 = vld [vmem:[#allocation8 + $0xc8] sm:$0xff]
    %v887 = vld [vmem:[#allocation8 + $0xd0] sm:$0xff]
    %v888 = vld [vmem:[#allocation8 + $0xd8] sm:$0xff]
    %v889 = vld [vmem:[#allocation8 + $0xe0] sm:$0xff]
    %v890 = vld [vmem:[#allocation8 + $0xe8] sm:$0xff]
    %v891 = vld [vmem:[#allocation8 + $0xf0] sm:$0xff]
    %v892 = vld [vmem:[#allocation8 + $0xf8] sm:$0xff]
    %v925 = vunpack.c.l.b16 %v861
    %v926 = vunpack.c.h.b16 %v861
    %v927 = vunpack.c.l.b16 %v862
    %v928 = vunpack.c.h.b16 %v862
    %v929 = vunpack.c.l.b16 %v863
    %v930 = vunpack.c.h.b16 %v863
    %v931 = vunpack.c.l.b16 %v864
    %v932 = vunpack.c.h.b16 %v864
    %v933 = vunpack.c.l.b16 %v865
    %v934 = vunpack.c.h.b16 %v865
    %v935 = vunpack.c.l.b16 %v866
    %v936 = vunpack.c.h.b16 %v866
    %v937 = vunpack.c.l.b16 %v867
    %v938 = vunpack.c.h.b16 %v867
    %v939 = vunpack.c.l.b16 %v868
    %v940 = vunpack.c.h.b16 %v868
    %v941 = vunpack.c.l.b16 %v869
    %v942 = vunpack.c.h.b16 %v869
    %v943 = vunpack.c.l.b16 %v870
    %v944 = vunpack.c.h.b16 %v870
    %v945 = vunpack.c.l.b16 %v871
    %v946 = vunpack.c.h.b16 %v871
    %v947 = vunpack.c.l.b16 %v872
    %v948 = vunpack.c.h.b16 %v872
    %v949 = vunpack.c.l.b16 %v873
    %v950 = vunpack.c.h.b16 %v873
    %v951 = vunpack.c.l.b16 %v874
    %v952 = vunpack.c.h.b16 %v874
    %v953 = vunpack.c.l.b16 %v875
    %v954 = vunpack.c.h.b16 %v875
    %v955 = vunpack.c.l.b16 %v876
    %v956 = vunpack.c.h.b16 %v876
    %v957 = vunpack.c.l.b16 %v877
    %v958 = vunpack.c.h.b16 %v877
    %v959 = vunpack.c.l.b16 %v878
    %v960 = vunpack.c.h.b16 %v878
    %v961 = vunpack.c.l.b16 %v879
    %v962 = vunpack.c.h.b16 %v879
    %v963 = vunpack.c.l.b16 %v880
    %v964 = vunpack.c.h.b16 %v880
    %v965 = vunpack.c.l.b16 %v881
    %v966 = vunpack.c.h.b16 %v881
    %v967 = vunpack.c.l.b16 %v882
    %v968 = vunpack.c.h.b16 %v882
    %v969 = vunpack.c.l.b16 %v883
    %v970 = vunpack.c.h.b16 %v883
    %v971 = vunpack.c.l.b16 %v884
    %v972 = vunpack.c.h.b16 %v884
    %v973 = vunpack.c.l.b16 %v885
    %v974 = vunpack.c.h.b16 %v885
    %v975 = vunpack.c.l.b16 %v886
    %v976 = vunpack.c.h.b16 %v886
    %v977 = vunpack.c.l.b16 %v887
    %v978 = vunpack.c.h.b16 %v887
    %v979 = vunpack.c.l.b16 %v888
    %v980 = vunpack.c.h.b16 %v888
    %v981 = vunpack.c.l.b16 %v889
    %v982 = vunpack.c.h.b16 %v889
    %v983 = vunpack.c.l.b16 %v890
    %v984 = vunpack.c.h.b16 %v890
    %v985 = vunpack.c.l.b16 %v891
    %v986 = vunpack.c.h.b16 %v891
    %v987 = vunpack.c.l.b16 %v892
    %v988 = vunpack.c.h.b16 %v892
    %v989 = vpack.c.b16 %v929, %v925
    %v990 = vpack.c.b16 %v930, %v926
    %v991 = vpack.c.b16 %v931, %v927
    %v992 = vpack.c.b16 %v932, %v928
    %v993 = vpack.c.b16 %v937, %v933
    %v994 = vpack.c.b16 %v938, %v934
    %v995 = vpack.c.b16 %v939, %v935
    %v996 = vpack.c.b16 %v940, %v936
    %v997 = vpack.c.b16 %v945, %v941
    %v998 = vpack.c.b16 %v946, %v942
    %v999 = vpack.c.b16 %v947, %v943
    %v1000 = vpack.c.b16 %v948, %v944
    %v1001 = vpack.c.b16 %v953, %v949
    %v1002 = vpack.c.b16 %v954, %v950
    %v1003 = vpack.c.b16 %v955, %v951
    %v1004 = vpack.c.b16 %v956, %v952
    %v1005 = vpack.c.b16 %v961, %v957
    %v1006 = vpack.c.b16 %v962, %v958
    %v1007 = vpack.c.b16 %v963, %v959
    %v1008 = vpack.c.b16 %v964, %v960
    %v1009 = vpack.c.b16 %v969, %v965
    %v1010 = vpack.c.b16 %v970, %v966
    %v1011 = vpack.c.b16 %v971, %v967
    %v1012 = vpack.c.b16 %v972, %v968
    %v1013 = vpack.c.b16 %v977, %v973
    %v1014 = vpack.c.b16 %v978, %v974
    %v1015 = vpack.c.b16 %v979, %v975
    %v1016 = vpack.c.b16 %v980, %v976
    %v1017 = vpack.c.b16 %v985, %v981
    %v1018 = vpack.c.b16 %v986, %v982
    %v1019 = vpack.c.b16 %v987, %v983
    %v1020 = vpack.c.b16 %v988, %v984
    %1053 = vmatprep.subr.bf16.mxu0 %v990
    %1054 = vmatpush1.bf16.msra.mxu0 %v989
    %1055 = vmatprep.subr.bf16.mxu0 %v994
    %1056 = vmatpush1.bf16.msra.mxu0 %v993
    %1057 = vmatprep.subr.bf16.mxu0 %v998
    %1058 = vmatpush1.bf16.msra.mxu0 %v997
    %1059 = vmatprep.subr.bf16.mxu0 %v1002
    %1060 = vmatpush1.bf16.msra.mxu0 %v1001
    %1061 = vmatprep.subr.bf16.mxu0 %v1006
    %1062 = vmatpush1.bf16.msra.mxu0 %v1005
    %1063 = vmatprep.subr.bf16.mxu0 %v1010
    %1064 = vmatpush1.bf16.msra.mxu0 %v1009
    %1065 = vmatprep.subr.bf16.mxu0 %v1014
    %1066 = vmatpush1.bf16.msra.mxu0 %v1013
    %1067 = vmatprep.subr.bf16.mxu0 %v1018
    %1068 = vmatpush1.bf16.msra.mxu0 %v1017
    %1069 = vmatprep.subr.bf16.mxu0 0
    %1070 = vmatpush1.bf16.msra.mxu0 0
    %1071 = vmatprep.subr.bf16.mxu0 0
    %1072 = vmatpush1.bf16.msra.mxu0 0
    %1073 = vmatprep.subr.bf16.mxu0 0
    %1074 = vmatpush1.bf16.msra.mxu0 0
    %1075 = vmatprep.subr.bf16.mxu0 0
    %1076 = vmatpush1.bf16.msra.mxu0 0
    %1077 = vmatprep.subr.bf16.mxu0 0
    %1078 = vmatpush1.bf16.msra.mxu0 0
    %1079 = vmatprep.subr.bf16.mxu0 0
    %1080 = vmatpush1.bf16.msra.mxu0 0
    %1081 = vmatprep.subr.bf16.mxu0 0
    %1082 = vmatpush1.bf16.msra.mxu0 0
    %1083 = vmatprep.subr.bf16.mxu0 0
    %1084 = vmatpush1.bf16.msra.mxu0 0
    %1085 = vmatprep.mubr.bf16.mxu0 0
    %1086 = vmatmul.mubr.bf16.gmra.mrb[0].mxu0 %v860
    %v1087 = vpop.f32.mrb[0].mxu0
    %v1088 = vadd.f32 0.0, %v1087
    %v1089 = vpop.f32.mrb[0].mxu0
    %v1090 = vadd.f32 0.0, %v1089
    %v1091 = vpop.f32.mrb[0].mxu0
    %v1092 = vpop.f32.mrb[0].mxu0
    %1093 = vdwg.mxu0
    %1094 = vmatprep.subr.bf16.mxu0 %v992
    %1095 = vmatpush1.bf16.msra.mxu0 %v991
    %1096 = vmatprep.subr.bf16.mxu0 %v996
    %1097 = vmatpush1.bf16.msra.mxu0 %v995
    %1098 = vmatprep.subr.bf16.mxu0 %v1000
    %1099 = vmatpush1.bf16.msra.mxu0 %v999
    %1100 = vmatprep.subr.bf16.mxu0 %v1004
    %1101 = vmatpush1.bf16.msra.mxu0 %v1003
    %1102 = vmatprep.subr.bf16.mxu0 %v1008
    %1103 = vmatpush1.bf16.msra.mxu0 %v1007
    %1104 = vmatprep.subr.bf16.mxu0 %v1012
    %1105 = vmatpush1.bf16.msra.mxu0 %v1011
    %1106 = vmatprep.subr.bf16.mxu0 %v1016
    %1107 = vmatpush1.bf16.msra.mxu0 %v1015
    %1108 = vmatprep.subr.bf16.mxu0 %v1020
    %1109 = vmatpush1.bf16.msra.mxu0 %v1019
    %1110 = vmatprep.subr.bf16.mxu0 0
    %1111 = vmatpush1.bf16.msra.mxu0 0
    %1112 = vmatprep.subr.bf16.mxu0 0
    %1113 = vmatpush1.bf16.msra.mxu0 0
    %1114 = vmatprep.subr.bf16.mxu0 0
    %1115 = vmatpush1.bf16.msra.mxu0 0
    %1116 = vmatprep.subr.bf16.mxu0 0
    %1117 = vmatpush1.bf16.msra.mxu0 0
    %1118 = vmatprep.subr.bf16.mxu0 0
    %1119 = vmatpush1.bf16.msra.mxu0 0
    %1120 = vmatprep.subr.bf16.mxu0 0
    %1121 = vmatpush1.bf16.msra.mxu0 0
    %1122 = vmatprep.subr.bf16.mxu0 0
    %1123 = vmatpush1.bf16.msra.mxu0 0
    %1124 = vmatprep.subr.bf16.mxu0 0
    %1125 = vmatpush1.bf16.msra.mxu0 0
    %1126 = vmatprep.mubr.bf16.mxu0 0
    %1127 = vmatmul.mubr.bf16.gmra.mrb[0].mxu0 %v860
    %v1128 = vpop.f32.mrb[0].mxu0
    %v1129 = vadd.f32 0.0, %v1128
    %v1130 = vpop.f32.mrb[0].mxu0
    %v1131 = vadd.f32 0.0, %v1130
    %v1132 = vpop.f32.mrb[0].mxu0
    %v1133 = vpop.f32.mrb[0].mxu0
    %1134 = vdwg.mxu0
    %v1135 = vadd.f32 %v856, %v1088
    %v1136 = vadd.f32 %v857, %v1090
    %v1137 = vadd.f32 %v858, %v1129
    %v1138 = vadd.f32 %v859, %v1131
    %v1139 = vxor.u32 %v1135, 2147483648
    %v1140 = vmul.f32 %v1139, 1.442695
    %v1141 = vpow.pop %v1140
    %v1142 = vadd.f32 %v1141, 1.0
    %v1143 = vrcp.pop %v1142
    %v1144 = vmul.f32 1.0, %v1143
    %v1145 = vxor.u32 %v1136, 2147483648
    %v1146 = vmul.f32 %v1145, 1.442695
    %v1147 = vpow.pop %v1146
    %v1148 = vadd.f32 %v1147, 1.0
    %v1149 = vrcp.pop %v1148
    %v1150 = vmul.f32 1.0, %v1149
    %v1151 = vtanh.pop %v1137
    %v1152 = vxor.u32 %v1138, 2147483648
    %v1153 = vmul.f32 %v1152, 1.442695
    %v1154 = vpow.pop %v1153
    %v1155 = vadd.f32 %v1154, 1.0
    %v1156 = vrcp.pop %v1155
    %v1157 = vmul.f32 1.0, %v1156
    %v1158 = vmul.f32 %v1150, %v849
    %v1159 = vmul.f32 %v1144, %v1151
    %v1160 = vadd.f32 %v1158, %v1159
    %v1161 = vtanh.pop %v1160
    %v1162 = vmul.f32 %v1157, %v1161
    %s1163 = scalar_lea.vmem [#allocation14], 8
    %1164 = vst [vmem:[%s1163] sm:$0xff] %v1162
    %s1165 = smul.u32 2, 4
    %s1166 = smul.addr %s1165, 8
    %s1167 = scalar_lea.vmem [#allocation2], %s1166
    %v1168 = vld [vmem:[%s1167] sm:$0xff]
    %v1169 = vld [vmem:[%s1167 + $0x8] sm:$0xff]
    %v1170 = vld [vmem:[%s1167 + $0x10] sm:$0xff]
    %v1171 = vld [vmem:[%s1167 + $0x18] sm:$0xff]
    %v1172 = vpack.c.bf16 %v1162, %v1162
    %v1173 = vld [vmem:[#allocation8] sm:$0xff]
    %v1174 = vld [vmem:[#allocation8 + $0x8] sm:$0xff]
    %v1175 = vld [vmem:[#allocation8 + $0x10] sm:$0xff]
    %v1176 = vld [vmem:[#allocation8 + $0x18] sm:$0xff]
    %v1177 = vld [vmem:[#allocation8 + $0x20] sm:$0xff]
    %v1178 = vld [vmem:[#allocation8 + $0x28] sm:$0xff]
    %v1179 = vld [vmem:[#allocation8 + $0x30] sm:$0xff]
    %v1180 = vld [vmem:[#allocation8 + $0x38] sm:$0xff]
    %v1181 = vld [vmem:[#allocation8 + $0x40] sm:$0xff]
    %v1182 = vld [vmem:[#allocation8 + $0x48] sm:$0xff]
    %v1183 = vld [vmem:[#allocation8 + $0x50] sm:$0xff]
    %v1184 = vld [vmem:[#allocation8 + $0x58] sm:$0xff]
    %v1185 = vld [vmem:[#allocation8 + $0x60] sm:$0xff]
    %v1186 = vld [vmem:[#allocation8 + $0x68] sm:$0xff]
    %v1187 = vld [vmem:[#allocation8 + $0x70] sm:$0xff]
    %v1188 = vld [vmem:[#allocation8 + $0x78] sm:$0xff]
    %v1189 = vld [vmem:[#allocation8 + $0x80] sm:$0xff]
    %v1190 = vld [vmem:[#allocation8 + $0x88] sm:$0xff]
    %v1191 = vld [vmem:[#allocation8 + $0x90] sm:$0xff]
    %v1192 = vld [vmem:[#allocation8 + $0x98] sm:$0xff]
    %v1193 = vld [vmem:[#allocation8 + $0xa0] sm:$0xff]
    %v1194 = vld [vmem:[#allocation8 + $0xa8] sm:$0xff]
    %v1195 = vld [vmem:[#allocation8 + $0xb0] sm:$0xff]
    %v1196 = vld [vmem:[#allocation8 + $0xb8] sm:$0xff]
    %v1197 = vld [vmem:[#allocation8 + $0xc0] sm:$0xff]
    %v1198 = vld [vmem:[#allocation8 + $0xc8] sm:$0xff]
    %v1199 = vld [vmem:[#allocation8 + $0xd0] sm:$0xff]
    %v1200 = vld [vmem:[#allocation8 + $0xd8] sm:$0xff]
    %v1201 = vld [vmem:[#allocation8 + $0xe0] sm:$0xff]
    %v1202 = vld [vmem:[#allocation8 + $0xe8] sm:$0xff]
    %v1203 = vld [vmem:[#allocation8 + $0xf0] sm:$0xff]
    %v1204 = vld [vmem:[#allocation8 + $0xf8] sm:$0xff]
    %v1237 = vunpack.c.l.b16 %v1173
    %v1238 = vunpack.c.h.b16 %v1173
    %v1239 = vunpack.c.l.b16 %v1174
    %v1240 = vunpack.c.h.b16 %v1174
    %v1241 = vunpack.c.l.b16 %v1175
    %v1242 = vunpack.c.h.b16 %v1175
    %v1243 = vunpack.c.l.b16 %v1176
    %v1244 = vunpack.c.h.b16 %v1176
    %v1245 = vunpack.c.l.b16 %v1177
    %v1246 = vunpack.c.h.b16 %v1177
    %v1247 = vunpack.c.l.b16 %v1178
    %v1248 = vunpack.c.h.b16 %v1178
    %v1249 = vunpack.c.l.b16 %v1179
    %v1250 = vunpack.c.h.b16 %v1179
    %v1251 = vunpack.c.l.b16 %v1180
    %v1252 = vunpack.c.h.b16 %v1180
    %v1253 = vunpack.c.l.b16 %v1181
    %v1254 = vunpack.c.h.b16 %v1181
    %v1255 = vunpack.c.l.b16 %v1182
    %v1256 = vunpack.c.h.b16 %v1182
    %v1257 = vunpack.c.l.b16 %v1183
    %v1258 = vunpack.c.h.b16 %v1183
    %v1259 = vunpack.c.l.b16 %v1184
    %v1260 = vunpack.c.h.b16 %v1184
    %v1261 = vunpack.c.l.b16 %v1185
    %v1262 = vunpack.c.h.b16 %v1185
    %v1263 = vunpack.c.l.b16 %v1186
    %v1264 = vunpack.c.h.b16 %v1186
    %v1265 = vunpack.c.l.b16 %v1187
    %v1266 = vunpack.c.h.b16 %v1187
    %v1267 = vunpack.c.l.b16 %v1188
    %v1268 = vunpack.c.h.b16 %v1188
    %v1269 = vunpack.c.l.b16 %v1189
    %v1270 = vunpack.c.h.b16 %v1189
    %v1271 = vunpack.c.l.b16 %v1190
    %v1272 = vunpack.c.h.b16 %v1190
    %v1273 = vunpack.c.l.b16 %v1191
    %v1274 = vunpack.c.h.b16 %v1191
    %v1275 = vunpack.c.l.b16 %v1192
    %v1276 = vunpack.c.h.b16 %v1192
    %v1277 = vunpack.c.l.b16 %v1193
    %v1278 = vunpack.c.h.b16 %v1193
    %v1279 = vunpack.c.l.b16 %v1194
    %v1280 = vunpack.c.h.b16 %v1194
    %v1281 = vunpack.c.l.b16 %v1195
    %v1282 = vunpack.c.h.b16 %v1195
    %v1283 = vunpack.c.l.b16 %v1196
    %v1284 = vunpack.c.h.b16 %v1196
    %v1285 = vunpack.c.l.b16 %v1197
    %v1286 = vunpack.c.h.b16 %v1197
    %v1287 = vunpack.c.l.b16 %v1198
    %v1288 = vunpack.c.h.b16 %v1198
    %v1289 = vunpack.c.l.b16 %v1199
    %v1290 = vunpack.c.h.b16 %v1199
    %v1291 = vunpack.c.l.b16 %v1200
    %v1292 = vunpack.c.h.b16 %v1200
    %v1293 = vunpack.c.l.b16 %v1201
    %v1294 = vunpack.c.h.b16 %v1201
    %v1295 = vunpack.c.l.b16 %v1202
    %v1296 = vunpack.c.h.b16 %v1202
    %v1297 = vunpack.c.l.b16 %v1203
    %v1298 = vunpack.c.h.b16 %v1203
    %v1299 = vunpack.c.l.b16 %v1204
    %v1300 = vunpack.c.h.b16 %v1204
    %v1301 = vpack.c.b16 %v1241, %v1237
    %v1302 = vpack.c.b16 %v1242, %v1238
    %v1303 = vpack.c.b16 %v1243, %v1239
    %v1304 = vpack.c.b16 %v1244, %v1240
    %v1305 = vpack.c.b16 %v1249, %v1245
    %v1306 = vpack.c.b16 %v1250, %v1246
    %v1307 = vpack.c.b16 %v1251, %v1247
    %v1308 = vpack.c.b16 %v1252, %v1248
    %v1309 = vpack.c.b16 %v1257, %v1253
    %v1310 = vpack.c.b16 %v1258, %v1254
    %v1311 = vpack.c.b16 %v1259, %v1255
    %v1312 = vpack.c.b16 %v1260, %v1256
    %v1313 = vpack.c.b16 %v1265, %v1261
    %v1314 = vpack.c.b16 %v1266, %v1262
    %v1315 = vpack.c.b16 %v1267, %v1263
    %v1316 = vpack.c.b16 %v1268, %v1264
    %v1317 = vpack.c.b16 %v1273, %v1269
    %v1318 = vpack.c.b16 %v1274, %v1270
    %v1319 = vpack.c.b16 %v1275, %v1271
    %v1320 = vpack.c.b16 %v1276, %v1272
    %v1321 = vpack.c.b16 %v1281, %v1277
    %v1322 = vpack.c.b16 %v1282, %v1278
    %v1323 = vpack.c.b16 %v1283, %v1279
    %v1324 = vpack.c.b16 %v1284, %v1280
    %v1325 = vpack.c.b16 %v1289, %v1285
    %v1326 = vpack.c.b16 %v1290, %v1286
    %v1327 = vpack.c.b16 %v1291, %v1287
    %v1328 = vpack.c.b16 %v1292, %v1288
    %v1329 = vpack.c.b16 %v1297, %v1293
    %v1330 = vpack.c.b16 %v1298, %v1294
    %v1331 = vpack.c.b16 %v1299, %v1295
    %v1332 = vpack.c.b16 %v1300, %v1296
    %1365 = vmatprep.subr.bf16.mxu0 %v1302
    %1366 = vmatpush1.bf16.msra.mxu0 %v1301
    %1367 = vmatprep.subr.bf16.mxu0 %v1306
    %1368 = vmatpush1.bf16.msra.mxu0 %v1305
    %1369 = vmatprep.subr.bf16.mxu0 %v1310
    %1370 = vmatpush1.bf16.msra.mxu0 %v1309
    %1371 = vmatprep.subr.bf16.mxu0 %v1314
    %1372 = vmatpush1.bf16.msra.mxu0 %v1313
    %1373 = vmatprep.subr.bf16.mxu0 %v1318
    %1374 = vmatpush1.bf16.msra.mxu0 %v1317
    %1375 = vmatprep.subr.bf16.mxu0 %v1322
    %1376 = vmatpush1.bf16.msra.mxu0 %v1321
    %1377 = vmatprep.subr.bf16.mxu0 %v1326
    %1378 = vmatpush1.bf16.msra.mxu0 %v1325
    %1379 = vmatprep.subr.bf16.mxu0 %v1330
    %1380 = vmatpush1.bf16.msra.mxu0 %v1329
    %1381 = vmatprep.subr.bf16.mxu0 0
    %1382 = vmatpush1.bf16.msra.mxu0 0
    %1383 = vmatprep.subr.bf16.mxu0 0
    %1384 = vmatpush1.bf16.msra.mxu0 0
    %1385 = vmatprep.subr.bf16.mxu0 0
    %1386 = vmatpush1.bf16.msra.mxu0 0
    %1387 = vmatprep.subr.bf16.mxu0 0
    %1388 = vmatpush1.bf16.msra.mxu0 0
    %1389 = vmatprep.subr.bf16.mxu0 0
    %1390 = vmatpush1.bf16.msra.mxu0 0
    %1391 = vmatprep.subr.bf16.mxu0 0
    %1392 = vmatpush1.bf16.msra.mxu0 0
    %1393 = vmatprep.subr.bf16.mxu0 0
    %1394 = vmatpush1.bf16.msra.mxu0 0
    %1395 = vmatprep.subr.bf16.mxu0 0
    %1396 = vmatpush1.bf16.msra.mxu0 0
    %1397 = vmatprep.mubr.bf16.mxu0 0
    %1398 = vmatmul.mubr.bf16.gmra.mrb[0].mxu0 %v1172
    %v1399 = vpop.f32.mrb[0].mxu0
    %v1400 = vadd.f32 0.0, %v1399
    %v1401 = vpop.f32.mrb[0].mxu0
    %v1402 = vadd.f32 0.0, %v1401
    %v1403 = vpop.f32.mrb[0].mxu0
    %v1404 = vpop.f32.mrb[0].mxu0
    %1405 = vdwg.mxu0
    %1406 = vmatprep.subr.bf16.mxu0 %v1304
    %1407 = vmatpush1.bf16.msra.mxu0 %v1303
    %1408 = vmatprep.subr.bf16.mxu0 %v1308
    %1409 = vmatpush1.bf16.msra.mxu0 %v1307
    %1410 = vmatprep.subr.bf16.mxu0 %v1312
    %1411 = vmatpush1.bf16.msra.mxu0 %v1311
    %1412 = vmatprep.subr.bf16.mxu0 %v1316
    %1413 = vmatpush1.bf16.msra.mxu0 %v1315
    %1414 = vmatprep.subr.bf16.mxu0 %v1320
    %1415 = vmatpush1.bf16.msra.mxu0 %v1319
    %1416 = vmatprep.subr.bf16.mxu0 %v1324
    %1417 = vmatpush1.bf16.msra.mxu0 %v1323
    %1418 = vmatprep.subr.bf16.mxu0 %v1328
    %1419 = vmatpush1.bf16.msra.mxu0 %v1327
    %1420 = vmatprep.subr.bf16.mxu0 %v1332
    %1421 = vmatpush1.bf16.msra.mxu0 %v1331
    %1422 = vmatprep.subr.bf16.mxu0 0
    %1423 = vmatpush1.bf16.msra.mxu0 0
    %1424 = vmatprep.subr.bf16.mxu0 0
    %1425 = vmatpush1.bf16.msra.mxu0 0
    %1426 = vmatprep.subr.bf16.mxu0 0
    %1427 = vmatpush1.bf16.msra.mxu0 0
    %1428 = vmatprep.subr.bf16.mxu0 0
    %1429 = vmatpush1.bf16.msra.mxu0 0
    %1430 = vmatprep.subr.bf16.mxu0 0
    %1431 = vmatpush1.bf16.msra.mxu0 0
    %1432 = vmatprep.subr.bf16.mxu0 0
    %1433 = vmatpush1.bf16.msra.mxu0 0
    %1434 = vmatprep.subr.bf16.mxu0 0
    %1435 = vmatpush1.bf16.msra.mxu0 0
    %1436 = vmatprep.subr.bf16.mxu0 0
    %1437 = vmatpush1.bf16.msra.mxu0 0
    %1438 = vmatprep.mubr.bf16.mxu0 0
    %1439 = vmatmul.mubr.bf16.gmra.mrb[0].mxu0 %v1172
    %v1440 = vpop.f32.mrb[0].mxu0
    %v1441 = vadd.f32 0.0, %v1440
    %v1442 = vpop.f32.mrb[0].mxu0
    %v1443 = vadd.f32 0.0, %v1442
    %v1444 = vpop.f32.mrb[0].mxu0
    %v1445 = vpop.f32.mrb[0].mxu0
    %1446 = vdwg.mxu0
    %v1447 = vadd.f32 %v1168, %v1400
    %v1448 = vadd.f32 %v1169, %v1402
    %v1449 = vadd.f32 %v1170, %v1441
    %v1450 = vadd.f32 %v1171, %v1443
    %v1451 = vxor.u32 %v1447, 2147483648
    %v1452 = vmul.f32 %v1451, 1.442695
    %v1453 = vpow.pop %v1452
    %v1454 = vadd.f32 %v1453, 1.0
    %v1455 = vrcp.pop %v1454
    %v1456 = vmul.f32 1.0, %v1455
    %v1457 = vxor.u32 %v1448, 2147483648
    %v1458 = vmul.f32 %v1457, 1.442695
    %v1459 = vpow.pop %v1458
    %v1460 = vadd.f32 %v1459, 1.0
    %v1461 = vrcp.pop %v1460
    %v1462 = vmul.f32 1.0, %v1461
    %v1463 = vtanh.pop %v1449
    %v1464 = vxor.u32 %v1450, 2147483648
    %v1465 = vmul.f32 %v1464, 1.442695
    %v1466 = vpow.pop %v1465
    %v1467 = vadd.f32 %v1466, 1.0
    %v1468 = vrcp.pop %v1467
    %v1469 = vmul.f32 1.0, %v1468
    %v1470 = vmul.f32 %v1462, %v1160
    %v1471 = vmul.f32 %v1456, %v1463
    %v1472 = vadd.f32 %v1470, %v1471
    %v1473 = vtanh.pop %v1472
    %v1474 = vmul.f32 %v1469, %v1473
    %s1475 = scalar_lea.vmem [#allocation14], 16
    %1476 = vst [vmem:[%s1475] sm:$0xff] %v1474
    %s1477 = smul.u32 3, 4
    %s1478 = smul.addr %s1477, 8
    %s1479 = scalar_lea.vmem [#allocation2], %s1478
    %v1480 = vld [vmem:[%s1479] sm:$0xff]
    %v1481 = vld [vmem:[%s1479 + $0x8] sm:$0xff]
    %v1482 = vld [vmem:[%s1479 + $0x10] sm:$0xff]
    %v1483 = vld [vmem:[%s1479 + $0x18] sm:$0xff]
    %v1484 = vpack.c.bf16 %v1474, %v1474
    %v1485 = vld [vmem:[#allocation8] sm:$0xff]
    %v1486 = vld [vmem:[#allocation8 + $0x8] sm:$0xff]
    %v1487 = vld [vmem:[#allocation8 + $0x10] sm:$0xff]
    %v1488 = vld [vmem:[#allocation8 + $0x18] sm:$0xff]
    %v1489 = vld [vmem:[#allocation8 + $0x20] sm:$0xff]
    %v1490 = vld [vmem:[#allocation8 + $0x28] sm:$0xff]
    %v1491 = vld [vmem:[#allocation8 + $0x30] sm:$0xff]
    %v1492 = vld [vmem:[#allocation8 + $0x38] sm:$0xff]
    %v1493 = vld [vmem:[#allocation8 + $0x40] sm:$0xff]
    %v1494 = vld [vmem:[#allocation8 + $0x48] sm:$0xff]
    %v1495 = vld [vmem:[#allocation8 + $0x50] sm:$0xff]
    %v1496 = vld [vmem:[#allocation8 + $0x58] sm:$0xff]
    %v1497 = vld [vmem:[#allocation8 + $0x60] sm:$0xff]
    %v1498 = vld [vmem:[#allocation8 + $0x68] sm:$0xff]
    %v1499 = vld [vmem:[#allocation8 + $0x70] sm:$0xff]
    %v1500 = vld [vmem:[#allocation8 + $0x78] sm:$0xff]
    %v1501 = vld [vmem:[#allocation8 + $0x80] sm:$0xff]
    %v1502 = vld [vmem:[#allocation8 + $0x88] sm:$0xff]
    %v1503 = vld [vmem:[#allocation8 + $0x90] sm:$0xff]
    %v1504 = vld [vmem:[#allocation8 + $0x98] sm:$0xff]
    %v1505 = vld [vmem:[#allocation8 + $0xa0] sm:$0xff]
    %v1506 = vld [vmem:[#allocation8 + $0xa8] sm:$0xff]
    %v1507 = vld [vmem:[#allocation8 + $0xb0] sm:$0xff]
    %v1508 = vld [vmem:[#allocation8 + $0xb8] sm:$0xff]
    %v1509 = vld [vmem:[#allocation8 + $0xc0] sm:$0xff]
    %v1510 = vld [vmem:[#allocation8 + $0xc8] sm:$0xff]
    %v1511 = vld [vmem:[#allocation8 + $0xd0] sm:$0xff]
    %v1512 = vld [vmem:[#allocation8 + $0xd8] sm:$0xff]
    %v1513 = vld [vmem:[#allocation8 + $0xe0] sm:$0xff]
    %v1514 = vld [vmem:[#allocation8 + $0xe8] sm:$0xff]
    %v1515 = vld [vmem:[#allocation8 + $0xf0] sm:$0xff]
    %v1516 = vld [vmem:[#allocation8 + $0xf8] sm:$0xff]
    %v1549 = vunpack.c.l.b16 %v1485
    %v1550 = vunpack.c.h.b16 %v1485
    %v1551 = vunpack.c.l.b16 %v1486
    %v1552 = vunpack.c.h.b16 %v1486
    %v1553 = vunpack.c.l.b16 %v1487
    %v1554 = vunpack.c.h.b16 %v1487
    %v1555 = vunpack.c.l.b16 %v1488
    %v1556 = vunpack.c.h.b16 %v1488
    %v1557 = vunpack.c.l.b16 %v1489
    %v1558 = vunpack.c.h.b16 %v1489
    %v1559 = vunpack.c.l.b16 %v1490
    %v1560 = vunpack.c.h.b16 %v1490
    %v1561 = vunpack.c.l.b16 %v1491
    %v1562 = vunpack.c.h.b16 %v1491
    %v1563 = vunpack.c.l.b16 %v1492
    %v1564 = vunpack.c.h.b16 %v1492
    %v1565 = vunpack.c.l.b16 %v1493
    %v1566 = vunpack.c.h.b16 %v1493
    %v1567 = vunpack.c.l.b16 %v1494
    %v1568 = vunpack.c.h.b16 %v1494
    %v1569 = vunpack.c.l.b16 %v1495
    %v1570 = vunpack.c.h.b16 %v1495
    %v1571 = vunpack.c.l.b16 %v1496
    %v1572 = vunpack.c.h.b16 %v1496
    %v1573 = vunpack.c.l.b16 %v1497
    %v1574 = vunpack.c.h.b16 %v1497
    %v1575 = vunpack.c.l.b16 %v1498
    %v1576 = vunpack.c.h.b16 %v1498
    %v1577 = vunpack.c.l.b16 %v1499
    %v1578 = vunpack.c.h.b16 %v1499
    %v1579 = vunpack.c.l.b16 %v1500
    %v1580 = vunpack.c.h.b16 %v1500
    %v1581 = vunpack.c.l.b16 %v1501
    %v1582 = vunpack.c.h.b16 %v1501
    %v1583 = vunpack.c.l.b16 %v1502
    %v1584 = vunpack.c.h.b16 %v1502
    %v1585 = vunpack.c.l.b16 %v1503
    %v1586 = vunpack.c.h.b16 %v1503
    %v1587 = vunpack.c.l.b16 %v1504
    %v1588 = vunpack.c.h.b16 %v1504
    %v1589 = vunpack.c.l.b16 %v1505
    %v1590 = vunpack.c.h.b16 %v1505
    %v1591 = vunpack.c.l.b16 %v1506
    %v1592 = vunpack.c.h.b16 %v1506
    %v1593 = vunpack.c.l.b16 %v1507
    %v1594 = vunpack.c.h.b16 %v1507
    %v1595 = vunpack.c.l.b16 %v1508
    %v1596 = vunpack.c.h.b16 %v1508
    %v1597 = vunpack.c.l.b16 %v1509
    %v1598 = vunpack.c.h.b16 %v1509
    %v1599 = vunpack.c.l.b16 %v1510
    %v1600 = vunpack.c.h.b16 %v1510
    %v1601 = vunpack.c.l.b16 %v1511
    %v1602 = vunpack.c.h.b16 %v1511
    %v1603 = vunpack.c.l.b16 %v1512
    %v1604 = vunpack.c.h.b16 %v1512
    %v1605 = vunpack.c.l.b16 %v1513
    %v1606 = vunpack.c.h.b16 %v1513
    %v1607 = vunpack.c.l.b16 %v1514
    %v1608 = vunpack.c.h.b16 %v1514
    %v1609 = vunpack.c.l.b16 %v1515
    %v1610 = vunpack.c.h.b16 %v1515
    %v1611 = vunpack.c.l.b16 %v1516
    %v1612 = vunpack.c.h.b16 %v1516
    %v1613 = vpack.c.b16 %v1553, %v1549
    %v1614 = vpack.c.b16 %v1554, %v1550
    %v1615 = vpack.c.b16 %v1555, %v1551
    %v1616 = vpack.c.b16 %v1556, %v1552
    %v1617 = vpack.c.b16 %v1561, %v1557
    %v1618 = vpack.c.b16 %v1562, %v1558
    %v1619 = vpack.c.b16 %v1563, %v1559
    %v1620 = vpack.c.b16 %v1564, %v1560
    %v1621 = vpack.c.b16 %v1569, %v1565
    %v1622 = vpack.c.b16 %v1570, %v1566
    %v1623 = vpack.c.b16 %v1571, %v1567
    %v1624 = vpack.c.b16 %v1572, %v1568
    %v1625 = vpack.c.b16 %v1577, %v1573
    %v1626 = vpack.c.b16 %v1578, %v1574
    %v1627 = vpack.c.b16 %v1579, %v1575
    %v1628 = vpack.c.b16 %v1580, %v1576
    %v1629 = vpack.c.b16 %v1585, %v1581
    %v1630 = vpack.c.b16 %v1586, %v1582
    %v1631 = vpack.c.b16 %v1587, %v1583
    %v1632 = vpack.c.b16 %v1588, %v1584
    %v1633 = vpack.c.b16 %v1593, %v1589
    %v1634 = vpack.c.b16 %v1594, %v1590
    %v1635 = vpack.c.b16 %v1595, %v1591
    %v1636 = vpack.c.b16 %v1596, %v1592
    %v1637 = vpack.c.b16 %v1601, %v1597
    %v1638 = vpack.c.b16 %v1602, %v1598
    %v1639 = vpack.c.b16 %v1603, %v1599
    %v1640 = vpack.c.b16 %v1604, %v1600
    %v1641 = vpack.c.b16 %v1609, %v1605
    %v1642 = vpack.c.b16 %v1610, %v1606
    %v1643 = vpack.c.b16 %v1611, %v1607
    %v1644 = vpack.c.b16 %v1612, %v1608
    %1677 = vmatprep.subr.bf16.mxu0 %v1614
    %1678 = vmatpush1.bf16.msra.mxu0 %v1613
    %1679 = vmatprep.subr.bf16.mxu0 %v1618
    %1680 = vmatpush1.bf16.msra.mxu0 %v1617
    %1681 = vmatprep.subr.bf16.mxu0 %v1622
    %1682 = vmatpush1.bf16.msra.mxu0 %v1621
    %1683 = vmatprep.subr.bf16.mxu0 %v1626
    %1684 = vmatpush1.bf16.msra.mxu0 %v1625
    %1685 = vmatprep.subr.bf16.mxu0 %v1630
    %1686 = vmatpush1.bf16.msra.mxu0 %v1629
    %1687 = vmatprep.subr.bf16.mxu0 %v1634
    %1688 = vmatpush1.bf16.msra.mxu0 %v1633
    %1689 = vmatprep.subr.bf16.mxu0 %v1638
    %1690 = vmatpush1.bf16.msra.mxu0 %v1637
    %1691 = vmatprep.subr.bf16.mxu0 %v1642
    %1692 = vmatpush1.bf16.msra.mxu0 %v1641
    %1693 = vmatprep.subr.bf16.mxu0 0
    %1694 = vmatpush1.bf16.msra.mxu0 0
    %1695 = vmatprep.subr.bf16.mxu0 0
    %1696 = vmatpush1.bf16.msra.mxu0 0
    %1697 = vmatprep.subr.bf16.mxu0 0
    %1698 = vmatpush1.bf16.msra.mxu0 0
    %1699 = vmatprep.subr.bf16.mxu0 0
    %1700 = vmatpush1.bf16.msra.mxu0 0
    %1701 = vmatprep.subr.bf16.mxu0 0
    %1702 = vmatpush1.bf16.msra.mxu0 0
    %1703 = vmatprep.subr.bf16.mxu0 0
    %1704 = vmatpush1.bf16.msra.mxu0 0
    %1705 = vmatprep.subr.bf16.mxu0 0
    %1706 = vmatpush1.bf16.msra.mxu0 0
    %1707 = vmatprep.subr.bf16.mxu0 0
    %1708 = vmatpush1.bf16.msra.mxu0 0
    %1709 = vmatprep.mubr.bf16.mxu0 0
    %1710 = vmatmul.mubr.bf16.gmra.mrb[0].mxu0 %v1484
    %v1711 = vpop.f32.mrb[0].mxu0
    %v1712 = vadd.f32 0.0, %v1711
    %v1713 = vpop.f32.mrb[0].mxu0
    %v1714 = vadd.f32 0.0, %v1713
    %v1715 = vpop.f32.mrb[0].mxu0
    %v1716 = vpop.f32.mrb[0].mxu0
    %1717 = vdwg.mxu0
    %1718 = vmatprep.subr.bf16.mxu0 %v1616
    %1719 = vmatpush1.bf16.msra.mxu0 %v1615
    %1720 = vmatprep.subr.bf16.mxu0 %v1620
    %1721 = vmatpush1.bf16.msra.mxu0 %v1619
    %1722 = vmatprep.subr.bf16.mxu0 %v1624
    %1723 = vmatpush1.bf16.msra.mxu0 %v1623
    %1724 = vmatprep.subr.bf16.mxu0 %v1628
    %1725 = vmatpush1.bf16.msra.mxu0 %v1627
    %1726 = vmatprep.subr.bf16.mxu0 %v1632
    %1727 = vmatpush1.bf16.msra.mxu0 %v1631
    %1728 = vmatprep.subr.bf16.mxu0 %v1636
    %1729 = vmatpush1.bf16.msra.mxu0 %v1635
    %1730 = vmatprep.subr.bf16.mxu0 %v1640
    %1731 = vmatpush1.bf16.msra.mxu0 %v1639
    %1732 = vmatprep.subr.bf16.mxu0 %v1644
    %1733 = vmatpush1.bf16.msra.mxu0 %v1643
    %1734 = vmatprep.subr.bf16.mxu0 0
    %1735 = vmatpush1.bf16.msra.mxu0 0
    %1736 = vmatprep.subr.bf16.mxu0 0
    %1737 = vmatpush1.bf16.msra.mxu0 0
    %1738 = vmatprep.subr.bf16.mxu0 0
    %1739 = vmatpush1.bf16.msra.mxu0 0
    %1740 = vmatprep.subr.bf16.mxu0 0
    %1741 = vmatpush1.bf16.msra.mxu0 0
    %1742 = vmatprep.subr.bf16.mxu0 0
    %1743 = vmatpush1.bf16.msra.mxu0 0
    %1744 = vmatprep.subr.bf16.mxu0 0
    %1745 = vmatpush1.bf16.msra.mxu0 0
    %1746 = vmatprep.subr.bf16.mxu0 0
    %1747 = vmatpush1.bf16.msra.mxu0 0
    %1748 = vmatprep.subr.bf16.mxu0 0
    %1749 = vmatpush1.bf16.msra.mxu0 0
    %1750 = vmatprep.mubr.bf16.mxu0 0
    %1751 = vmatmul.mubr.bf16.gmra.mrb[0].mxu0 %v1484
    %v1752 = vpop.f32.mrb[0].mxu0
    %v1753 = vadd.f32 0.0, %v1752
    %v1754 = vpop.f32.mrb[0].mxu0
    %v1755 = vadd.f32 0.0, %v1754
    %v1756 = vpop.f32.mrb[0].mxu0
    %v1757 = vpop.f32.mrb[0].mxu0
    %1758 = vdwg.mxu0
    %v1759 = vadd.f32 %v1480, %v1712
    %v1760 = vadd.f32 %v1481, %v1714
    %v1761 = vadd.f32 %v1482, %v1753
    %v1762 = vadd.f32 %v1483, %v1755
    %v1763 = vxor.u32 %v1759, 2147483648
    %v1764 = vmul.f32 %v1763, 1.442695
    %v1765 = vpow.pop %v1764
    %v1766 = vadd.f32 %v1765, 1.0
    %v1767 = vrcp.pop %v1766
    %v1768 = vmul.f32 1.0, %v1767
    %v1769 = vxor.u32 %v1760, 2147483648
    %v1770 = vmul.f32 %v1769, 1.442695
    %v1771 = vpow.pop %v1770
    %v1772 = vadd.f32 %v1771, 1.0
    %v1773 = vrcp.pop %v1772
    %v1774 = vmul.f32 1.0, %v1773
    %v1775 = vtanh.pop %v1761
    %v1776 = vxor.u32 %v1762, 2147483648
    %v1777 = vmul.f32 %v1776, 1.442695
    %v1778 = vpow.pop %v1777
    %v1779 = vadd.f32 %v1778, 1.0
    %v1780 = vrcp.pop %v1779
    %v1781 = vmul.f32 1.0, %v1780
    %v1782 = vmul.f32 %v1774, %v1472
    %v1783 = vmul.f32 %v1768, %v1775
    %v1784 = vadd.f32 %v1782, %v1783
    %v1785 = vtanh.pop %v1784
    %v1786 = vmul.f32 %v1781, %v1785
    %s1787 = scalar_lea.vmem [#allocation14], 24
    %1788 = vst [vmem:[%s1787] sm:$0xff] %v1786
    %s1789 = smul.u32 4, 4
    %s1790 = smul.addr %s1789, 8
    %s1791 = scalar_lea.vmem [#allocation2], %s1790
    %v1792 = vld [vmem:[%s1791] sm:$0xff]
    %v1793 = vld [vmem:[%s1791 + $0x8] sm:$0xff]
    %v1794 = vld [vmem:[%s1791 + $0x10] sm:$0xff]
    %v1795 = vld [vmem:[%s1791 + $0x18] sm:$0xff]
    %v1796 = vpack.c.bf16 %v1786, %v1786
    %v1797 = vld [vmem:[#allocation8] sm:$0xff]
    %v1798 = vld [vmem:[#allocation8 + $0x8] sm:$0xff]
    %v1799 = vld [vmem:[#allocation8 + $0x10] sm:$0xff]
    %v1800 = vld [vmem:[#allocation8 + $0x18] sm:$0xff]
    %v1801 = vld [vmem:[#allocation8 + $0x20] sm:$0xff]
    %v1802 = vld [vmem:[#allocation8 + $0x28] sm:$0xff]
    %v1803 = vld [vmem:[#allocation8 + $0x30] sm:$0xff]
    %v1804 = vld [vmem:[#allocation8 + $0x38] sm:$0xff]
    %v1805 = vld [vmem:[#allocation8 + $0x40] sm:$0xff]
    %v1806 = vld [vmem:[#allocation8 + $0x48] sm:$0xff]
    %v1807 = vld [vmem:[#allocation8 + $0x50] sm:$0xff]
    %v1808 = vld [vmem:[#allocation8 + $0x58] sm:$0xff]
    %v1809 = vld [vmem:[#allocation8 + $0x60] sm:$0xff]
    %v1810 = vld [vmem:[#allocation8 + $0x68] sm:$0xff]
    %v1811 = vld [vmem:[#allocation8 + $0x70] sm:$0xff]
    %v1812 = vld [vmem:[#allocation8 + $0x78] sm:$0xff]
    %v1813 = vld [vmem:[#allocation8 + $0x80] sm:$0xff]
    %v1814 = vld [vmem:[#allocation8 + $0x88] sm:$0xff]
    %v1815 = vld [vmem:[#allocation8 + $0x90] sm:$0xff]
    %v1816 = vld [vmem:[#allocation8 + $0x98] sm:$0xff]
    %v1817 = vld [vmem:[#allocation8 + $0xa0] sm:$0xff]
    %v1818 = vld [vmem:[#allocation8 + $0xa8] sm:$0xff]
    %v1819 = vld [vmem:[#allocation8 + $0xb0] sm:$0xff]
    %v1820 = vld [vmem:[#allocation8 + $0xb8] sm:$0xff]
    %v1821 = vld [vmem:[#allocation8 + $0xc0] sm:$0xff]
    %v1822 = vld [vmem:[#allocation8 + $0xc8] sm:$0xff]
    %v1823 = vld [vmem:[#allocation8 + $0xd0] sm:$0xff]
    %v1824 = vld [vmem:[#allocation8 + $0xd8] sm:$0xff]
    %v1825 = vld [vmem:[#allocation8 + $0xe0] sm:$0xff]
    %v1826 = vld [vmem:[#allocation8 + $0xe8] sm:$0xff]
    %v1827 = vld [vmem:[#allocation8 + $0xf0] sm:$0xff]
    %v1828 = vld [vmem:[#allocation8 + $0xf8] sm:$0xff]
    %v1861 = vunpack.c.l.b16 %v1797
    %v1862 = vunpack.c.h.b16 %v1797
    %v1863 = vunpack.c.l.b16 %v1798
    %v1864 = vunpack.c.h.b16 %v1798
    %v1865 = vunpack.c.l.b16 %v1799
    %v1866 = vunpack.c.h.b16 %v1799
    %v1867 = vunpack.c.l.b16 %v1800
    %v1868 = vunpack.c.h.b16 %v1800
    %v1869 = vunpack.c.l.b16 %v1801
    %v1870 = vunpack.c.h.b16 %v1801
    %v1871 = vunpack.c.l.b16 %v1802
    %v1872 = vunpack.c.h.b16 %v1802
    %v1873 = vunpack.c.l.b16 %v1803
    %v1874 = vunpack.c.h.b16 %v1803
    %v1875 = vunpack.c.l.b16 %v1804
    %v1876 = vunpack.c.h.b16 %v1804
    %v1877 = vunpack.c.l.b16 %v1805
    %v1878 = vunpack.c.h.b16 %v1805
    %v1879 = vunpack.c.l.b16 %v1806
    %v1880 = vunpack.c.h.b16 %v1806
    %v1881 = vunpack.c.l.b16 %v1807
    %v1882 = vunpack.c.h.b16 %v1807
    %v1883 = vunpack.c.l.b16 %v1808
    %v1884 = vunpack.c.h.b16 %v1808
    %v1885 = vunpack.c.l.b16 %v1809
    %v1886 = vunpack.c.h.b16 %v1809
    %v1887 = vunpack.c.l.b16 %v1810
    %v1888 = vunpack.c.h.b16 %v1810
    %v1889 = vunpack.c.l.b16 %v1811
    %v1890 = vunpack.c.h.b16 %v1811
    %v1891 = vunpack.c.l.b16 %v1812
    %v1892 = vunpack.c.h.b16 %v1812
    %v1893 = vunpack.c.l.b16 %v1813
    %v1894 = vunpack.c.h.b16 %v1813
    %v1895 = vunpack.c.l.b16 %v1814
    %v1896 = vunpack.c.h.b16 %v1814
    %v1897 = vunpack.c.l.b16 %v1815
    %v1898 = vunpack.c.h.b16 %v1815
    %v1899 = vunpack.c.l.b16 %v1816
    %v1900 = vunpack.c.h.b16 %v1816
    %v1901 = vunpack.c.l.b16 %v1817
    %v1902 = vunpack.c.h.b16 %v1817
    %v1903 = vunpack.c.l.b16 %v1818
    %v1904 = vunpack.c.h.b16 %v1818
    %v1905 = vunpack.c.l.b16 %v1819
    %v1906 = vunpack.c.h.b16 %v1819
    %v1907 = vunpack.c.l.b16 %v1820
    %v1908 = vunpack.c.h.b16 %v1820
    %v1909 = vunpack.c.l.b16 %v1821
    %v1910 = vunpack.c.h.b16 %v1821
    %v1911 = vunpack.c.l.b16 %v1822
    %v1912 = vunpack.c.h.b16 %v1822
    %v1913 = vunpack.c.l.b16 %v1823
    %v1914 = vunpack.c.h.b16 %v1823
    %v1915 = vunpack.c.l.b16 %v1824
    %v1916 = vunpack.c.h.b16 %v1824
    %v1917 = vunpack.c.l.b16 %v1825
    %v1918 = vunpack.c.h.b16 %v1825
    %v1919 = vunpack.c.l.b16 %v1826
    %v1920 = vunpack.c.h.b16 %v1826
    %v1921 = vunpack.c.l.b16 %v1827
    %v1922 = vunpack.c.h.b16 %v1827
    %v1923 = vunpack.c.l.b16 %v1828
    %v1924 = vunpack.c.h.b16 %v1828
    %v1925 = vpack.c.b16 %v1865, %v1861
    %v1926 = vpack.c.b16 %v1866, %v1862
    %v1927 = vpack.c.b16 %v1867, %v1863
    %v1928 = vpack.c.b16 %v1868, %v1864
    %v1929 = vpack.c.b16 %v1873, %v1869
    %v1930 = vpack.c.b16 %v1874, %v1870
    %v1931 = vpack.c.b16 %v1875, %v1871
    %v1932 = vpack.c.b16 %v1876, %v1872
    %v1933 = vpack.c.b16 %v1881, %v1877
    %v1934 = vpack.c.b16 %v1882, %v1878
    %v1935 = vpack.c.b16 %v1883, %v1879
    %v1936 = vpack.c.b16 %v1884, %v1880
    %v1937 = vpack.c.b16 %v1889, %v1885
    %v1938 = vpack.c.b16 %v1890, %v1886
    %v1939 = vpack.c.b16 %v1891, %v1887
    %v1940 = vpack.c.b16 %v1892, %v1888
    %v1941 = vpack.c.b16 %v1897, %v1893
    %v1942 = vpack.c.b16 %v1898, %v1894
    %v1943 = vpack.c.b16 %v1899, %v1895
    %v1944 = vpack.c.b16 %v1900, %v1896
    %v1945 = vpack.c.b16 %v1905, %v1901
    %v1946 = vpack.c.b16 %v1906, %v1902
    %v1947 = vpack.c.b16 %v1907, %v1903
    %v1948 = vpack.c.b16 %v1908, %v1904
    %v1949 = vpack.c.b16 %v1913, %v1909
    %v1950 = vpack.c.b16 %v1914, %v1910
    %v1951 = vpack.c.b16 %v1915, %v1911
    %v1952 = vpack.c.b16 %v1916, %v1912
    %v1953 = vpack.c.b16 %v1921, %v1917
    %v1954 = vpack.c.b16 %v1922, %v1918
    %v1955 = vpack.c.b16 %v1923, %v1919
    %v1956 = vpack.c.b16 %v1924, %v1920
    %1989 = vmatprep.subr.bf16.mxu0 %v1926
    %1990 = vmatpush1.bf16.msra.mxu0 %v1925
    %1991 = vmatprep.subr.bf16.mxu0 %v1930
    %1992 = vmatpush1.bf16.msra.mxu0 %v1929
    %1993 = vmatprep.subr.bf16.mxu0 %v1934
    %1994 = vmatpush1.bf16.msra.mxu0 %v1933
    %1995 = vmatprep.subr.bf16.mxu0 %v1938
    %1996 = vmatpush1.bf16.msra.mxu0 %v1937
    %1997 = vmatprep.subr.bf16.mxu0 %v1942
    %1998 = vmatpush1.bf16.msra.mxu0 %v1941
    %1999 = vmatprep.subr.bf16.mxu0 %v1946
    %2000 = vmatpush1.bf16.msra.mxu0 %v1945
    %2001 = vmatprep.subr.bf16.mxu0 %v1950
    %2002 = vmatpush1.bf16.msra.mxu0 %v1949
    %2003 = vmatprep.subr.bf16.mxu0 %v1954
    %2004 = vmatpush1.bf16.msra.mxu0 %v1953
    %2005 = vmatprep.subr.bf16.mxu0 0
    %2006 = vmatpush1.bf16.msra.mxu0 0
    %2007 = vmatprep.subr.bf16.mxu0 0
    %2008 = vmatpush1.bf16.msra.mxu0 0
    %2009 = vmatprep.subr.bf16.mxu0 0
    %2010 = vmatpush1.bf16.msra.mxu0 0
    %2011 = vmatprep.subr.bf16.mxu0 0
    %2012 = vmatpush1.bf16.msra.mxu0 0
    %2013 = vmatprep.subr.bf16.mxu0 0
    %2014 = vmatpush1.bf16.msra.mxu0 0
    %2015 = vmatprep.subr.bf16.mxu0 0
    %2016 = vmatpush1.bf16.msra.mxu0 0
    %2017 = vmatprep.subr.bf16.mxu0 0
    %2018 = vmatpush1.bf16.msra.mxu0 0
    %2019 = vmatprep.subr.bf16.mxu0 0
    %2020 = vmatpush1.bf16.msra.mxu0 0
    %2021 = vmatprep.mubr.bf16.mxu0 0
    %2022 = vmatmul.mubr.bf16.gmra.mrb[0].mxu0 %v1796
    %v2023 = vpop.f32.mrb[0].mxu0
    %v2024 = vadd.f32 0.0, %v2023
    %v2025 = vpop.f32.mrb[0].mxu0
    %v2026 = vadd.f32 0.0, %v2025
    %v2027 = vpop.f32.mrb[0].mxu0
    %v2028 = vpop.f32.mrb[0].mxu0
    %2029 = vdwg.mxu0
    %2030 = vmatprep.subr.bf16.mxu0 %v1928
    %2031 = vmatpush1.bf16.msra.mxu0 %v1927
    %2032 = vmatprep.subr.bf16.mxu0 %v1932
    %2033 = vmatpush1.bf16.msra.mxu0 %v1931
    %2034 = vmatprep.subr.bf16.mxu0 %v1936
    %2035 = vmatpush1.bf16.msra.mxu0 %v1935
    %2036 = vmatprep.subr.bf16.mxu0 %v1940
    %2037 = vmatpush1.bf16.msra.mxu0 %v1939
    %2038 = vmatprep.subr.bf16.mxu0 %v1944
    %2039 = vmatpush1.bf16.msra.mxu0 %v1943
    %2040 = vmatprep.subr.bf16.mxu0 %v1948
    %2041 = vmatpush1.bf16.msra.mxu0 %v1947
    %2042 = vmatprep.subr.bf16.mxu0 %v1952
    %2043 = vmatpush1.bf16.msra.mxu0 %v1951
    %2044 = vmatprep.subr.bf16.mxu0 %v1956
    %2045 = vmatpush1.bf16.msra.mxu0 %v1955
    %2046 = vmatprep.subr.bf16.mxu0 0
    %2047 = vmatpush1.bf16.msra.mxu0 0
    %2048 = vmatprep.subr.bf16.mxu0 0
    %2049 = vmatpush1.bf16.msra.mxu0 0
    %2050 = vmatprep.subr.bf16.mxu0 0
    %2051 = vmatpush1.bf16.msra.mxu0 0
    %2052 = vmatprep.subr.bf16.mxu0 0
    %2053 = vmatpush1.bf16.msra.mxu0 0
    %2054 = vmatprep.subr.bf16.mxu0 0
    %2055 = vmatpush1.bf16.msra.mxu0 0
    %2056 = vmatprep.subr.bf16.mxu0 0
    %2057 = vmatpush1.bf16.msra.mxu0 0
    %2058 = vmatprep.subr.bf16.mxu0 0
    %2059 = vmatpush1.bf16.msra.mxu0 0
    %2060 = vmatprep.subr.bf16.mxu0 0
    %2061 = vmatpush1.bf16.msra.mxu0 0
    %2062 = vmatprep.mubr.bf16.mxu0 0
    %2063 = vmatmul.mubr.bf16.gmra.mrb[0].mxu0 %v1796
    %v2064 = vpop.f32.mrb[0].mxu0
    %v2065 = vadd.f32 0.0, %v2064
    %v2066 = vpop.f32.mrb[0].mxu0
    %v2067 = vadd.f32 0.0, %v2066
    %v2068 = vpop.f32.mrb[0].mxu0
    %v2069 = vpop.f32.mrb[0].mxu0
    %2070 = vdwg.mxu0
    %v2071 = vadd.f32 %v1792, %v2024
    %v2072 = vadd.f32 %v1793, %v2026
    %v2073 = vadd.f32 %v1794, %v2065
    %v2074 = vadd.f32 %v1795, %v2067
    %v2075 = vxor.u32 %v2071, 2147483648
    %v2076 = vmul.f32 %v2075, 1.442695
    %v2077 = vpow.pop %v2076
    %v2078 = vadd.f32 %v2077, 1.0
    %v2079 = vrcp.pop %v2078
    %v2080 = vmul.f32 1.0, %v2079
    %v2081 = vxor.u32 %v2072, 2147483648
    %v2082 = vmul.f32 %v2081, 1.442695
    %v2083 = vpow.pop %v2082
    %v2084 = vadd.f32 %v2083, 1.0
    %v2085 = vrcp.pop %v2084
    %v2086 = vmul.f32 1.0, %v2085
    %v2087 = vtanh.pop %v2073
    %v2088 = vxor.u32 %v2074, 2147483648
    %v2089 = vmul.f32 %v2088, 1.442695
    %v2090 = vpow.pop %v2089
    %v2091 = vadd.f32 %v2090, 1.0
    %v2092 = vrcp.pop %v2091
    %v2093 = vmul.f32 1.0, %v2092
    %v2094 = vmul.f32 %v2086, %v1784
    %v2095 = vmul.f32 %v2080, %v2087
    %v2096 = vadd.f32 %v2094, %v2095
    %v2097 = vtanh.pop %v2096
    %v2098 = vmul.f32 %v2093, %v2097
    %s2099 = scalar_lea.vmem [#allocation14], 32
    %2100 = vst [vmem:[%s2099] sm:$0xff] %v2098
    %s2101 = smul.u32 5, 4
    %s2102 = smul.addr %s2101, 8
    %s2103 = scalar_lea.vmem [#allocation2], %s2102
    %v2104 = vld [vmem:[%s2103] sm:$0xff]
    %v2105 = vld [vmem:[%s2103 + $0x8] sm:$0xff]
    %v2106 = vld [vmem:[%s2103 + $0x10] sm:$0xff]
    %v2107 = vld [vmem:[%s2103 + $0x18] sm:$0xff]
    %v2108 = vpack.c.bf16 %v2098, %v2098
    %v2109 = vld [vmem:[#allocation8] sm:$0xff]
    %v2110 = vld [vmem:[#allocation8 + $0x8] sm:$0xff]
    %v2111 = vld [vmem:[#allocation8 + $0x10] sm:$0xff]
    %v2112 = vld [vmem:[#allocation8 + $0x18] sm:$0xff]
    %v2113 = vld [vmem:[#allocation8 + $0x20] sm:$0xff]
    %v2114 = vld [vmem:[#allocation8 + $0x28] sm:$0xff]
    %v2115 = vld [vmem:[#allocation8 + $0x30] sm:$0xff]
    %v2116 = vld [vmem:[#allocation8 + $0x38] sm:$0xff]
    %v2117 = vld [vmem:[#allocation8 + $0x40] sm:$0xff]
    %v2118 = vld [vmem:[#allocation8 + $0x48] sm:$0xff]
    %v2119 = vld [vmem:[#allocation8 + $0x50] sm:$0xff]
    %v2120 = vld [vmem:[#allocation8 + $0x58] sm:$0xff]
    %v2121 = vld [vmem:[#allocation8 + $0x60] sm:$0xff]
    %v2122 = vld [vmem:[#allocation8 + $0x68] sm:$0xff]
    %v2123 = vld [vmem:[#allocation8 + $0x70] sm:$0xff]
    %v2124 = vld [vmem:[#allocation8 + $0x78] sm:$0xff]
    %v2125 = vld [vmem:[#allocation8 + $0x80] sm:$0xff]
    %v2126 = vld [vmem:[#allocation8 + $0x88] sm:$0xff]
    %v2127 = vld [vmem:[#allocation8 + $0x90] sm:$0xff]
    %v2128 = vld [vmem:[#allocation8 + $0x98] sm:$0xff]
    %v2129 = vld [vmem:[#allocation8 + $0xa0] sm:$0xff]
    %v2130 = vld [vmem:[#allocation8 + $0xa8] sm:$0xff]
    %v2131 = vld [vmem:[#allocation8 + $0xb0] sm:$0xff]
    %v2132 = vld [vmem:[#allocation8 + $0xb8] sm:$0xff]
    %v2133 = vld [vmem:[#allocation8 + $0xc0] sm:$0xff]
    %v2134 = vld [vmem:[#allocation8 + $0xc8] sm:$0xff]
    %v2135 = vld [vmem:[#allocation8 + $0xd0] sm:$0xff]
    %v2136 = vld [vmem:[#allocation8 + $0xd8] sm:$0xff]
    %v2137 = vld [vmem:[#allocation8 + $0xe0] sm:$0xff]
    %v2138 = vld [vmem:[#allocation8 + $0xe8] sm:$0xff]
    %v2139 = vld [vmem:[#allocation8 + $0xf0] sm:$0xff]
    %v2140 = vld [vmem:[#allocation8 + $0xf8] sm:$0xff]
    %v2173 = vunpack.c.l.b16 %v2109
    %v2174 = vunpack.c.h.b16 %v2109
    %v2175 = vunpack.c.l.b16 %v2110
    %v2176 = vunpack.c.h.b16 %v2110
    %v2177 = vunpack.c.l.b16 %v2111
    %v2178 = vunpack.c.h.b16 %v2111
    %v2179 = vunpack.c.l.b16 %v2112
    %v2180 = vunpack.c.h.b16 %v2112
    %v2181 = vunpack.c.l.b16 %v2113
    %v2182 = vunpack.c.h.b16 %v2113
    %v2183 = vunpack.c.l.b16 %v2114
    %v2184 = vunpack.c.h.b16 %v2114
    %v2185 = vunpack.c.l.b16 %v2115
    %v2186 = vunpack.c.h.b16 %v2115
    %v2187 = vunpack.c.l.b16 %v2116
    %v2188 = vunpack.c.h.b16 %v2116
    %v2189 = vunpack.c.l.b16 %v2117
    %v2190 = vunpack.c.h.b16 %v2117
    %v2191 = vunpack.c.l.b16 %v2118
    %v2192 = vunpack.c.h.b16 %v2118
    %v2193 = vunpack.c.l.b16 %v2119
    %v2194 = vunpack.c.h.b16 %v2119
    %v2195 = vunpack.c.l.b16 %v2120
    %v2196 = vunpack.c.h.b16 %v2120
    %v2197 = vunpack.c.l.b16 %v2121
    %v2198 = vunpack.c.h.b16 %v2121
    %v2199 = vunpack.c.l.b16 %v2122
    %v2200 = vunpack.c.h.b16 %v2122
    %v2201 = vunpack.c.l.b16 %v2123
    %v2202 = vunpack.c.h.b16 %v2123
    %v2203 = vunpack.c.l.b16 %v2124
    %v2204 = vunpack.c.h.b16 %v2124
    %v2205 = vunpack.c.l.b16 %v2125
    %v2206 = vunpack.c.h.b16 %v2125
    %v2207 = vunpack.c.l.b16 %v2126
    %v2208 = vunpack.c.h.b16 %v2126
    %v2209 = vunpack.c.l.b16 %v2127
    %v2210 = vunpack.c.h.b16 %v2127
    %v2211 = vunpack.c.l.b16 %v2128
    %v2212 = vunpack.c.h.b16 %v2128
    %v2213 = vunpack.c.l.b16 %v2129
    %v2214 = vunpack.c.h.b16 %v2129
    %v2215 = vunpack.c.l.b16 %v2130
    %v2216 = vunpack.c.h.b16 %v2130
    %v2217 = vunpack.c.l.b16 %v2131
    %v2218 = vunpack.c.h.b16 %v2131
    %v2219 = vunpack.c.l.b16 %v2132
    %v2220 = vunpack.c.h.b16 %v2132
    %v2221 = vunpack.c.l.b16 %v2133
    %v2222 = vunpack.c.h.b16 %v2133
    %v2223 = vunpack.c.l.b16 %v2134
    %v2224 = vunpack.c.h.b16 %v2134
    %v2225 = vunpack.c.l.b16 %v2135
    %v2226 = vunpack.c.h.b16 %v2135
    %v2227 = vunpack.c.l.b16 %v2136
    %v2228 = vunpack.c.h.b16 %v2136
    %v2229 = vunpack.c.l.b16 %v2137
    %v2230 = vunpack.c.h.b16 %v2137
    %v2231 = vunpack.c.l.b16 %v2138
    %v2232 = vunpack.c.h.b16 %v2138
    %v2233 = vunpack.c.l.b16 %v2139
    %v2234 = vunpack.c.h.b16 %v2139
    %v2235 = vunpack.c.l.b16 %v2140
    %v2236 = vunpack.c.h.b16 %v2140
    %v2237 = vpack.c.b16 %v2177, %v2173
    %v2238 = vpack.c.b16 %v2178, %v2174
    %v2239 = vpack.c.b16 %v2179, %v2175
    %v2240 = vpack.c.b16 %v2180, %v2176
    %v2241 = vpack.c.b16 %v2185, %v2181
    %v2242 = vpack.c.b16 %v2186, %v2182
    %v2243 = vpack.c.b16 %v2187, %v2183
    %v2244 = vpack.c.b16 %v2188, %v2184
    %v2245 = vpack.c.b16 %v2193, %v2189
    %v2246 = vpack.c.b16 %v2194, %v2190
    %v2247 = vpack.c.b16 %v2195, %v2191
    %v2248 = vpack.c.b16 %v2196, %v2192
    %v2249 = vpack.c.b16 %v2201, %v2197
    %v2250 = vpack.c.b16 %v2202, %v2198
    %v2251 = vpack.c.b16 %v2203, %v2199
    %v2252 = vpack.c.b16 %v2204, %v2200
    %v2253 = vpack.c.b16 %v2209, %v2205
    %v2254 = vpack.c.b16 %v2210, %v2206
    %v2255 = vpack.c.b16 %v2211, %v2207
    %v2256 = vpack.c.b16 %v2212, %v2208
    %v2257 = vpack.c.b16 %v2217, %v2213
    %v2258 = vpack.c.b16 %v2218, %v2214
    %v2259 = vpack.c.b16 %v2219, %v2215
    %v2260 = vpack.c.b16 %v2220, %v2216
    %v2261 = vpack.c.b16 %v2225, %v2221
    %v2262 = vpack.c.b16 %v2226, %v2222
    %v2263 = vpack.c.b16 %v2227, %v2223
    %v2264 = vpack.c.b16 %v2228, %v2224
    %v2265 = vpack.c.b16 %v2233, %v2229
    %v2266 = vpack.c.b16 %v2234, %v2230
    %v2267 = vpack.c.b16 %v2235, %v2231
    %v2268 = vpack.c.b16 %v2236, %v2232
    %2301 = vmatprep.subr.bf16.mxu0 %v2238
    %2302 = vmatpush1.bf16.msra.mxu0 %v2237
    %2303 = vmatprep.subr.bf16.mxu0 %v2242
    %2304 = vmatpush1.bf16.msra.mxu0 %v2241
    %2305 = vmatprep.subr.bf16.mxu0 %v2246
    %2306 = vmatpush1.bf16.msra.mxu0 %v2245
    %2307 = vmatprep.subr.bf16.mxu0 %v2250
    %2308 = vmatpush1.bf16.msra.mxu0 %v2249
    %2309 = vmatprep.subr.bf16.mxu0 %v2254
    %2310 = vmatpush1.bf16.msra.mxu0 %v2253
    %2311 = vmatprep.subr.bf16.mxu0 %v2258
    %2312 = vmatpush1.bf16.msra.mxu0 %v2257
    %2313 = vmatprep.subr.bf16.mxu0 %v2262
    %2314 = vmatpush1.bf16.msra.mxu0 %v2261
    %2315 = vmatprep.subr.bf16.mxu0 %v2266
    %2316 = vmatpush1.bf16.msra.mxu0 %v2265
    %2317 = vmatprep.subr.bf16.mxu0 0
    %2318 = vmatpush1.bf16.msra.mxu0 0
    %2319 = vmatprep.subr.bf16.mxu0 0
    %2320 = vmatpush1.bf16.msra.mxu0 0
    %2321 = vmatprep.subr.bf16.mxu0 0
    %2322 = vmatpush1.bf16.msra.mxu0 0
    %2323 = vmatprep.subr.bf16.mxu0 0
    %2324 = vmatpush1.bf16.msra.mxu0 0
    %2325 = vmatprep.subr.bf16.mxu0 0
    %2326 = vmatpush1.bf16.msra.mxu0 0
    %2327 = vmatprep.subr.bf16.mxu0 0
    %2328 = vmatpush1.bf16.msra.mxu0 0
    %2329 = vmatprep.subr.bf16.mxu0 0
    %2330 = vmatpush1.bf16.msra.mxu0 0
    %2331 = vmatprep.subr.bf16.mxu0 0
    %2332 = vmatpush1.bf16.msra.mxu0 0
    %2333 = vmatprep.mubr.bf16.mxu0 0
    %2334 = vmatmul.mubr.bf16.gmra.mrb[0].mxu0 %v2108
    %v2335 = vpop.f32.mrb[0].mxu0
    %v2336 = vadd.f32 0.0, %v2335
    %v2337 = vpop.f32.mrb[0].mxu0
    %v2338 = vadd.f32 0.0, %v2337
    %v2339 = vpop.f32.mrb[0].mxu0
    %v2340 = vpop.f32.mrb[0].mxu0
    %2341 = vdwg.mxu0
    %2342 = vmatprep.subr.bf16.mxu0 %v2240
    %2343 = vmatpush1.bf16.msra.mxu0 %v2239
    %2344 = vmatprep.subr.bf16.mxu0 %v2244
    %2345 = vmatpush1.bf16.msra.mxu0 %v2243
    %2346 = vmatprep.subr.bf16.mxu0 %v2248
    %2347 = vmatpush1.bf16.msra.mxu0 %v2247
    %2348 = vmatprep.subr.bf16.mxu0 %v2252
    %2349 = vmatpush1.bf16.msra.mxu0 %v2251
    %2350 = vmatprep.subr.bf16.mxu0 %v2256
    %2351 = vmatpush1.bf16.msra.mxu0 %v2255
    %2352 = vmatprep.subr.bf16.mxu0 %v2260
    %2353 = vmatpush1.bf16.msra.mxu0 %v2259
    %2354 = vmatprep.subr.bf16.mxu0 %v2264
    %2355 = vmatpush1.bf16.msra.mxu0 %v2263
    %2356 = vmatprep.subr.bf16.mxu0 %v2268
    %2357 = vmatpush1.bf16.msra.mxu0 %v2267
    %2358 = vmatprep.subr.bf16.mxu0 0
    %2359 = vmatpush1.bf16.msra.mxu0 0
    %2360 = vmatprep.subr.bf16.mxu0 0
    %2361 = vmatpush1.bf16.msra.mxu0 0
    %2362 = vmatprep.subr.bf16.mxu0 0
    %2363 = vmatpush1.bf16.msra.mxu0 0
    %2364 = vmatprep.subr.bf16.mxu0 0
    %2365 = vmatpush1.bf16.msra.mxu0 0
    %2366 = vmatprep.subr.bf16.mxu0 0
    %2367 = vmatpush1.bf16.msra.mxu0 0
    %2368 = vmatprep.subr.bf16.mxu0 0
    %2369 = vmatpush1.bf16.msra.mxu0 0
    %2370 = vmatprep.subr.bf16.mxu0 0
    %2371 = vmatpush1.bf16.msra.mxu0 0
    %2372 = vmatprep.subr.bf16.mxu0 0
    %2373 = vmatpush1.bf16.msra.mxu0 0
    %2374 = vmatprep.mubr.bf16.mxu0 0
    %2375 = vmatmul.mubr.bf16.gmra.mrb[0].mxu0 %v2108
    %v2376 = vpop.f32.mrb[0].mxu0
    %v2377 = vadd.f32 0.0, %v2376
    %v2378 = vpop.f32.mrb[0].mxu0
    %v2379 = vadd.f32 0.0, %v2378
    %v2380 = vpop.f32.mrb[0].mxu0
    %v2381 = vpop.f32.mrb[0].mxu0
    %2382 = vdwg.mxu0
    %v2383 = vadd.f32 %v2104, %v2336
    %v2384 = vadd.f32 %v2105, %v2338
    %v2385 = vadd.f32 %v2106, %v2377
    %v2386 = vadd.f32 %v2107, %v2379
    %v2387 = vxor.u32 %v2383, 2147483648
    %v2388 = vmul.f32 %v2387, 1.442695
    %v2389 = vpow.pop %v2388
    %v2390 = vadd.f32 %v2389, 1.0
    %v2391 = vrcp.pop %v2390
    %v2392 = vmul.f32 1.0, %v2391
    %v2393 = vxor.u32 %v2384, 2147483648
    %v2394 = vmul.f32 %v2393, 1.442695
    %v2395 = vpow.pop %v2394
    %v2396 = vadd.f32 %v2395, 1.0
    %v2397 = vrcp.pop %v2396
    %v2398 = vmul.f32 1.0, %v2397
    %v2399 = vtanh.pop %v2385
    %v2400 = vxor.u32 %v2386, 2147483648
    %v2401 = vmul.f32 %v2400, 1.442695
    %v2402 = vpow.pop %v2401
    %v2403 = vadd.f32 %v2402, 1.0
    %v2404 = vrcp.pop %v2403
    %v2405 = vmul.f32 1.0, %v2404
    %v2406 = vmul.f32 %v2398, %v2096
    %v2407 = vmul.f32 %v2392, %v2399
    %v2408 = vadd.f32 %v2406, %v2407
    %v2409 = vtanh.pop %v2408
    %v2410 = vmul.f32 %v2405, %v2409
    %s2411 = scalar_lea.vmem [#allocation14], 40
    %2412 = vst [vmem:[%s2411] sm:$0xff] %v2410
    %s2413 = smul.u32 6, 4
    %s2414 = smul.addr %s2413, 8
    %s2415 = scalar_lea.vmem [#allocation2], %s2414
    %v2416 = vld [vmem:[%s2415] sm:$0xff]
    %v2417 = vld [vmem:[%s2415 + $0x8] sm:$0xff]
    %v2418 = vld [vmem:[%s2415 + $0x10] sm:$0xff]
    %v2419 = vld [vmem:[%s2415 + $0x18] sm:$0xff]
    %v2420 = vpack.c.bf16 %v2410, %v2410
    %v2421 = vld [vmem:[#allocation8] sm:$0xff]
    %v2422 = vld [vmem:[#allocation8 + $0x8] sm:$0xff]
    %v2423 = vld [vmem:[#allocation8 + $0x10] sm:$0xff]
    %v2424 = vld [vmem:[#allocation8 + $0x18] sm:$0xff]
    %v2425 = vld [vmem:[#allocation8 + $0x20] sm:$0xff]
    %v2426 = vld [vmem:[#allocation8 + $0x28] sm:$0xff]
    %v2427 = vld [vmem:[#allocation8 + $0x30] sm:$0xff]
    %v2428 = vld [vmem:[#allocation8 + $0x38] sm:$0xff]
    %v2429 = vld [vmem:[#allocation8 + $0x40] sm:$0xff]
    %v2430 = vld [vmem:[#allocation8 + $0x48] sm:$0xff]
    %v2431 = vld [vmem:[#allocation8 + $0x50] sm:$0xff]
    %v2432 = vld [vmem:[#allocation8 + $0x58] sm:$0xff]
    %v2433 = vld [vmem:[#allocation8 + $0x60] sm:$0xff]
    %v2434 = vld [vmem:[#allocation8 + $0x68] sm:$0xff]
    %v2435 = vld [vmem:[#allocation8 + $0x70] sm:$0xff]
    %v2436 = vld [vmem:[#allocation8 + $0x78] sm:$0xff]
    %v2437 = vld [vmem:[#allocation8 + $0x80] sm:$0xff]
    %v2438 = vld [vmem:[#allocation8 + $0x88] sm:$0xff]
    %v2439 = vld [vmem:[#allocation8 + $0x90] sm:$0xff]
    %v2440 = vld [vmem:[#allocation8 + $0x98] sm:$0xff]
    %v2441 = vld [vmem:[#allocation8 + $0xa0] sm:$0xff]
    %v2442 = vld [vmem:[#allocation8 + $0xa8] sm:$0xff]
    %v2443 = vld [vmem:[#allocation8 + $0xb0] sm:$0xff]
    %v2444 = vld [vmem:[#allocation8 + $0xb8] sm:$0xff]
    %v2445 = vld [vmem:[#allocation8 + $0xc0] sm:$0xff]
    %v2446 = vld [vmem:[#allocation8 + $0xc8] sm:$0xff]
    %v2447 = vld [vmem:[#allocation8 + $0xd0] sm:$0xff]
    %v2448 = vld [vmem:[#allocation8 + $0xd8] sm:$0xff]
    %v2449 = vld [vmem:[#allocation8 + $0xe0] sm:$0xff]
    %v2450 = vld [vmem:[#allocation8 + $0xe8] sm:$0xff]
    %v2451 = vld [vmem:[#allocation8 + $0xf0] sm:$0xff]
    %v2452 = vld [vmem:[#allocation8 + $0xf8] sm:$0xff]
    %v2485 = vunpack.c.l.b16 %v2421
    %v2486 = vunpack.c.h.b16 %v2421
    %v2487 = vunpack.c.l.b16 %v2422
    %v2488 = vunpack.c.h.b16 %v2422
    %v2489 = vunpack.c.l.b16 %v2423
    %v2490 = vunpack.c.h.b16 %v2423
    %v2491 = vunpack.c.l.b16 %v2424
    %v2492 = vunpack.c.h.b16 %v2424
    %v2493 = vunpack.c.l.b16 %v2425
    %v2494 = vunpack.c.h.b16 %v2425
    %v2495 = vunpack.c.l.b16 %v2426
    %v2496 = vunpack.c.h.b16 %v2426
    %v2497 = vunpack.c.l.b16 %v2427
    %v2498 = vunpack.c.h.b16 %v2427
    %v2499 = vunpack.c.l.b16 %v2428
    %v2500 = vunpack.c.h.b16 %v2428
    %v2501 = vunpack.c.l.b16 %v2429
    %v2502 = vunpack.c.h.b16 %v2429
    %v2503 = vunpack.c.l.b16 %v2430
    %v2504 = vunpack.c.h.b16 %v2430
    %v2505 = vunpack.c.l.b16 %v2431
    %v2506 = vunpack.c.h.b16 %v2431
    %v2507 = vunpack.c.l.b16 %v2432
    %v2508 = vunpack.c.h.b16 %v2432
    %v2509 = vunpack.c.l.b16 %v2433
    %v2510 = vunpack.c.h.b16 %v2433
    %v2511 = vunpack.c.l.b16 %v2434
    %v2512 = vunpack.c.h.b16 %v2434
    %v2513 = vunpack.c.l.b16 %v2435
    %v2514 = vunpack.c.h.b16 %v2435
    %v2515 = vunpack.c.l.b16 %v2436
    %v2516 = vunpack.c.h.b16 %v2436
    %v2517 = vunpack.c.l.b16 %v2437
    %v2518 = vunpack.c.h.b16 %v2437
    %v2519 = vunpack.c.l.b16 %v2438
    %v2520 = vunpack.c.h.b16 %v2438
    %v2521 = vunpack.c.l.b16 %v2439
    %v2522 = vunpack.c.h.b16 %v2439
    %v2523 = vunpack.c.l.b16 %v2440
    %v2524 = vunpack.c.h.b16 %v2440
    %v2525 = vunpack.c.l.b16 %v2441
    %v2526 = vunpack.c.h.b16 %v2441
    %v2527 = vunpack.c.l.b16 %v2442
    %v2528 = vunpack.c.h.b16 %v2442
    %v2529 = vunpack.c.l.b16 %v2443
    %v2530 = vunpack.c.h.b16 %v2443
    %v2531 = vunpack.c.l.b16 %v2444
    %v2532 = vunpack.c.h.b16 %v2444
    %v2533 = vunpack.c.l.b16 %v2445
    %v2534 = vunpack.c.h.b16 %v2445
    %v2535 = vunpack.c.l.b16 %v2446
    %v2536 = vunpack.c.h.b16 %v2446
    %v2537 = vunpack.c.l.b16 %v2447
    %v2538 = vunpack.c.h.b16 %v2447
    %v2539 = vunpack.c.l.b16 %v2448
    %v2540 = vunpack.c.h.b16 %v2448
    %v2541 = vunpack.c.l.b16 %v2449
    %v2542 = vunpack.c.h.b16 %v2449
    %v2543 = vunpack.c.l.b16 %v2450
    %v2544 = vunpack.c.h.b16 %v2450
    %v2545 = vunpack.c.l.b16 %v2451
    %v2546 = vunpack.c.h.b16 %v2451
    %v2547 = vunpack.c.l.b16 %v2452
    %v2548 = vunpack.c.h.b16 %v2452
    %v2549 = vpack.c.b16 %v2489, %v2485
    %v2550 = vpack.c.b16 %v2490, %v2486
    %v2551 = vpack.c.b16 %v2491, %v2487
    %v2552 = vpack.c.b16 %v2492, %v2488
    %v2553 = vpack.c.b16 %v2497, %v2493
    %v2554 = vpack.c.b16 %v2498, %v2494
    %v2555 = vpack.c.b16 %v2499, %v2495
    %v2556 = vpack.c.b16 %v2500, %v2496
    %v2557 = vpack.c.b16 %v2505, %v2501
    %v2558 = vpack.c.b16 %v2506, %v2502
    %v2559 = vpack.c.b16 %v2507, %v2503
    %v2560 = vpack.c.b16 %v2508, %v2504
    %v2561 = vpack.c.b16 %v2513, %v2509
    %v2562 = vpack.c.b16 %v2514, %v2510
    %v2563 = vpack.c.b16 %v2515, %v2511
    %v2564 = vpack.c.b16 %v2516, %v2512
    %v2565 = vpack.c.b16 %v2521, %v2517
    %v2566 = vpack.c.b16 %v2522, %v2518
    %v2567 = vpack.c.b16 %v2523, %v2519
    %v2568 = vpack.c.b16 %v2524, %v2520
    %v2569 = vpack.c.b16 %v2529, %v2525
    %v2570 = vpack.c.b16 %v2530, %v2526
    %v2571 = vpack.c.b16 %v2531, %v2527
    %v2572 = vpack.c.b16 %v2532, %v2528
    %v2573 = vpack.c.b16 %v2537, %v2533
    %v2574 = vpack.c.b16 %v2538, %v2534
    %v2575 = vpack.c.b16 %v2539, %v2535
    %v2576 = vpack.c.b16 %v2540, %v2536
    %v2577 = vpack.c.b16 %v2545, %v2541
    %v2578 = vpack.c.b16 %v2546, %v2542
    %v2579 = vpack.c.b16 %v2547, %v2543
    %v2580 = vpack.c.b16 %v2548, %v2544
    %2613 = vmatprep.subr.bf16.mxu0 %v2550
    %2614 = vmatpush1.bf16.msra.mxu0 %v2549
    %2615 = vmatprep.subr.bf16.mxu0 %v2554
    %2616 = vmatpush1.bf16.msra.mxu0 %v2553
    %2617 = vmatprep.subr.bf16.mxu0 %v2558
    %2618 = vmatpush1.bf16.msra.mxu0 %v2557
    %2619 = vmatprep.subr.bf16.mxu0 %v2562
    %2620 = vmatpush1.bf16.msra.mxu0 %v2561
    %2621 = vmatprep.subr.bf16.mxu0 %v2566
    %2622 = vmatpush1.bf16.msra.mxu0 %v2565
    %2623 = vmatprep.subr.bf16.mxu0 %v2570
    %2624 = vmatpush1.bf16.msra.mxu0 %v2569
    %2625 = vmatprep.subr.bf16.mxu0 %v2574
    %2626 = vmatpush1.bf16.msra.mxu0 %v2573
    %2627 = vmatprep.subr.bf16.mxu0 %v2578
    %2628 = vmatpush1.bf16.msra.mxu0 %v2577
    %2629 = vmatprep.subr.bf16.mxu0 0
    %2630 = vmatpush1.bf16.msra.mxu0 0
    %2631 = vmatprep.subr.bf16.mxu0 0
    %2632 = vmatpush1.bf16.msra.mxu0 0
    %2633 = vmatprep.subr.bf16.mxu0 0
    %2634 = vmatpush1.bf16.msra.mxu0 0
    %2635 = vmatprep.subr.bf16.mxu0 0
    %2636 = vmatpush1.bf16.msra.mxu0 0
    %2637 = vmatprep.subr.bf16.mxu0 0
    %2638 = vmatpush1.bf16.msra.mxu0 0
    %2639 = vmatprep.subr.bf16.mxu0 0
    %2640 = vmatpush1.bf16.msra.mxu0 0
    %2641 = vmatprep.subr.bf16.mxu0 0
    %2642 = vmatpush1.bf16.msra.mxu0 0
    %2643 = vmatprep.subr.bf16.mxu0 0
    %2644 = vmatpush1.bf16.msra.mxu0 0
    %2645 = vmatprep.mubr.bf16.mxu0 0
    %2646 = vmatmul.mubr.bf16.gmra.mrb[0].mxu0 %v2420
    %v2647 = vpop.f32.mrb[0].mxu0
    %v2648 = vadd.f32 0.0, %v2647
    %v2649 = vpop.f32.mrb[0].mxu0
    %v2650 = vadd.f32 0.0, %v2649
    %v2651 = vpop.f32.mrb[0].mxu0
    %v2652 = vpop.f32.mrb[0].mxu0
    %2653 = vdwg.mxu0
    %2654 = vmatprep.subr.bf16.mxu0 %v2552
    %2655 = vmatpush1.bf16.msra.mxu0 %v2551
    %2656 = vmatprep.subr.bf16.mxu0 %v2556
    %2657 = vmatpush1.bf16.msra.mxu0 %v2555
    %2658 = vmatprep.subr.bf16.mxu0 %v2560
    %2659 = vmatpush1.bf16.msra.mxu0 %v2559
    %2660 = vmatprep.subr.bf16.mxu0 %v2564
    %2661 = vmatpush1.bf16.msra.mxu0 %v2563
    %2662 = vmatprep.subr.bf16.mxu0 %v2568
    %2663 = vmatpush1.bf16.msra.mxu0 %v2567
    %2664 = vmatprep.subr.bf16.mxu0 %v2572
    %2665 = vmatpush1.bf16.msra.mxu0 %v2571
    %2666 = vmatprep.subr.bf16.mxu0 %v2576
    %2667 = vmatpush1.bf16.msra.mxu0 %v2575
    %2668 = vmatprep.subr.bf16.mxu0 %v2580
    %2669 = vmatpush1.bf16.msra.mxu0 %v2579
    %2670 = vmatprep.subr.bf16.mxu0 0
    %2671 = vmatpush1.bf16.msra.mxu0 0
    %2672 = vmatprep.subr.bf16.mxu0 0
    %2673 = vmatpush1.bf16.msra.mxu0 0
    %2674 = vmatprep.subr.bf16.mxu0 0
    %2675 = vmatpush1.bf16.msra.mxu0 0
    %2676 = vmatprep.subr.bf16.mxu0 0
    %2677 = vmatpush1.bf16.msra.mxu0 0
    %2678 = vmatprep.subr.bf16.mxu0 0
    %2679 = vmatpush1.bf16.msra.mxu0 0
    %2680 = vmatprep.subr.bf16.mxu0 0
    %2681 = vmatpush1.bf16.msra.mxu0 0
    %2682 = vmatprep.subr.bf16.mxu0 0
    %2683 = vmatpush1.bf16.msra.mxu0 0
    %2684 = vmatprep.subr.bf16.mxu0 0
    %2685 = vmatpush1.bf16.msra.mxu0 0
    %2686 = vmatprep.mubr.bf16.mxu0 0
    %2687 = vmatmul.mubr.bf16.gmra.mrb[0].mxu0 %v2420
    %v2688 = vpop.f32.mrb[0].mxu0
    %v2689 = vadd.f32 0.0, %v2688
    %v2690 = vpop.f32.mrb[0].mxu0
    %v2691 = vadd.f32 0.0, %v2690
    %v2692 = vpop.f32.mrb[0].mxu0
    %v2693 = vpop.f32.mrb[0].mxu0
    %2694 = vdwg.mxu0
    %v2695 = vadd.f32 %v2416, %v2648
    %v2696 = vadd.f32 %v2417, %v2650
    %v2697 = vadd.f32 %v2418, %v2689
    %v2698 = vadd.f32 %v2419, %v2691
    %v2699 = vxor.u32 %v2695, 2147483648
    %v2700 = vmul.f32 %v2699, 1.442695
    %v2701 = vpow.pop %v2700
    %v2702 = vadd.f32 %v2701, 1.0
    %v2703 = vrcp.pop %v2702
    %v2704 = vmul.f32 1.0, %v2703
    %v2705 = vxor.u32 %v2696, 2147483648
    %v2706 = vmul.f32 %v2705, 1.442695
    %v2707 = vpow.pop %v2706
    %v2708 = vadd.f32 %v2707, 1.0
    %v2709 = vrcp.pop %v2708
    %v2710 = vmul.f32 1.0, %v2709
    %v2711 = vtanh.pop %v2697
    %v2712 = vxor.u32 %v2698, 2147483648
    %v2713 = vmul.f32 %v2712, 1.442695
    %v2714 = vpow.pop %v2713
    %v2715 = vadd.f32 %v2714, 1.0
    %v2716 = vrcp.pop %v2715
    %v2717 = vmul.f32 1.0, %v2716
    %v2718 = vmul.f32 %v2710, %v2408
    %v2719 = vmul.f32 %v2704, %v2711
    %v2720 = vadd.f32 %v2718, %v2719
    %v2721 = vtanh.pop %v2720
    %v2722 = vmul.f32 %v2717, %v2721
    %s2723 = scalar_lea.vmem [#allocation14], 48
    %2724 = vst [vmem:[%s2723] sm:$0xff] %v2722
    %s2725 = smul.u32 7, 4
    %s2726 = smul.addr %s2725, 8
    %s2727 = scalar_lea.vmem [#allocation2], %s2726
    %v2728 = vld [vmem:[%s2727] sm:$0xff]
    %v2729 = vld [vmem:[%s2727 + $0x8] sm:$0xff]
    %v2730 = vld [vmem:[%s2727 + $0x10] sm:$0xff]
    %v2731 = vld [vmem:[%s2727 + $0x18] sm:$0xff]
    %v2732 = vpack.c.bf16 %v2722, %v2722
    %v2733 = vld [vmem:[#allocation8] sm:$0xff]
    %v2734 = vld [vmem:[#allocation8 + $0x8] sm:$0xff]
    %v2735 = vld [vmem:[#allocation8 + $0x10] sm:$0xff]
    %v2736 = vld [vmem:[#allocation8 + $0x18] sm:$0xff]
    %v2737 = vld [vmem:[#allocation8 + $0x20] sm:$0xff]
    %v2738 = vld [vmem:[#allocation8 + $0x28] sm:$0xff]
    %v2739 = vld [vmem:[#allocation8 + $0x30] sm:$0xff]
    %v2740 = vld [vmem:[#allocation8 + $0x38] sm:$0xff]
    %v2741 = vld [vmem:[#allocation8 + $0x40] sm:$0xff]
    %v2742 = vld [vmem:[#allocation8 + $0x48] sm:$0xff]
    %v2743 = vld [vmem:[#allocation8 + $0x50] sm:$0xff]
    %v2744 = vld [vmem:[#allocation8 + $0x58] sm:$0xff]
    %v2745 = vld [vmem:[#allocation8 + $0x60] sm:$0xff]
    %v2746 = vld [vmem:[#allocation8 + $0x68] sm:$0xff]
    %v2747 = vld [vmem:[#allocation8 + $0x70] sm:$0xff]
    %v2748 = vld [vmem:[#allocation8 + $0x78] sm:$0xff]
    %v2749 = vld [vmem:[#allocation8 + $0x80] sm:$0xff]
    %v2750 = vld [vmem:[#allocation8 + $0x88] sm:$0xff]
    %v2751 = vld [vmem:[#allocation8 + $0x90] sm:$0xff]
    %v2752 = vld [vmem:[#allocation8 + $0x98] sm:$0xff]
    %v2753 = vld [vmem:[#allocation8 + $0xa0] sm:$0xff]
    %v2754 = vld [vmem:[#allocation8 + $0xa8] sm:$0xff]
    %v2755 = vld [vmem:[#allocation8 + $0xb0] sm:$0xff]
    %v2756 = vld [vmem:[#allocation8 + $0xb8] sm:$0xff]
    %v2757 = vld [vmem:[#allocation8 + $0xc0] sm:$0xff]
    %v2758 = vld [vmem:[#allocation8 + $0xc8] sm:$0xff]
    %v2759 = vld [vmem:[#allocation8 + $0xd0] sm:$0xff]
    %v2760 = vld [vmem:[#allocation8 + $0xd8] sm:$0xff]
    %v2761 = vld [vmem:[#allocation8 + $0xe0] sm:$0xff]
    %v2762 = vld [vmem:[#allocation8 + $0xe8] sm:$0xff]
    %v2763 = vld [vmem:[#allocation8 + $0xf0] sm:$0xff]
    %v2764 = vld [vmem:[#allocation8 + $0xf8] sm:$0xff]
    %v2797 = vunpack.c.l.b16 %v2733
    %v2798 = vunpack.c.h.b16 %v2733
    %v2799 = vunpack.c.l.b16 %v2734
    %v2800 = vunpack.c.h.b16 %v2734
    %v2801 = vunpack.c.l.b16 %v2735
    %v2802 = vunpack.c.h.b16 %v2735
    %v2803 = vunpack.c.l.b16 %v2736
    %v2804 = vunpack.c.h.b16 %v2736
    %v2805 = vunpack.c.l.b16 %v2737
    %v2806 = vunpack.c.h.b16 %v2737
    %v2807 = vunpack.c.l.b16 %v2738
    %v2808 = vunpack.c.h.b16 %v2738
    %v2809 = vunpack.c.l.b16 %v2739
    %v2810 = vunpack.c.h.b16 %v2739
    %v2811 = vunpack.c.l.b16 %v2740
    %v2812 = vunpack.c.h.b16 %v2740
    %v2813 = vunpack.c.l.b16 %v2741
    %v2814 = vunpack.c.h.b16 %v2741
    %v2815 = vunpack.c.l.b16 %v2742
    %v2816 = vunpack.c.h.b16 %v2742
    %v2817 = vunpack.c.l.b16 %v2743
    %v2818 = vunpack.c.h.b16 %v2743
    %v2819 = vunpack.c.l.b16 %v2744
    %v2820 = vunpack.c.h.b16 %v2744
    %v2821 = vunpack.c.l.b16 %v2745
    %v2822 = vunpack.c.h.b16 %v2745
    %v2823 = vunpack.c.l.b16 %v2746
    %v2824 = vunpack.c.h.b16 %v2746
    %v2825 = vunpack.c.l.b16 %v2747
    %v2826 = vunpack.c.h.b16 %v2747
    %v2827 = vunpack.c.l.b16 %v2748
    %v2828 = vunpack.c.h.b16 %v2748
    %v2829 = vunpack.c.l.b16 %v2749
    %v2830 = vunpack.c.h.b16 %v2749
    %v2831 = vunpack.c.l.b16 %v2750
    %v2832 = vunpack.c.h.b16 %v2750
    %v2833 = vunpack.c.l.b16 %v2751
    %v2834 = vunpack.c.h.b16 %v2751
    %v2835 = vunpack.c.l.b16 %v2752
    %v2836 = vunpack.c.h.b16 %v2752
    %v2837 = vunpack.c.l.b16 %v2753
    %v2838 = vunpack.c.h.b16 %v2753
    %v2839 = vunpack.c.l.b16 %v2754
    %v2840 = vunpack.c.h.b16 %v2754
    %v2841 = vunpack.c.l.b16 %v2755
    %v2842 = vunpack.c.h.b16 %v2755
    %v2843 = vunpack.c.l.b16 %v2756
    %v2844 = vunpack.c.h.b16 %v2756
    %v2845 = vunpack.c.l.b16 %v2757
    %v2846 = vunpack.c.h.b16 %v2757
    %v2847 = vunpack.c.l.b16 %v2758
    %v2848 = vunpack.c.h.b16 %v2758
    %v2849 = vunpack.c.l.b16 %v2759
    %v2850 = vunpack.c.h.b16 %v2759
    %v2851 = vunpack.c.l.b16 %v2760
    %v2852 = vunpack.c.h.b16 %v2760
    %v2853 = vunpack.c.l.b16 %v2761
    %v2854 = vunpack.c.h.b16 %v2761
    %v2855 = vunpack.c.l.b16 %v2762
    %v2856 = vunpack.c.h.b16 %v2762
    %v2857 = vunpack.c.l.b16 %v2763
    %v2858 = vunpack.c.h.b16 %v2763
    %v2859 = vunpack.c.l.b16 %v2764
    %v2860 = vunpack.c.h.b16 %v2764
    %v2861 = vpack.c.b16 %v2801, %v2797
    %v2862 = vpack.c.b16 %v2802, %v2798
    %v2863 = vpack.c.b16 %v2803, %v2799
    %v2864 = vpack.c.b16 %v2804, %v2800
    %v2865 = vpack.c.b16 %v2809, %v2805
    %v2866 = vpack.c.b16 %v2810, %v2806
    %v2867 = vpack.c.b16 %v2811, %v2807
    %v2868 = vpack.c.b16 %v2812, %v2808
    %v2869 = vpack.c.b16 %v2817, %v2813
    %v2870 = vpack.c.b16 %v2818, %v2814
    %v2871 = vpack.c.b16 %v2819, %v2815
    %v2872 = vpack.c.b16 %v2820, %v2816
    %v2873 = vpack.c.b16 %v2825, %v2821
    %v2874 = vpack.c.b16 %v2826, %v2822
    %v2875 = vpack.c.b16 %v2827, %v2823
    %v2876 = vpack.c.b16 %v2828, %v2824
    %v2877 = vpack.c.b16 %v2833, %v2829
    %v2878 = vpack.c.b16 %v2834, %v2830
    %v2879 = vpack.c.b16 %v2835, %v2831
    %v2880 = vpack.c.b16 %v2836, %v2832
    %v2881 = vpack.c.b16 %v2841, %v2837
    %v2882 = vpack.c.b16 %v2842, %v2838
    %v2883 = vpack.c.b16 %v2843, %v2839
    %v2884 = vpack.c.b16 %v2844, %v2840
    %v2885 = vpack.c.b16 %v2849, %v2845
    %v2886 = vpack.c.b16 %v2850, %v2846
    %v2887 = vpack.c.b16 %v2851, %v2847
    %v2888 = vpack.c.b16 %v2852, %v2848
    %v2889 = vpack.c.b16 %v2857, %v2853
    %v2890 = vpack.c.b16 %v2858, %v2854
    %v2891 = vpack.c.b16 %v2859, %v2855
    %v2892 = vpack.c.b16 %v2860, %v2856
    %2925 = vmatprep.subr.bf16.mxu0 %v2862
    %2926 = vmatpush1.bf16.msra.mxu0 %v2861
    %2927 = vmatprep.subr.bf16.mxu0 %v2866
    %2928 = vmatpush1.bf16.msra.mxu0 %v2865
    %2929 = vmatprep.subr.bf16.mxu0 %v2870
    %2930 = vmatpush1.bf16.msra.mxu0 %v2869
    %2931 = vmatprep.subr.bf16.mxu0 %v2874
    %2932 = vmatpush1.bf16.msra.mxu0 %v2873
    %2933 = vmatprep.subr.bf16.mxu0 %v2878
    %2934 = vmatpush1.bf16.msra.mxu0 %v2877
    %2935 = vmatprep.subr.bf16.mxu0 %v2882
    %2936 = vmatpush1.bf16.msra.mxu0 %v2881
    %2937 = vmatprep.subr.bf16.mxu0 %v2886
    %2938 = vmatpush1.bf16.msra.mxu0 %v2885
    %2939 = vmatprep.subr.bf16.mxu0 %v2890
    %2940 = vmatpush1.bf16.msra.mxu0 %v2889
    %2941 = vmatprep.subr.bf16.mxu0 0
    %2942 = vmatpush1.bf16.msra.mxu0 0
    %2943 = vmatprep.subr.bf16.mxu0 0
    %2944 = vmatpush1.bf16.msra.mxu0 0
    %2945 = vmatprep.subr.bf16.mxu0 0
    %2946 = vmatpush1.bf16.msra.mxu0 0
    %2947 = vmatprep.subr.bf16.mxu0 0
    %2948 = vmatpush1.bf16.msra.mxu0 0
    %2949 = vmatprep.subr.bf16.mxu0 0
    %2950 = vmatpush1.bf16.msra.mxu0 0
    %2951 = vmatprep.subr.bf16.mxu0 0
    %2952 = vmatpush1.bf16.msra.mxu0 0
    %2953 = vmatprep.subr.bf16.mxu0 0
    %2954 = vmatpush1.bf16.msra.mxu0 0
    %2955 = vmatprep.subr.bf16.mxu0 0
    %2956 = vmatpush1.bf16.msra.mxu0 0
    %2957 = vmatprep.mubr.bf16.mxu0 0
    %2958 = vmatmul.mubr.bf16.gmra.mrb[0].mxu0 %v2732
    %v2959 = vpop.f32.mrb[0].mxu0
    %v2960 = vadd.f32 0.0, %v2959
    %v2961 = vpop.f32.mrb[0].mxu0
    %v2962 = vadd.f32 0.0, %v2961
    %v2963 = vpop.f32.mrb[0].mxu0
    %v2964 = vpop.f32.mrb[0].mxu0
    %2965 = vdwg.mxu0
    %2966 = vmatprep.subr.bf16.mxu0 %v2864
    %2967 = vmatpush1.bf16.msra.mxu0 %v2863
    %2968 = vmatprep.subr.bf16.mxu0 %v2868
    %2969 = vmatpush1.bf16.msra.mxu0 %v2867
    %2970 = vmatprep.subr.bf16.mxu0 %v2872
    %2971 = vmatpush1.bf16.msra.mxu0 %v2871
    %2972 = vmatprep.subr.bf16.mxu0 %v2876
    %2973 = vmatpush1.bf16.msra.mxu0 %v2875
    %2974 = vmatprep.subr.bf16.mxu0 %v2880
    %2975 = vmatpush1.bf16.msra.mxu0 %v2879
    %2976 = vmatprep.subr.bf16.mxu0 %v2884
    %2977 = vmatpush1.bf16.msra.mxu0 %v2883
    %2978 = vmatprep.subr.bf16.mxu0 %v2888
    %2979 = vmatpush1.bf16.msra.mxu0 %v2887
    %2980 = vmatprep.subr.bf16.mxu0 %v2892
    %2981 = vmatpush1.bf16.msra.mxu0 %v2891
    %2982 = vmatprep.subr.bf16.mxu0 0
    %2983 = vmatpush1.bf16.msra.mxu0 0
    %2984 = vmatprep.subr.bf16.mxu0 0
    %2985 = vmatpush1.bf16.msra.mxu0 0
    %2986 = vmatprep.subr.bf16.mxu0 0
    %2987 = vmatpush1.bf16.msra.mxu0 0
    %2988 = vmatprep.subr.bf16.mxu0 0
    %2989 = vmatpush1.bf16.msra.mxu0 0
    %2990 = vmatprep.subr.bf16.mxu0 0
    %2991 = vmatpush1.bf16.msra.mxu0 0
    %2992 = vmatprep.subr.bf16.mxu0 0
    %2993 = vmatpush1.bf16.msra.mxu0 0
    %2994 = vmatprep.subr.bf16.mxu0 0
    %2995 = vmatpush1.bf16.msra.mxu0 0
    %2996 = vmatprep.subr.bf16.mxu0 0
    %2997 = vmatpush1.bf16.msra.mxu0 0
    %2998 = vmatprep.mubr.bf16.mxu0 0
    %2999 = vmatmul.mubr.bf16.gmra.mrb[0].mxu0 %v2732
    %v3000 = vpop.f32.mrb[0].mxu0
    %v3001 = vadd.f32 0.0, %v3000
    %v3002 = vpop.f32.mrb[0].mxu0
    %v3003 = vadd.f32 0.0, %v3002
    %v3004 = vpop.f32.mrb[0].mxu0
    %v3005 = vpop.f32.mrb[0].mxu0
    %3006 = vdwg.mxu0
    %v3007 = vadd.f32 %v2728, %v2960
    %v3008 = vadd.f32 %v2729, %v2962
    %v3009 = vadd.f32 %v2730, %v3001
    %v3010 = vadd.f32 %v2731, %v3003
    %v3011 = vxor.u32 %v3007, 2147483648
    %v3012 = vmul.f32 %v3011, 1.442695
    %v3013 = vpow.pop %v3012
    %v3014 = vadd.f32 %v3013, 1.0
    %v3015 = vrcp.pop %v3014
    %v3016 = vmul.f32 1.0, %v3015
    %v3017 = vxor.u32 %v3008, 2147483648
    %v3018 = vmul.f32 %v3017, 1.442695
    %v3019 = vpow.pop %v3018
    %v3020 = vadd.f32 %v3019, 1.0
    %v3021 = vrcp.pop %v3020
    %v3022 = vmul.f32 1.0, %v3021
    %v3023 = vtanh.pop %v3009
    %v3024 = vxor.u32 %v3010, 2147483648
    %v3025 = vmul.f32 %v3024, 1.442695
    %v3026 = vpow.pop %v3025
    %v3027 = vadd.f32 %v3026, 1.0
    %v3028 = vrcp.pop %v3027
    %v3029 = vmul.f32 1.0, %v3028
    %v3030 = vmul.f32 %v3022, %v2720
    %v3031 = vmul.f32 %v3016, %v3023
    %v3032 = vadd.f32 %v3030, %v3031
    %v3033 = vtanh.pop %v3032
    %v3034 = vmul.f32 %v3029, %v3033
    %s3035 = scalar_lea.vmem [#allocation14], 56
    %3036 = vst [vmem:[%s3035] sm:$0xff] %v3034
    %v3037 = vld [vmem:[#allocation14] sm:$0xff]
    %v3038 = vld [vmem:[#allocation14 + $0x8] sm:$0xff]
    %v3039 = vld [vmem:[#allocation14 + $0x10] sm:$0xff]
    %v3040 = vld [vmem:[#allocation14 + $0x18] sm:$0xff]
    %v3041 = vld [vmem:[#allocation14 + $0x20] sm:$0xff]
    %v3042 = vld [vmem:[#allocation14 + $0x28] sm:$0xff]
    %v3043 = vld [vmem:[#allocation14 + $0x30] sm:$0xff]
    %v3044 = vld [vmem:[#allocation14 + $0x38] sm:$0xff]
    %v3045 = vpack.c.bf16 %v3038, %v3037
    %v3046 = vpack.c.bf16 %v3040, %v3039
    %v3047 = vpack.c.bf16 %v3042, %v3041
    %v3048 = vpack.c.bf16 %v3044, %v3043
    %v3049 = vld [vmem:[#allocation9] sm:$0xff]
    %v3050 = vld [vmem:[#allocation9 + $0x8] sm:$0xff]
    %v3051 = vld [vmem:[#allocation9 + $0x10] sm:$0xff]
    %v3052 = vld [vmem:[#allocation9 + $0x18] sm:$0xff]
    %v3053 = vld [vmem:[#allocation9 + $0x20] sm:$0xff]
    %v3054 = vld [vmem:[#allocation9 + $0x28] sm:$0xff]
    %v3055 = vld [vmem:[#allocation9 + $0x30] sm:$0xff]
    %v3056 = vld [vmem:[#allocation9 + $0x38] sm:$0xff]
    %v3057 = vld [vmem:[#allocation9 + $0x40] sm:$0xff]
    %v3058 = vld [vmem:[#allocation9 + $0x48] sm:$0xff]
    %v3059 = vld [vmem:[#allocation9 + $0x50] sm:$0xff]
    %v3060 = vld [vmem:[#allocation9 + $0x58] sm:$0xff]
    %v3061 = vld [vmem:[#allocation9 + $0x60] sm:$0xff]
    %v3062 = vld [vmem:[#allocation9 + $0x68] sm:$0xff]
    %v3063 = vld [vmem:[#allocation9 + $0x70] sm:$0xff]
    %v3064 = vld [vmem:[#allocation9 + $0x78] sm:$0xff]
    %v3065 = vld [vmem:[#allocation9 + $0x80] sm:$0xff]
    %v3066 = vld [vmem:[#allocation9 + $0x88] sm:$0xff]
    %v3067 = vld [vmem:[#allocation9 + $0x90] sm:$0xff]
    %v3068 = vld [vmem:[#allocation9 + $0x98] sm:$0xff]
    %v3069 = vld [vmem:[#allocation9 + $0xa0] sm:$0xff]
    %v3070 = vld [vmem:[#allocation9 + $0xa8] sm:$0xff]
    %v3071 = vld [vmem:[#allocation9 + $0xb0] sm:$0xff]
    %v3072 = vld [vmem:[#allocation9 + $0xb8] sm:$0xff]
    %v3073 = vld [vmem:[#allocation9 + $0xc0] sm:$0xff]
    %v3074 = vld [vmem:[#allocation9 + $0xc8] sm:$0xff]
    %v3075 = vld [vmem:[#allocation9 + $0xd0] sm:$0xff]
    %v3076 = vld [vmem:[#allocation9 + $0xd8] sm:$0xff]
    %v3077 = vld [vmem:[#allocation9 + $0xe0] sm:$0xff]
    %v3078 = vld [vmem:[#allocation9 + $0xe8] sm:$0xff]
    %v3079 = vld [vmem:[#allocation9 + $0xf0] sm:$0xff]
    %v3080 = vld [vmem:[#allocation9 + $0xf8] sm:$0xff]
    %v3081 = vld [vmem:[%s6] sm:$0xf]
    %v3083 = vlaneseq
    %v3084 = vshrl.u32 %v3083, 7
    %v3085 = vsub.s32 0, %v3084
    %v3086 = vrot.slane %v3081, %v3085
    %v3087 = vlaneseq
    %v3088 = vshrl.u32 %v3087, 7
    %v3089 = vsub.s32 1, %v3088
    %v3090 = vrot.slane %v3081, %v3089
    %v3091 = vlaneseq
    %v3092 = vshrl.u32 %v3091, 7
    %v3093 = vsub.s32 2, %v3092
    %v3094 = vrot.slane %v3081, %v3093
    %v3095 = vlaneseq
    %v3096 = vshrl.u32 %v3095, 7
    %v3097 = vsub.s32 3, %v3096
    %v3098 = vrot.slane %v3081, %v3097
    %v3135 = vunpack.c.l.b16 %v3049
    %v3136 = vunpack.c.h.b16 %v3049
    %v3137 = vunpack.c.l.b16 %v3050
    %v3138 = vunpack.c.h.b16 %v3050
    %v3139 = vunpack.c.l.b16 %v3051
    %v3140 = vunpack.c.h.b16 %v3051
    %v3141 = vunpack.c.l.b16 %v3052
    %v3142 = vunpack.c.h.b16 %v3052
    %v3143 = vunpack.c.l.b16 %v3053
    %v3144 = vunpack.c.h.b16 %v3053
    %v3145 = vunpack.c.l.b16 %v3054
    %v3146 = vunpack.c.h.b16 %v3054
    %v3147 = vunpack.c.l.b16 %v3055
    %v3148 = vunpack.c.h.b16 %v3055
    %v3149 = vunpack.c.l.b16 %v3056
    %v3150 = vunpack.c.h.b16 %v3056
    %v3151 = vunpack.c.l.b16 %v3057
    %v3152 = vunpack.c.h.b16 %v3057
    %v3153 = vunpack.c.l.b16 %v3058
    %v3154 = vunpack.c.h.b16 %v3058
    %v3155 = vunpack.c.l.b16 %v3059
    %v3156 = vunpack.c.h.b16 %v3059
    %v3157 = vunpack.c.l.b16 %v3060
    %v3158 = vunpack.c.h.b16 %v3060
    %v3159 = vunpack.c.l.b16 %v3061
    %v3160 = vunpack.c.h.b16 %v3061
    %v3161 = vunpack.c.l.b16 %v3062
    %v3162 = vunpack.c.h.b16 %v3062
    %v3163 = vunpack.c.l.b16 %v3063
    %v3164 = vunpack.c.h.b16 %v3063
    %v3165 = vunpack.c.l.b16 %v3064
    %v3166 = vunpack.c.h.b16 %v3064
    %v3167 = vunpack.c.l.b16 %v3065
    %v3168 = vunpack.c.h.b16 %v3065
    %v3169 = vunpack.c.l.b16 %v3066
    %v3170 = vunpack.c.h.b16 %v3066
    %v3171 = vunpack.c.l.b16 %v3067
    %v3172 = vunpack.c.h.b16 %v3067
    %v3173 = vunpack.c.l.b16 %v3068
    %v3174 = vunpack.c.h.b16 %v3068
    %v3175 = vunpack.c.l.b16 %v3069
    %v3176 = vunpack.c.h.b16 %v3069
    %v3177 = vunpack.c.l.b16 %v3070
    %v3178 = vunpack.c.h.b16 %v3070
    %v3179 = vunpack.c.l.b16 %v3071
    %v3180 = vunpack.c.h.b16 %v3071
    %v3181 = vunpack.c.l.b16 %v3072
    %v3182 = vunpack.c.h.b16 %v3072
    %v3183 = vunpack.c.l.b16 %v3073
    %v3184 = vunpack.c.h.b16 %v3073
    %v3185 = vunpack.c.l.b16 %v3074
    %v3186 = vunpack.c.h.b16 %v3074
    %v3187 = vunpack.c.l.b16 %v3075
    %v3188 = vunpack.c.h.b16 %v3075
    %v3189 = vunpack.c.l.b16 %v3076
    %v3190 = vunpack.c.h.b16 %v3076
    %v3191 = vunpack.c.l.b16 %v3077
    %v3192 = vunpack.c.h.b16 %v3077
    %v3193 = vunpack.c.l.b16 %v3078
    %v3194 = vunpack.c.h.b16 %v3078
    %v3195 = vunpack.c.l.b16 %v3079
    %v3196 = vunpack.c.h.b16 %v3079
    %v3197 = vunpack.c.l.b16 %v3080
    %v3198 = vunpack.c.h.b16 %v3080
    %v3199 = vpack.c.b16 %v3139, %v3135
    %v3200 = vpack.c.b16 %v3140, %v3136
    %v3201 = vpack.c.b16 %v3141, %v3137
    %v3202 = vpack.c.b16 %v3142, %v3138
    %v3203 = vpack.c.b16 %v3147, %v3143
    %v3204 = vpack.c.b16 %v3148, %v3144
    %v3205 = vpack.c.b16 %v3149, %v3145
    %v3206 = vpack.c.b16 %v3150, %v3146
    %v3207 = vpack.c.b16 %v3155, %v3151
    %v3208 = vpack.c.b16 %v3156, %v3152
    %v3209 = vpack.c.b16 %v3157, %v3153
    %v3210 = vpack.c.b16 %v3158, %v3154
    %v3211 = vpack.c.b16 %v3163, %v3159
    %v3212 = vpack.c.b16 %v3164, %v3160
    %v3213 = vpack.c.b16 %v3165, %v3161
    %v3214 = vpack.c.b16 %v3166, %v3162
    %v3215 = vpack.c.b16 %v3171, %v3167
    %v3216 = vpack.c.b16 %v3172, %v3168
    %v3217 = vpack.c.b16 %v3173, %v3169
    %v3218 = vpack.c.b16 %v3174, %v3170
    %v3219 = vpack.c.b16 %v3179, %v3175
    %v3220 = vpack.c.b16 %v3180, %v3176
    %v3221 = vpack.c.b16 %v3181, %v3177
    %v3222 = vpack.c.b16 %v3182, %v3178
    %v3223 = vpack.c.b16 %v3187, %v3183
    %v3224 = vpack.c.b16 %v3188, %v3184
    %v3225 = vpack.c.b16 %v3189, %v3185
    %v3226 = vpack.c.b16 %v3190, %v3186
    %v3227 = vpack.c.b16 %v3195, %v3191
    %v3228 = vpack.c.b16 %v3196, %v3192
    %v3229 = vpack.c.b16 %v3197, %v3193
    %v3230 = vpack.c.b16 %v3198, %v3194
    %3263 = vmatprep.subr.bf16.mxu0 %v3200
    %3264 = vmatpush1.bf16.msra.mxu0 %v3199
    %3265 = vmatprep.subr.bf16.mxu0 %v3204
    %3266 = vmatpush1.bf16.msra.mxu0 %v3203
    %3267 = vmatprep.subr.bf16.mxu0 %v3208
    %3268 = vmatpush1.bf16.msra.mxu0 %v3207
    %3269 = vmatprep.subr.bf16.mxu0 %v3212
    %3270 = vmatpush1.bf16.msra.mxu0 %v3211
    %3271 = vmatprep.subr.bf16.mxu0 %v3216
    %3272 = vmatpush1.bf16.msra.mxu0 %v3215
    %3273 = vmatprep.subr.bf16.mxu0 %v3220
    %3274 = vmatpush1.bf16.msra.mxu0 %v3219
    %3275 = vmatprep.subr.bf16.mxu0 %v3224
    %3276 = vmatpush1.bf16.msra.mxu0 %v3223
    %3277 = vmatprep.subr.bf16.mxu0 %v3228
    %3278 = vmatpush1.bf16.msra.mxu0 %v3227
    %3279 = vmatprep.subr.bf16.mxu0 0
    %3280 = vmatpush1.bf16.msra.mxu0 0
    %3281 = vmatprep.subr.bf16.mxu0 0
    %3282 = vmatpush1.bf16.msra.mxu0 0
    %3283 = vmatprep.subr.bf16.mxu0 0
    %3284 = vmatpush1.bf16.msra.mxu0 0
    %3285 = vmatprep.subr.bf16.mxu0 0
    %3286 = vmatpush1.bf16.msra.mxu0 0
    %3287 = vmatprep.subr.bf16.mxu0 0
    %3288 = vmatpush1.bf16.msra.mxu0 0
    %3289 = vmatprep.subr.bf16.mxu0 0
    %3290 = vmatpush1.bf16.msra.mxu0 0
    %3291 = vmatprep.subr.bf16.mxu0 0
    %3292 = vmatpush1.bf16.msra.mxu0 0
    %3293 = vmatprep.subr.bf16.mxu0 0
    %3294 = vmatpush1.bf16.msra.mxu0 0
    %3295 = vmatprep.mubr.bf16.mxu0 0
    %3296 = vmatmul.mubr.bf16.gmra.mrb[0].mxu0 %v3045
    %v3297 = vpop.f32.mrb[0].mxu0
    %v3298 = vadd.f32 %v3086, %v3297
    %v3299 = vpop.f32.mrb[0].mxu0
    %v3300 = vadd.f32 %v3090, %v3299
    %v3301 = vpop.f32.mrb[0].mxu0
    %v3302 = vadd.f32 %v3086, %v3301
    %v3303 = vpop.f32.mrb[0].mxu0
    %v3304 = vadd.f32 %v3090, %v3303
    %3305 = vmatprep.mubr.bf16.mxu0 0
    %3306 = vmatmul.mubr.bf16.gmra.mrb[0].mxu0 %v3046
    %v3307 = vpop.f32.mrb[0].mxu0
    %v3308 = vadd.f32 %v3086, %v3307
    %v3309 = vpop.f32.mrb[0].mxu0
    %v3310 = vadd.f32 %v3090, %v3309
    %v3311 = vpop.f32.mrb[0].mxu0
    %v3312 = vadd.f32 %v3086, %v3311
    %v3313 = vpop.f32.mrb[0].mxu0
    %v3314 = vadd.f32 %v3090, %v3313
    %3315 = vmatprep.mubr.bf16.mxu0 0
    %3316 = vmatmul.mubr.bf16.gmra.mrb[0].mxu0 %v3047
    %v3317 = vpop.f32.mrb[0].mxu0
    %v3318 = vadd.f32 %v3086, %v3317
    %v3319 = vpop.f32.mrb[0].mxu0
    %v3320 = vadd.f32 %v3090, %v3319
    %v3321 = vpop.f32.mrb[0].mxu0
    %v3322 = vadd.f32 %v3086, %v3321
    %v3323 = vpop.f32.mrb[0].mxu0
    %v3324 = vadd.f32 %v3090, %v3323
    %3325 = vmatprep.mubr.bf16.mxu0 0
    %3326 = vmatmul.mubr.bf16.gmra.mrb[0].mxu0 %v3048
    %v3327 = vpop.f32.mrb[0].mxu0
    %v3328 = vadd.f32 %v3086, %v3327
    %v3329 = vpop.f32.mrb[0].mxu0
    %v3330 = vadd.f32 %v3090, %v3329
    %v3331 = vpop.f32.mrb[0].mxu0
    %v3332 = vadd.f32 %v3086, %v3331
    %v3333 = vpop.f32.mrb[0].mxu0
    %v3334 = vadd.f32 %v3090, %v3333
    %3335 = vdwg.mxu0
    %3336 = vmatprep.subr.bf16.mxu0 %v3202
    %3337 = vmatpush1.bf16.msra.mxu0 %v3201
    %3338 = vmatprep.subr.bf16.mxu0 %v3206
    %3339 = vmatpush1.bf16.msra.mxu0 %v3205
    %3340 = vmatprep.subr.bf16.mxu0 %v3210
    %3341 = vmatpush1.bf16.msra.mxu0 %v3209
    %3342 = vmatprep.subr.bf16.mxu0 %v3214
    %3343 = vmatpush1.bf16.msra.mxu0 %v3213
    %3344 = vmatprep.subr.bf16.mxu0 %v3218
    %3345 = vmatpush1.bf16.msra.mxu0 %v3217
    %3346 = vmatprep.subr.bf16.mxu0 %v3222
    %3347 = vmatpush1.bf16.msra.mxu0 %v3221
    %3348 = vmatprep.subr.bf16.mxu0 %v3226
    %3349 = vmatpush1.bf16.msra.mxu0 %v3225
    %3350 = vmatprep.subr.bf16.mxu0 %v3230
    %3351 = vmatpush1.bf16.msra.mxu0 %v3229
    %3352 = vmatprep.subr.bf16.mxu0 0
    %3353 = vmatpush1.bf16.msra.mxu0 0
    %3354 = vmatprep.subr.bf16.mxu0 0
    %3355 = vmatpush1.bf16.msra.mxu0 0
    %3356 = vmatprep.subr.bf16.mxu0 0
    %3357 = vmatpush1.bf16.msra.mxu0 0
    %3358 = vmatprep.subr.bf16.mxu0 0
    %3359 = vmatpush1.bf16.msra.mxu0 0
    %3360 = vmatprep.subr.bf16.mxu0 0
    %3361 = vmatpush1.bf16.msra.mxu0 0
    %3362 = vmatprep.subr.bf16.mxu0 0
    %3363 = vmatpush1.bf16.msra.mxu0 0
    %3364 = vmatprep.subr.bf16.mxu0 0
    %3365 = vmatpush1.bf16.msra.mxu0 0
    %3366 = vmatprep.subr.bf16.mxu0 0
    %3367 = vmatpush1.bf16.msra.mxu0 0
    %3368 = vmatprep.mubr.bf16.mxu0 0
    %3369 = vmatmul.mubr.bf16.gmra.mrb[0].mxu0 %v3045
    %v3370 = vpop.f32.mrb[0].mxu0
    %v3371 = vadd.f32 %v3094, %v3370
    %v3372 = vpop.f32.mrb[0].mxu0
    %v3373 = vadd.f32 %v3098, %v3372
    %v3374 = vpop.f32.mrb[0].mxu0
    %v3375 = vadd.f32 %v3094, %v3374
    %v3376 = vpop.f32.mrb[0].mxu0
    %v3377 = vadd.f32 %v3098, %v3376
    %3378 = vmatprep.mubr.bf16.mxu0 0
    %3379 = vmatmul.mubr.bf16.gmra.mrb[0].mxu0 %v3046
    %v3380 = vpop.f32.mrb[0].mxu0
    %v3381 = vadd.f32 %v3094, %v3380
    %v3382 = vpop.f32.mrb[0].mxu0
    %v3383 = vadd.f32 %v3098, %v3382
    %v3384 = vpop.f32.mrb[0].mxu0
    %v3385 = vadd.f32 %v3094, %v3384
    %v3386 = vpop.f32.mrb[0].mxu0
    %v3387 = vadd.f32 %v3098, %v3386
    %3388 = vmatprep.mubr.bf16.mxu0 0
    %3389 = vmatmul.mubr.bf16.gmra.mrb[0].mxu0 %v3047
    %v3390 = vpop.f32.mrb[0].mxu0
    %v3391 = vadd.f32 %v3094, %v3390
    %v3392 = vpop.f32.mrb[0].mxu0
    %v3393 = vadd.f32 %v3098, %v3392
    %v3394 = vpop.f32.mrb[0].mxu0
    %v3395 = vadd.f32 %v3094, %v3394
    %v3396 = vpop.f32.mrb[0].mxu0
    %v3397 = vadd.f32 %v3098, %v3396
    %3398 = vmatprep.mubr.bf16.mxu0 0
    %3399 = vmatmul.mubr.bf16.gmra.mrb[0].mxu0 %v3048
    %v3400 = vpop.f32.mrb[0].mxu0
    %v3401 = vadd.f32 %v3094, %v3400
    %v3402 = vpop.f32.mrb[0].mxu0
    %v3403 = vadd.f32 %v3098, %v3402
    %v3404 = vpop.f32.mrb[0].mxu0
    %v3405 = vadd.f32 %v3094, %v3404
    %v3406 = vpop.f32.mrb[0].mxu0
    %v3407 = vadd.f32 %v3098, %v3406
    %3408 = vdwg.mxu0
    %3409 = vst [vmem:[#allocation2] sm:$0xff] %v3298
    %3410 = vst [vmem:[#allocation2 + $0x8] sm:$0xff] %v3300
    %3411 = vst [vmem:[#allocation2 + $0x10] sm:$0xff] %v3371
    %3412 = vst [vmem:[#allocation2 + $0x18] sm:$0xff] %v3373
    %3413 = vst [vmem:[#allocation2 + $0x20] sm:$0xff] %v3302
    %3414 = vst [vmem:[#allocation2 + $0x28] sm:$0xff] %v3304
    %3415 = vst [vmem:[#allocation2 + $0x30] sm:$0xff] %v3375
    %3416 = vst [vmem:[#allocation2 + $0x38] sm:$0xff] %v3377
    %3417 = vst [vmem:[#allocation2 + $0x40] sm:$0xff] %v3308
    %3418 = vst [vmem:[#allocation2 + $0x48] sm:$0xff] %v3310
    %3419 = vst [vmem:[#allocation2 + $0x50] sm:$0xff] %v3381
    %3420 = vst [vmem:[#allocation2 + $0x58] sm:$0xff] %v3383
    %3421 = vst [vmem:[#allocation2 + $0x60] sm:$0xff] %v3312
    %3422 = vst [vmem:[#allocation2 + $0x68] sm:$0xff] %v3314
    %3423 = vst [vmem:[#allocation2 + $0x70] sm:$0xff] %v3385
    %3424 = vst [vmem:[#allocation2 + $0x78] sm:$0xff] %v3387
    %3425 = vst [vmem:[#allocation2 + $0x80] sm:$0xff] %v3318
    %3426 = vst [vmem:[#allocation2 + $0x88] sm:$0xff] %v3320
    %3427 = vst [vmem:[#allocation2 + $0x90] sm:$0xff] %v3391
    %3428 = vst [vmem:[#allocation2 + $0x98] sm:$0xff] %v3393
    %3429 = vst [vmem:[#allocation2 + $0xa0] sm:$0xff] %v3322
    %3430 = vst [vmem:[#allocation2 + $0xa8] sm:$0xff] %v3324
    %3431 = vst [vmem:[#allocation2 + $0xb0] sm:$0xff] %v3395
    %3432 = vst [vmem:[#allocation2 + $0xb8] sm:$0xff] %v3397
    %3433 = vst [vmem:[#allocation2 + $0xc0] sm:$0xff] %v3328
    %3434 = vst [vmem:[#allocation2 + $0xc8] sm:$0xff] %v3330
    %3435 = vst [vmem:[#allocation2 + $0xd0] sm:$0xff] %v3401
    %3436 = vst [vmem:[#allocation2 + $0xd8] sm:$0xff] %v3403
    %3437 = vst [vmem:[#allocation2 + $0xe0] sm:$0xff] %v3332
    %3438 = vst [vmem:[#allocation2 + $0xe8] sm:$0xff] %v3334
    %3439 = vst [vmem:[#allocation2 + $0xf0] sm:$0xff] %v3405
    %3440 = vst [vmem:[#allocation2 + $0xf8] sm:$0xff] %v3407
    %v3441 = vld [vmem:[%s545] sm:$0xff]
    %v3442 = vld [vmem:[%s545 + $0x8] sm:$0xff]
    %v3443 = vld [vmem:[%s545 + $0x10] sm:$0xff]
    %v3444 = vld [vmem:[%s545 + $0x18] sm:$0xff]
    %v3445 = vld [vmem:[#allocation11] sm:$0xff]
    %v3446 = vld [vmem:[#allocation11 + $0x8] sm:$0xff]
    %v3447 = vld [vmem:[#allocation11 + $0x10] sm:$0xff]
    %v3448 = vld [vmem:[#allocation11 + $0x18] sm:$0xff]
    %v3449 = vld [vmem:[#allocation11 + $0x20] sm:$0xff]
    %v3450 = vld [vmem:[#allocation11 + $0x28] sm:$0xff]
    %v3451 = vld [vmem:[#allocation11 + $0x30] sm:$0xff]
    %v3452 = vld [vmem:[#allocation11 + $0x38] sm:$0xff]
    %v3453 = vld [vmem:[#allocation11 + $0x40] sm:$0xff]
    %v3454 = vld [vmem:[#allocation11 + $0x48] sm:$0xff]
    %v3455 = vld [vmem:[#allocation11 + $0x50] sm:$0xff]
    %v3456 = vld [vmem:[#allocation11 + $0x58] sm:$0xff]
    %v3457 = vld [vmem:[#allocation11 + $0x60] sm:$0xff]
    %v3458 = vld [vmem:[#allocation11 + $0x68] sm:$0xff]
    %v3459 = vld [vmem:[#allocation11 + $0x70] sm:$0xff]
    %v3460 = vld [vmem:[#allocation11 + $0x78] sm:$0xff]
    %v3461 = vld [vmem:[#allocation11 + $0x80] sm:$0xff]
    %v3462 = vld [vmem:[#allocation11 + $0x88] sm:$0xff]
    %v3463 = vld [vmem:[#allocation11 + $0x90] sm:$0xff]
    %v3464 = vld [vmem:[#allocation11 + $0x98] sm:$0xff]
    %v3465 = vld [vmem:[#allocation11 + $0xa0] sm:$0xff]
    %v3466 = vld [vmem:[#allocation11 + $0xa8] sm:$0xff]
    %v3467 = vld [vmem:[#allocation11 + $0xb0] sm:$0xff]
    %v3468 = vld [vmem:[#allocation11 + $0xb8] sm:$0xff]
    %v3469 = vld [vmem:[#allocation11 + $0xc0] sm:$0xff]
    %v3470 = vld [vmem:[#allocation11 + $0xc8] sm:$0xff]
    %v3471 = vld [vmem:[#allocation11 + $0xd0] sm:$0xff]
    %v3472 = vld [vmem:[#allocation11 + $0xd8] sm:$0xff]
    %v3473 = vld [vmem:[#allocation11 + $0xe0] sm:$0xff]
    %v3474 = vld [vmem:[#allocation11 + $0xe8] sm:$0xff]
    %v3475 = vld [vmem:[#allocation11 + $0xf0] sm:$0xff]
    %v3476 = vld [vmem:[#allocation11 + $0xf8] sm:$0xff]
    %v3509 = vunpack.c.l.b16 %v3445
    %v3510 = vunpack.c.h.b16 %v3445
    %v3511 = vunpack.c.l.b16 %v3446
    %v3512 = vunpack.c.h.b16 %v3446
    %v3513 = vunpack.c.l.b16 %v3447
    %v3514 = vunpack.c.h.b16 %v3447
    %v3515 = vunpack.c.l.b16 %v3448
    %v3516 = vunpack.c.h.b16 %v3448
    %v3517 = vunpack.c.l.b16 %v3449
    %v3518 = vunpack.c.h.b16 %v3449
    %v3519 = vunpack.c.l.b16 %v3450
    %v3520 = vunpack.c.h.b16 %v3450
    %v3521 = vunpack.c.l.b16 %v3451
    %v3522 = vunpack.c.h.b16 %v3451
    %v3523 = vunpack.c.l.b16 %v3452
    %v3524 = vunpack.c.h.b16 %v3452
    %v3525 = vunpack.c.l.b16 %v3453
    %v3526 = vunpack.c.h.b16 %v3453
    %v3527 = vunpack.c.l.b16 %v3454
    %v3528 = vunpack.c.h.b16 %v3454
    %v3529 = vunpack.c.l.b16 %v3455
    %v3530 = vunpack.c.h.b16 %v3455
    %v3531 = vunpack.c.l.b16 %v3456
    %v3532 = vunpack.c.h.b16 %v3456
    %v3533 = vunpack.c.l.b16 %v3457
    %v3534 = vunpack.c.h.b16 %v3457
    %v3535 = vunpack.c.l.b16 %v3458
    %v3536 = vunpack.c.h.b16 %v3458
    %v3537 = vunpack.c.l.b16 %v3459
    %v3538 = vunpack.c.h.b16 %v3459
    %v3539 = vunpack.c.l.b16 %v3460
    %v3540 = vunpack.c.h.b16 %v3460
    %v3541 = vunpack.c.l.b16 %v3461
    %v3542 = vunpack.c.h.b16 %v3461
    %v3543 = vunpack.c.l.b16 %v3462
    %v3544 = vunpack.c.h.b16 %v3462
    %v3545 = vunpack.c.l.b16 %v3463
    %v3546 = vunpack.c.h.b16 %v3463
    %v3547 = vunpack.c.l.b16 %v3464
    %v3548 = vunpack.c.h.b16 %v3464
    %v3549 = vunpack.c.l.b16 %v3465
    %v3550 = vunpack.c.h.b16 %v3465
    %v3551 = vunpack.c.l.b16 %v3466
    %v3552 = vunpack.c.h.b16 %v3466
    %v3553 = vunpack.c.l.b16 %v3467
    %v3554 = vunpack.c.h.b16 %v3467
    %v3555 = vunpack.c.l.b16 %v3468
    %v3556 = vunpack.c.h.b16 %v3468
    %v3557 = vunpack.c.l.b16 %v3469
    %v3558 = vunpack.c.h.b16 %v3469
    %v3559 = vunpack.c.l.b16 %v3470
    %v3560 = vunpack.c.h.b16 %v3470
    %v3561 = vunpack.c.l.b16 %v3471
    %v3562 = vunpack.c.h.b16 %v3471
    %v3563 = vunpack.c.l.b16 %v3472
    %v3564 = vunpack.c.h.b16 %v3472
    %v3565 = vunpack.c.l.b16 %v3473
    %v3566 = vunpack.c.h.b16 %v3473
    %v3567 = vunpack.c.l.b16 %v3474
    %v3568 = vunpack.c.h.b16 %v3474
    %v3569 = vunpack.c.l.b16 %v3475
    %v3570 = vunpack.c.h.b16 %v3475
    %v3571 = vunpack.c.l.b16 %v3476
    %v3572 = vunpack.c.h.b16 %v3476
    %v3573 = vpack.c.b16 %v3513, %v3509
    %v3574 = vpack.c.b16 %v3514, %v3510
    %v3575 = vpack.c.b16 %v3515, %v3511
    %v3576 = vpack.c.b16 %v3516, %v3512
    %v3577 = vpack.c.b16 %v3521, %v3517
    %v3578 = vpack.c.b16 %v3522, %v3518
    %v3579 = vpack.c.b16 %v3523, %v3519
    %v3580 = vpack.c.b16 %v3524, %v3520
    %v3581 = vpack.c.b16 %v3529, %v3525
    %v3582 = vpack.c.b16 %v3530, %v3526
    %v3583 = vpack.c.b16 %v3531, %v3527
    %v3584 = vpack.c.b16 %v3532, %v3528
    %v3585 = vpack.c.b16 %v3537, %v3533
    %v3586 = vpack.c.b16 %v3538, %v3534
    %v3587 = vpack.c.b16 %v3539, %v3535
    %v3588 = vpack.c.b16 %v3540, %v3536
    %v3589 = vpack.c.b16 %v3545, %v3541
    %v3590 = vpack.c.b16 %v3546, %v3542
    %v3591 = vpack.c.b16 %v3547, %v3543
    %v3592 = vpack.c.b16 %v3548, %v3544
    %v3593 = vpack.c.b16 %v3553, %v3549
    %v3594 = vpack.c.b16 %v3554, %v3550
    %v3595 = vpack.c.b16 %v3555, %v3551
    %v3596 = vpack.c.b16 %v3556, %v3552
    %v3597 = vpack.c.b16 %v3561, %v3557
    %v3598 = vpack.c.b16 %v3562, %v3558
    %v3599 = vpack.c.b16 %v3563, %v3559
    %v3600 = vpack.c.b16 %v3564, %v3560
    %v3601 = vpack.c.b16 %v3569, %v3565
    %v3602 = vpack.c.b16 %v3570, %v3566
    %v3603 = vpack.c.b16 %v3571, %v3567
    %v3604 = vpack.c.b16 %v3572, %v3568
    %3637 = vmatprep.subr.bf16.mxu0 %v3574
    %3638 = vmatpush1.bf16.msra.mxu0 %v3573
    %3639 = vmatprep.subr.bf16.mxu0 %v3578
    %3640 = vmatpush1.bf16.msra.mxu0 %v3577
    %3641 = vmatprep.subr.bf16.mxu0 %v3582
    %3642 = vmatpush1.bf16.msra.mxu0 %v3581
    %3643 = vmatprep.subr.bf16.mxu0 %v3586
    %3644 = vmatpush1.bf16.msra.mxu0 %v3585
    %3645 = vmatprep.subr.bf16.mxu0 %v3590
    %3646 = vmatpush1.bf16.msra.mxu0 %v3589
    %3647 = vmatprep.subr.bf16.mxu0 %v3594
    %3648 = vmatpush1.bf16.msra.mxu0 %v3593
    %3649 = vmatprep.subr.bf16.mxu0 %v3598
    %3650 = vmatpush1.bf16.msra.mxu0 %v3597
    %3651 = vmatprep.subr.bf16.mxu0 %v3602
    %3652 = vmatpush1.bf16.msra.mxu0 %v3601
    %3653 = vmatprep.subr.bf16.mxu0 0
    %3654 = vmatpush1.bf16.msra.mxu0 0
    %3655 = vmatprep.subr.bf16.mxu0 0
    %3656 = vmatpush1.bf16.msra.mxu0 0
    %3657 = vmatprep.subr.bf16.mxu0 0
    %3658 = vmatpush1.bf16.msra.mxu0 0
    %3659 = vmatprep.subr.bf16.mxu0 0
    %3660 = vmatpush1.bf16.msra.mxu0 0
    %3661 = vmatprep.subr.bf16.mxu0 0
    %3662 = vmatpush1.bf16.msra.mxu0 0
    %3663 = vmatprep.subr.bf16.mxu0 0
    %3664 = vmatpush1.bf16.msra.mxu0 0
    %3665 = vmatprep.subr.bf16.mxu0 0
    %3666 = vmatpush1.bf16.msra.mxu0 0
    %3667 = vmatprep.subr.bf16.mxu0 0
    %3668 = vmatpush1.bf16.msra.mxu0 0
    %3669 = vmatprep.mubr.bf16.mxu0 0
    %3670 = vmatmul.mubr.bf16.gmra.mrb[0].mxu0 0
    %v3671 = vpop.f32.mrb[0].mxu0
    %v3672 = vadd.f32 0.0, %v3671
    %v3673 = vpop.f32.mrb[0].mxu0
    %v3674 = vadd.f32 0.0, %v3673
    %v3675 = vpop.f32.mrb[0].mxu0
    %v3676 = vpop.f32.mrb[0].mxu0
    %3677 = vdwg.mxu0
    %3678 = vmatprep.subr.bf16.mxu0 %v3576
    %3679 = vmatpush1.bf16.msra.mxu0 %v3575
    %3680 = vmatprep.subr.bf16.mxu0 %v3580
    %3681 = vmatpush1.bf16.msra.mxu0 %v3579
    %3682 = vmatprep.subr.bf16.mxu0 %v3584
    %3683 = vmatpush1.bf16.msra.mxu0 %v3583
    %3684 = vmatprep.subr.bf16.mxu0 %v3588
    %3685 = vmatpush1.bf16.msra.mxu0 %v3587
    %3686 = vmatprep.subr.bf16.mxu0 %v3592
    %3687 = vmatpush1.bf16.msra.mxu0 %v3591
    %3688 = vmatprep.subr.bf16.mxu0 %v3596
    %3689 = vmatpush1.bf16.msra.mxu0 %v3595
    %3690 = vmatprep.subr.bf16.mxu0 %v3600
    %3691 = vmatpush1.bf16.msra.mxu0 %v3599
    %3692 = vmatprep.subr.bf16.mxu0 %v3604
    %3693 = vmatpush1.bf16.msra.mxu0 %v3603
    %3694 = vmatprep.subr.bf16.mxu0 0
    %3695 = vmatpush1.bf16.msra.mxu0 0
    %3696 = vmatprep.subr.bf16.mxu0 0
    %3697 = vmatpush1.bf16.msra.mxu0 0
    %3698 = vmatprep.subr.bf16.mxu0 0
    %3699 = vmatpush1.bf16.msra.mxu0 0
    %3700 = vmatprep.subr.bf16.mxu0 0
    %3701 = vmatpush1.bf16.msra.mxu0 0
    %3702 = vmatprep.subr.bf16.mxu0 0
    %3703 = vmatpush1.bf16.msra.mxu0 0
    %3704 = vmatprep.subr.bf16.mxu0 0
    %3705 = vmatpush1.bf16.msra.mxu0 0
    %3706 = vmatprep.subr.bf16.mxu0 0
    %3707 = vmatpush1.bf16.msra.mxu0 0
    %3708 = vmatprep.subr.bf16.mxu0 0
    %3709 = vmatpush1.bf16.msra.mxu0 0
    %3710 = vmatprep.mubr.bf16.mxu0 0
    %3711 = vmatmul.mubr.bf16.gmra.mrb[0].mxu0 0
    %v3712 = vpop.f32.mrb[0].mxu0
    %v3713 = vadd.f32 0.0, %v3712
    %v3714 = vpop.f32.mrb[0].mxu0
    %v3715 = vadd.f32 0.0, %v3714
    %v3716 = vpop.f32.mrb[0].mxu0
    %v3717 = vpop.f32.mrb[0].mxu0
    %3718 = vdwg.mxu0
    %v3719 = vadd.f32 %v3441, %v3672
    %v3720 = vadd.f32 %v3442, %v3674
    %v3721 = vadd.f32 %v3443, %v3713
    %v3722 = vadd.f32 %v3444, %v3715
    %v3723 = vxor.u32 %v3719, 2147483648
    %v3724 = vmul.f32 %v3723, 1.442695
    %v3725 = vpow.pop %v3724
    %v3726 = vadd.f32 %v3725, 1.0
    %v3727 = vrcp.pop %v3726
    %v3728 = vmul.f32 1.0, %v3727
    %v3729 = vxor.u32 %v3720, 2147483648
    %v3730 = vmul.f32 %v3729, 1.442695
    %v3731 = vpow.pop %v3730
    %v3732 = vadd.f32 %v3731, 1.0
    %v3733 = vrcp.pop %v3732
    %v3734 = vmul.f32 1.0, %v3733
    %v3735 = vtanh.pop %v3721
    %v3736 = vxor.u32 %v3722, 2147483648
    %v3737 = vmul.f32 %v3736, 1.442695
    %v3738 = vpow.pop %v3737
    %v3739 = vadd.f32 %v3738, 1.0
    %v3740 = vrcp.pop %v3739
    %v3741 = vmul.f32 1.0, %v3740
    %v3742 = vmul.f32 %v3734, 0.0
    %v3743 = vmul.f32 %v3728, %v3735
    %v3744 = vadd.f32 %v3742, %v3743
    %v3745 = vtanh.pop %v3744
    %v3746 = vmul.f32 %v3741, %v3745
    %3747 = vst [vmem:[#allocation14] sm:$0xff] %v3746
    %v3748 = vld [vmem:[%s855] sm:$0xff]
    %v3749 = vld [vmem:[%s855 + $0x8] sm:$0xff]
    %v3750 = vld [vmem:[%s855 + $0x10] sm:$0xff]
    %v3751 = vld [vmem:[%s855 + $0x18] sm:$0xff]
    %v3752 = vpack.c.bf16 %v3746, %v3746
    %v3753 = vld [vmem:[#allocation11] sm:$0xff]
    %v3754 = vld [vmem:[#allocation11 + $0x8] sm:$0xff]
    %v3755 = vld [vmem:[#allocation11 + $0x10] sm:$0xff]
    %v3756 = vld [vmem:[#allocation11 + $0x18] sm:$0xff]
    %v3757 = vld [vmem:[#allocation11 + $0x20] sm:$0xff]
    %v3758 = vld [vmem:[#allocation11 + $0x28] sm:$0xff]
    %v3759 = vld [vmem:[#allocation11 + $0x30] sm:$0xff]
    %v3760 = vld [vmem:[#allocation11 + $0x38] sm:$0xff]
    %v3761 = vld [vmem:[#allocation11 + $0x40] sm:$0xff]
    %v3762 = vld [vmem:[#allocation11 + $0x48] sm:$0xff]
    %v3763 = vld [vmem:[#allocation11 + $0x50] sm:$0xff]
    %v3764 = vld [vmem:[#allocation11 + $0x58] sm:$0xff]
    %v3765 = vld [vmem:[#allocation11 + $0x60] sm:$0xff]
    %v3766 = vld [vmem:[#allocation11 + $0x68] sm:$0xff]
    %v3767 = vld [vmem:[#allocation11 + $0x70] sm:$0xff]
    %v3768 = vld [vmem:[#allocation11 + $0x78] sm:$0xff]
    %v3769 = vld [vmem:[#allocation11 + $0x80] sm:$0xff]
    %v3770 = vld [vmem:[#allocation11 + $0x88] sm:$0xff]
    %v3771 = vld [vmem:[#allocation11 + $0x90] sm:$0xff]
    %v3772 = vld [vmem:[#allocation11 + $0x98] sm:$0xff]
    %v3773 = vld [vmem:[#allocation11 + $0xa0] sm:$0xff]
    %v3774 = vld [vmem:[#allocation11 + $0xa8] sm:$0xff]
    %v3775 = vld [vmem:[#allocation11 + $0xb0] sm:$0xff]
    %v3776 = vld [vmem:[#allocation11 + $0xb8] sm:$0xff]
    %v3777 = vld [vmem:[#allocation11 + $0xc0] sm:$0xff]
    %v3778 = vld [vmem:[#allocation11 + $0xc8] sm:$0xff]
    %v3779 = vld [vmem:[#allocation11 + $0xd0] sm:$0xff]
    %v3780 = vld [vmem:[#allocation11 + $0xd8] sm:$0xff]
    %v3781 = vld [vmem:[#allocation11 + $0xe0] sm:$0xff]
    %v3782 = vld [vmem:[#allocation11 + $0xe8] sm:$0xff]
    %v3783 = vld [vmem:[#allocation11 + $0xf0] sm:$0xff]
    %v3784 = vld [vmem:[#allocation11 + $0xf8] sm:$0xff]
    %v3817 = vunpack.c.l.b16 %v3753
    %v3818 = vunpack.c.h.b16 %v3753
    %v3819 = vunpack.c.l.b16 %v3754
    %v3820 = vunpack.c.h.b16 %v3754
    %v3821 = vunpack.c.l.b16 %v3755
    %v3822 = vunpack.c.h.b16 %v3755
    %v3823 = vunpack.c.l.b16 %v3756
    %v3824 = vunpack.c.h.b16 %v3756
    %v3825 = vunpack.c.l.b16 %v3757
    %v3826 = vunpack.c.h.b16 %v3757
    %v3827 = vunpack.c.l.b16 %v3758
    %v3828 = vunpack.c.h.b16 %v3758
    %v3829 = vunpack.c.l.b16 %v3759
    %v3830 = vunpack.c.h.b16 %v3759
    %v3831 = vunpack.c.l.b16 %v3760
    %v3832 = vunpack.c.h.b16 %v3760
    %v3833 = vunpack.c.l.b16 %v3761
    %v3834 = vunpack.c.h.b16 %v3761
    %v3835 = vunpack.c.l.b16 %v3762
    %v3836 = vunpack.c.h.b16 %v3762
    %v3837 = vunpack.c.l.b16 %v3763
    %v3838 = vunpack.c.h.b16 %v3763
    %v3839 = vunpack.c.l.b16 %v3764
    %v3840 = vunpack.c.h.b16 %v3764
    %v3841 = vunpack.c.l.b16 %v3765
    %v3842 = vunpack.c.h.b16 %v3765
    %v3843 = vunpack.c.l.b16 %v3766
    %v3844 = vunpack.c.h.b16 %v3766
    %v3845 = vunpack.c.l.b16 %v3767
    %v3846 = vunpack.c.h.b16 %v3767
    %v3847 = vunpack.c.l.b16 %v3768
    %v3848 = vunpack.c.h.b16 %v3768
    %v3849 = vunpack.c.l.b16 %v3769
    %v3850 = vunpack.c.h.b16 %v3769
    %v3851 = vunpack.c.l.b16 %v3770
    %v3852 = vunpack.c.h.b16 %v3770
    %v3853 = vunpack.c.l.b16 %v3771
    %v3854 = vunpack.c.h.b16 %v3771
    %v3855 = vunpack.c.l.b16 %v3772
    %v3856 = vunpack.c.h.b16 %v3772
    %v3857 = vunpack.c.l.b16 %v3773
    %v3858 = vunpack.c.h.b16 %v3773
    %v3859 = vunpack.c.l.b16 %v3774
    %v3860 = vunpack.c.h.b16 %v3774
    %v3861 = vunpack.c.l.b16 %v3775
    %v3862 = vunpack.c.h.b16 %v3775
    %v3863 = vunpack.c.l.b16 %v3776
    %v3864 = vunpack.c.h.b16 %v3776
    %v3865 = vunpack.c.l.b16 %v3777
    %v3866 = vunpack.c.h.b16 %v3777
    %v3867 = vunpack.c.l.b16 %v3778
    %v3868 = vunpack.c.h.b16 %v3778
    %v3869 = vunpack.c.l.b16 %v3779
    %v3870 = vunpack.c.h.b16 %v3779
    %v3871 = vunpack.c.l.b16 %v3780
    %v3872 = vunpack.c.h.b16 %v3780
    %v3873 = vunpack.c.l.b16 %v3781
    %v3874 = vunpack.c.h.b16 %v3781
    %v3875 = vunpack.c.l.b16 %v3782
    %v3876 = vunpack.c.h.b16 %v3782
    %v3877 = vunpack.c.l.b16 %v3783
    %v3878 = vunpack.c.h.b16 %v3783
    %v3879 = vunpack.c.l.b16 %v3784
    %v3880 = vunpack.c.h.b16 %v3784
    %v3881 = vpack.c.b16 %v3821, %v3817
    %v3882 = vpack.c.b16 %v3822, %v3818
    %v3883 = vpack.c.b16 %v3823, %v3819
    %v3884 = vpack.c.b16 %v3824, %v3820
    %v3885 = vpack.c.b16 %v3829, %v3825
    %v3886 = vpack.c.b16 %v3830, %v3826
    %v3887 = vpack.c.b16 %v3831, %v3827
    %v3888 = vpack.c.b16 %v3832, %v3828
    %v3889 = vpack.c.b16 %v3837, %v3833
    %v3890 = vpack.c.b16 %v3838, %v3834
    %v3891 = vpack.c.b16 %v3839, %v3835
    %v3892 = vpack.c.b16 %v3840, %v3836
    %v3893 = vpack.c.b16 %v3845, %v3841
    %v3894 = vpack.c.b16 %v3846, %v3842
    %v3895 = vpack.c.b16 %v3847, %v3843
    %v3896 = vpack.c.b16 %v3848, %v3844
    %v3897 = vpack.c.b16 %v3853, %v3849
    %v3898 = vpack.c.b16 %v3854, %v3850
    %v3899 = vpack.c.b16 %v3855, %v3851
    %v3900 = vpack.c.b16 %v3856, %v3852
    %v3901 = vpack.c.b16 %v3861, %v3857
    %v3902 = vpack.c.b16 %v3862, %v3858
    %v3903 = vpack.c.b16 %v3863, %v3859
    %v3904 = vpack.c.b16 %v3864, %v3860
    %v3905 = vpack.c.b16 %v3869, %v3865
    %v3906 = vpack.c.b16 %v3870, %v3866
    %v3907 = vpack.c.b16 %v3871, %v3867
    %v3908 = vpack.c.b16 %v3872, %v3868
    %v3909 = vpack.c.b16 %v3877, %v3873
    %v3910 = vpack.c.b16 %v3878, %v3874
    %v3911 = vpack.c.b16 %v3879, %v3875
    %v3912 = vpack.c.b16 %v3880, %v3876
    %3945 = vmatprep.subr.bf16.mxu0 %v3882
    %3946 = vmatpush1.bf16.msra.mxu0 %v3881
    %3947 = vmatprep.subr.bf16.mxu0 %v3886
    %3948 = vmatpush1.bf16.msra.mxu0 %v3885
    %3949 = vmatprep.subr.bf16.mxu0 %v3890
    %3950 = vmatpush1.bf16.msra.mxu0 %v3889
    %3951 = vmatprep.subr.bf16.mxu0 %v3894
    %3952 = vmatpush1.bf16.msra.mxu0 %v3893
    %3953 = vmatprep.subr.bf16.mxu0 %v3898
    %3954 = vmatpush1.bf16.msra.mxu0 %v3897
    %3955 = vmatprep.subr.bf16.mxu0 %v3902
    %3956 = vmatpush1.bf16.msra.mxu0 %v3901
    %3957 = vmatprep.subr.bf16.mxu0 %v3906
    %3958 = vmatpush1.bf16.msra.mxu0 %v3905
    %3959 = vmatprep.subr.bf16.mxu0 %v3910
    %3960 = vmatpush1.bf16.msra.mxu0 %v3909
    %3961 = vmatprep.subr.bf16.mxu0 0
    %3962 = vmatpush1.bf16.msra.mxu0 0
    %3963 = vmatprep.subr.bf16.mxu0 0
    %3964 = vmatpush1.bf16.msra.mxu0 0
    %3965 = vmatprep.subr.bf16.mxu0 0
    %3966 = vmatpush1.bf16.msra.mxu0 0
    %3967 = vmatprep.subr.bf16.mxu0 0
    %3968 = vmatpush1.bf16.msra.mxu0 0
    %3969 = vmatprep.subr.bf16.mxu0 0
    %3970 = vmatpush1.bf16.msra.mxu0 0
    %3971 = vmatprep.subr.bf16.mxu0 0
    %3972 = vmatpush1.bf16.msra.mxu0 0
    %3973 = vmatprep.subr.bf16.mxu0 0
    %3974 = vmatpush1.bf16.msra.mxu0 0
    %3975 = vmatprep.subr.bf16.mxu0 0
    %3976 = vmatpush1.bf16.msra.mxu0 0
    %3977 = vmatprep.mubr.bf16.mxu0 0
    %3978 = vmatmul.mubr.bf16.gmra.mrb[0].mxu0 %v3752
    %v3979 = vpop.f32.mrb[0].mxu0
    %v3980 = vadd.f32 0.0, %v3979
    %v3981 = vpop.f32.mrb[0].mxu0
    %v3982 = vadd.f32 0.0, %v3981
    %v3983 = vpop.f32.mrb[0].mxu0
    %v3984 = vpop.f32.mrb[0].mxu0
    %3985 = vdwg.mxu0
    %3986 = vmatprep.subr.bf16.mxu0 %v3884
    %3987 = vmatpush1.bf16.msra.mxu0 %v3883
    %3988 = vmatprep.subr.bf16.mxu0 %v3888
    %3989 = vmatpush1.bf16.msra.mxu0 %v3887
    %3990 = vmatprep.subr.bf16.mxu0 %v3892
    %3991 = vmatpush1.bf16.msra.mxu0 %v3891
    %3992 = vmatprep.subr.bf16.mxu0 %v3896
    %3993 = vmatpush1.bf16.msra.mxu0 %v3895
    %3994 = vmatprep.subr.bf16.mxu0 %v3900
    %3995 = vmatpush1.bf16.msra.mxu0 %v3899
    %3996 = vmatprep.subr.bf16.mxu0 %v3904
    %3997 = vmatpush1.bf16.msra.mxu0 %v3903
    %3998 = vmatprep.subr.bf16.mxu0 %v3908
    %3999 = vmatpush1.bf16.msra.mxu0 %v3907
    %4000 = vmatprep.subr.bf16.mxu0 %v3912
    %4001 = vmatpush1.bf16.msra.mxu0 %v3911
    %4002 = vmatprep.subr.bf16.mxu0 0
    %4003 = vmatpush1.bf16.msra.mxu0 0
    %4004 = vmatprep.subr.bf16.mxu0 0
    %4005 = vmatpush1.bf16.msra.mxu0 0
    %4006 = vmatprep.subr.bf16.mxu0 0
    %4007 = vmatpush1.bf16.msra.mxu0 0
    %4008 = vmatprep.subr.bf16.mxu0 0
    %4009 = vmatpush1.bf16.msra.mxu0 0
    %4010 = vmatprep.subr.bf16.mxu0 0
    %4011 = vmatpush1.bf16.msra.mxu0 0
    %4012 = vmatprep.subr.bf16.mxu0 0
    %4013 = vmatpush1.bf16.msra.mxu0 0
    %4014 = vmatprep.subr.bf16.mxu0 0
    %4015 = vmatpush1.bf16.msra.mxu0 0
    %4016 = vmatprep.subr.bf16.mxu0 0
    %4017 = vmatpush1.bf16.msra.mxu0 0
    %4018 = vmatprep.mubr.bf16.mxu0 0
    %4019 = vmatmul.mubr.bf16.gmra.mrb[0].mxu0 %v3752
    %v4020 = vpop.f32.mrb[0].mxu0
    %v4021 = vadd.f32 0.0, %v4020
    %v4022 = vpop.f32.mrb[0].mxu0
    %v4023 = vadd.f32 0.0, %v4022
    %v4024 = vpop.f32.mrb[0].mxu0
    %v4025 = vpop.f32.mrb[0].mxu0
    %4026 = vdwg.mxu0
    %v4027 = vadd.f32 %v3748, %v3980
    %v4028 = vadd.f32 %v3749, %v3982
    %v4029 = vadd.f32 %v3750, %v4021
    %v4030 = vadd.f32 %v3751, %v4023
    %v4031 = vxor.u32 %v4027, 2147483648
    %v4032 = vmul.f32 %v4031, 1.442695
    %v4033 = vpow.pop %v4032
    %v4034 = vadd.f32 %v4033, 1.0
    %v4035 = vrcp.pop %v4034
    %v4036 = vmul.f32 1.0, %v4035
    %v4037 = vxor.u32 %v4028, 2147483648
    %v4038 = vmul.f32 %v4037, 1.442695
    %v4039 = vpow.pop %v4038
    %v4040 = vadd.f32 %v4039, 1.0
    %v4041 = vrcp.pop %v4040
    %v4042 = vmul.f32 1.0, %v4041
    %v4043 = vtanh.pop %v4029
    %v4044 = vxor.u32 %v4030, 2147483648
    %v4045 = vmul.f32 %v4044, 1.442695
    %v4046 = vpow.pop %v4045
    %v4047 = vadd.f32 %v4046, 1.0
    %v4048 = vrcp.pop %v4047
    %v4049 = vmul.f32 1.0, %v4048
    %v4050 = vmul.f32 %v4042, %v3744
    %v4051 = vmul.f32 %v4036, %v4043
    %v4052 = vadd.f32 %v4050, %v4051
    %v4053 = vtanh.pop %v4052
    %v4054 = vmul.f32 %v4049, %v4053
    %4055 = vst [vmem:[%s1163] sm:$0xff] %v4054
    %v4056 = vld [vmem:[%s1167] sm:$0xff]
    %v4057 = vld [vmem:[%s1167 + $0x8] sm:$0xff]
    %v4058 = vld [vmem:[%s1167 + $0x10] sm:$0xff]
    %v4059 = vld [vmem:[%s1167 + $0x18] sm:$0xff]
    %v4060 = vpack.c.bf16 %v4054, %v4054
    %v4061 = vld [vmem:[#allocation11] sm:$0xff]
    %v4062 = vld [vmem:[#allocation11 + $0x8] sm:$0xff]
    %v4063 = vld [vmem:[#allocation11 + $0x10] sm:$0xff]
    %v4064 = vld [vmem:[#allocation11 + $0x18] sm:$0xff]
    %v4065 = vld [vmem:[#allocation11 + $0x20] sm:$0xff]
    %v4066 = vld [vmem:[#allocation11 + $0x28] sm:$0xff]
    %v4067 = vld [vmem:[#allocation11 + $0x30] sm:$0xff]
    %v4068 = vld [vmem:[#allocation11 + $0x38] sm:$0xff]
    %v4069 = vld [vmem:[#allocation11 + $0x40] sm:$0xff]
    %v4070 = vld [vmem:[#allocation11 + $0x48] sm:$0xff]
    %v4071 = vld [vmem:[#allocation11 + $0x50] sm:$0xff]
    %v4072 = vld [vmem:[#allocation11 + $0x58] sm:$0xff]
    %v4073 = vld [vmem:[#allocation11 + $0x60] sm:$0xff]
    %v4074 = vld [vmem:[#allocation11 + $0x68] sm:$0xff]
    %v4075 = vld [vmem:[#allocation11 + $0x70] sm:$0xff]
    %v4076 = vld [vmem:[#allocation11 + $0x78] sm:$0xff]
    %v4077 = vld [vmem:[#allocation11 + $0x80] sm:$0xff]
    %v4078 = vld [vmem:[#allocation11 + $0x88] sm:$0xff]
    %v4079 = vld [vmem:[#allocation11 + $0x90] sm:$0xff]
    %v4080 = vld [vmem:[#allocation11 + $0x98] sm:$0xff]
    %v4081 = vld [vmem:[#allocation11 + $0xa0] sm:$0xff]
    %v4082 = vld [vmem:[#allocation11 + $0xa8] sm:$0xff]
    %v4083 = vld [vmem:[#allocation11 + $0xb0] sm:$0xff]
    %v4084 = vld [vmem:[#allocation11 + $0xb8] sm:$0xff]
    %v4085 = vld [vmem:[#allocation11 + $0xc0] sm:$0xff]
    %v4086 = vld [vmem:[#allocation11 + $0xc8] sm:$0xff]
    %v4087 = vld [vmem:[#allocation11 + $0xd0] sm:$0xff]
    %v4088 = vld [vmem:[#allocation11 + $0xd8] sm:$0xff]
    %v4089 = vld [vmem:[#allocation11 + $0xe0] sm:$0xff]
    %v4090 = vld [vmem:[#allocation11 + $0xe8] sm:$0xff]
    %v4091 = vld [vmem:[#allocation11 + $0xf0] sm:$0xff]
    %v4092 = vld [vmem:[#allocation11 + $0xf8] sm:$0xff]
    %v4125 = vunpack.c.l.b16 %v4061
    %v4126 = vunpack.c.h.b16 %v4061
    %v4127 = vunpack.c.l.b16 %v4062
    %v4128 = vunpack.c.h.b16 %v4062
    %v4129 = vunpack.c.l.b16 %v4063
    %v4130 = vunpack.c.h.b16 %v4063
    %v4131 = vunpack.c.l.b16 %v4064
    %v4132 = vunpack.c.h.b16 %v4064
    %v4133 = vunpack.c.l.b16 %v4065
    %v4134 = vunpack.c.h.b16 %v4065
    %v4135 = vunpack.c.l.b16 %v4066
    %v4136 = vunpack.c.h.b16 %v4066
    %v4137 = vunpack.c.l.b16 %v4067
    %v4138 = vunpack.c.h.b16 %v4067
    %v4139 = vunpack.c.l.b16 %v4068
    %v4140 = vunpack.c.h.b16 %v4068
    %v4141 = vunpack.c.l.b16 %v4069
    %v4142 = vunpack.c.h.b16 %v4069
    %v4143 = vunpack.c.l.b16 %v4070
    %v4144 = vunpack.c.h.b16 %v4070
    %v4145 = vunpack.c.l.b16 %v4071
    %v4146 = vunpack.c.h.b16 %v4071
    %v4147 = vunpack.c.l.b16 %v4072
    %v4148 = vunpack.c.h.b16 %v4072
    %v4149 = vunpack.c.l.b16 %v4073
    %v4150 = vunpack.c.h.b16 %v4073
    %v4151 = vunpack.c.l.b16 %v4074
    %v4152 = vunpack.c.h.b16 %v4074
    %v4153 = vunpack.c.l.b16 %v4075
    %v4154 = vunpack.c.h.b16 %v4075
    %v4155 = vunpack.c.l.b16 %v4076
    %v4156 = vunpack.c.h.b16 %v4076
    %v4157 = vunpack.c.l.b16 %v4077
    %v4158 = vunpack.c.h.b16 %v4077
    %v4159 = vunpack.c.l.b16 %v4078
    %v4160 = vunpack.c.h.b16 %v4078
    %v4161 = vunpack.c.l.b16 %v4079
    %v4162 = vunpack.c.h.b16 %v4079
    %v4163 = vunpack.c.l.b16 %v4080
    %v4164 = vunpack.c.h.b16 %v4080
    %v4165 = vunpack.c.l.b16 %v4081
    %v4166 = vunpack.c.h.b16 %v4081
    %v4167 = vunpack.c.l.b16 %v4082
    %v4168 = vunpack.c.h.b16 %v4082
    %v4169 = vunpack.c.l.b16 %v4083
    %v4170 = vunpack.c.h.b16 %v4083
    %v4171 = vunpack.c.l.b16 %v4084
    %v4172 = vunpack.c.h.b16 %v4084
    %v4173 = vunpack.c.l.b16 %v4085
    %v4174 = vunpack.c.h.b16 %v4085
    %v4175 = vunpack.c.l.b16 %v4086
    %v4176 = vunpack.c.h.b16 %v4086
    %v4177 = vunpack.c.l.b16 %v4087
    %v4178 = vunpack.c.h.b16 %v4087
    %v4179 = vunpack.c.l.b16 %v4088
    %v4180 = vunpack.c.h.b16 %v4088
    %v4181 = vunpack.c.l.b16 %v4089
    %v4182 = vunpack.c.h.b16 %v4089
    %v4183 = vunpack.c.l.b16 %v4090
    %v4184 = vunpack.c.h.b16 %v4090
    %v4185 = vunpack.c.l.b16 %v4091
    %v4186 = vunpack.c.h.b16 %v4091
    %v4187 = vunpack.c.l.b16 %v4092
    %v4188 = vunpack.c.h.b16 %v4092
    %v4189 = vpack.c.b16 %v4129, %v4125
    %v4190 = vpack.c.b16 %v4130, %v4126
    %v4191 = vpack.c.b16 %v4131, %v4127
    %v4192 = vpack.c.b16 %v4132, %v4128
    %v4193 = vpack.c.b16 %v4137, %v4133
    %v4194 = vpack.c.b16 %v4138, %v4134
    %v4195 = vpack.c.b16 %v4139, %v4135
    %v4196 = vpack.c.b16 %v4140, %v4136
    %v4197 = vpack.c.b16 %v4145, %v4141
    %v4198 = vpack.c.b16 %v4146, %v4142
    %v4199 = vpack.c.b16 %v4147, %v4143
    %v4200 = vpack.c.b16 %v4148, %v4144
    %v4201 = vpack.c.b16 %v4153, %v4149
    %v4202 = vpack.c.b16 %v4154, %v4150
    %v4203 = vpack.c.b16 %v4155, %v4151
    %v4204 = vpack.c.b16 %v4156, %v4152
    %v4205 = vpack.c.b16 %v4161, %v4157
    %v4206 = vpack.c.b16 %v4162, %v4158
    %v4207 = vpack.c.b16 %v4163, %v4159
    %v4208 = vpack.c.b16 %v4164, %v4160
    %v4209 = vpack.c.b16 %v4169, %v4165
    %v4210 = vpack.c.b16 %v4170, %v4166
    %v4211 = vpack.c.b16 %v4171, %v4167
    %v4212 = vpack.c.b16 %v4172, %v4168
    %v4213 = vpack.c.b16 %v4177, %v4173
    %v4214 = vpack.c.b16 %v4178, %v4174
    %v4215 = vpack.c.b16 %v4179, %v4175
    %v4216 = vpack.c.b16 %v4180, %v4176
    %v4217 = vpack.c.b16 %v4185, %v4181
    %v4218 = vpack.c.b16 %v4186, %v4182
    %v4219 = vpack.c.b16 %v4187, %v4183
    %v4220 = vpack.c.b16 %v4188, %v4184
    %4253 = vmatprep.subr.bf16.mxu0 %v4190
    %4254 = vmatpush1.bf16.msra.mxu0 %v4189
    %4255 = vmatprep.subr.bf16.mxu0 %v4194
    %4256 = vmatpush1.bf16.msra.mxu0 %v4193
    %4257 = vmatprep.subr.bf16.mxu0 %v4198
    %4258 = vmatpush1.bf16.msra.mxu0 %v4197
    %4259 = vmatprep.subr.bf16.mxu0 %v4202
    %4260 = vmatpush1.bf16.msra.mxu0 %v4201
    %4261 = vmatprep.subr.bf16.mxu0 %v4206
    %4262 = vmatpush1.bf16.msra.mxu0 %v4205
    %4263 = vmatprep.subr.bf16.mxu0 %v4210
    %4264 = vmatpush1.bf16.msra.mxu0 %v4209
    %4265 = vmatprep.subr.bf16.mxu0 %v4214
    %4266 = vmatpush1.bf16.msra.mxu0 %v4213
    %4267 = vmatprep.subr.bf16.mxu0 %v4218
    %4268 = vmatpush1.bf16.msra.mxu0 %v4217
    %4269 = vmatprep.subr.bf16.mxu0 0
    %4270 = vmatpush1.bf16.msra.mxu0 0
    %4271 = vmatprep.subr.bf16.mxu0 0
    %4272 = vmatpush1.bf16.msra.mxu0 0
    %4273 = vmatprep.subr.bf16.mxu0 0
    %4274 = vmatpush1.bf16.msra.mxu0 0
    %4275 = vmatprep.subr.bf16.mxu0 0
    %4276 = vmatpush1.bf16.msra.mxu0 0
    %4277 = vmatprep.subr.bf16.mxu0 0
    %4278 = vmatpush1.bf16.msra.mxu0 0
    %4279 = vmatprep.subr.bf16.mxu0 0
    %4280 = vmatpush1.bf16.msra.mxu0 0
    %4281 = vmatprep.subr.bf16.mxu0 0
    %4282 = vmatpush1.bf16.msra.mxu0 0
    %4283 = vmatprep.subr.bf16.mxu0 0
    %4284 = vmatpush1.bf16.msra.mxu0 0
    %4285 = vmatprep.mubr.bf16.mxu0 0
    %4286 = vmatmul.mubr.bf16.gmra.mrb[0].mxu0 %v4060
    %v4287 = vpop.f32.mrb[0].mxu0
    %v4288 = vadd.f32 0.0, %v4287
    %v4289 = vpop.f32.mrb[0].mxu0
    %v4290 = vadd.f32 0.0, %v4289
    %v4291 = vpop.f32.mrb[0].mxu0
    %v4292 = vpop.f32.mrb[0].mxu0
    %4293 = vdwg.mxu0
    %4294 = vmatprep.subr.bf16.mxu0 %v4192
    %4295 = vmatpush1.bf16.msra.mxu0 %v4191
    %4296 = vmatprep.subr.bf16.mxu0 %v4196
    %4297 = vmatpush1.bf16.msra.mxu0 %v4195
    %4298 = vmatprep.subr.bf16.mxu0 %v4200
    %4299 = vmatpush1.bf16.msra.mxu0 %v4199
    %4300 = vmatprep.subr.bf16.mxu0 %v4204
    %4301 = vmatpush1.bf16.msra.mxu0 %v4203
    %4302 = vmatprep.subr.bf16.mxu0 %v4208
    %4303 = vmatpush1.bf16.msra.mxu0 %v4207
    %4304 = vmatprep.subr.bf16.mxu0 %v4212
    %4305 = vmatpush1.bf16.msra.mxu0 %v4211
    %4306 = vmatprep.subr.bf16.mxu0 %v4216
    %4307 = vmatpush1.bf16.msra.mxu0 %v4215
    %4308 = vmatprep.subr.bf16.mxu0 %v4220
    %4309 = vmatpush1.bf16.msra.mxu0 %v4219
    %4310 = vmatprep.subr.bf16.mxu0 0
    %4311 = vmatpush1.bf16.msra.mxu0 0
    %4312 = vmatprep.subr.bf16.mxu0 0
    %4313 = vmatpush1.bf16.msra.mxu0 0
    %4314 = vmatprep.subr.bf16.mxu0 0
    %4315 = vmatpush1.bf16.msra.mxu0 0
    %4316 = vmatprep.subr.bf16.mxu0 0
    %4317 = vmatpush1.bf16.msra.mxu0 0
    %4318 = vmatprep.subr.bf16.mxu0 0
    %4319 = vmatpush1.bf16.msra.mxu0 0
    %4320 = vmatprep.subr.bf16.mxu0 0
    %4321 = vmatpush1.bf16.msra.mxu0 0
    %4322 = vmatprep.subr.bf16.mxu0 0
    %4323 = vmatpush1.bf16.msra.mxu0 0
    %4324 = vmatprep.subr.bf16.mxu0 0
    %4325 = vmatpush1.bf16.msra.mxu0 0
    %4326 = vmatprep.mubr.bf16.mxu0 0
    %4327 = vmatmul.mubr.bf16.gmra.mrb[0].mxu0 %v4060
    %v4328 = vpop.f32.mrb[0].mxu0
    %v4329 = vadd.f32 0.0, %v4328
    %v4330 = vpop.f32.mrb[0].mxu0
    %v4331 = vadd.f32 0.0, %v4330
    %v4332 = vpop.f32.mrb[0].mxu0
    %v4333 = vpop.f32.mrb[0].mxu0
    %4334 = vdwg.mxu0
    %v4335 = vadd.f32 %v4056, %v4288
    %v4336 = vadd.f32 %v4057, %v4290
    %v4337 = vadd.f32 %v4058, %v4329
    %v4338 = vadd.f32 %v4059, %v4331
    %v4339 = vxor.u32 %v4335, 2147483648
    %v4340 = vmul.f32 %v4339, 1.442695
    %v4341 = vpow.pop %v4340
    %v4342 = vadd.f32 %v4341, 1.0
    %v4343 = vrcp.pop %v4342
    %v4344 = vmul.f32 1.0, %v4343
    %v4345 = vxor.u32 %v4336, 2147483648
    %v4346 = vmul.f32 %v4345, 1.442695
    %v4347 = vpow.pop %v4346
    %v4348 = vadd.f32 %v4347, 1.0
    %v4349 = vrcp.pop %v4348
    %v4350 = vmul.f32 1.0, %v4349
    %v4351 = vtanh.pop %v4337
    %v4352 = vxor.u32 %v4338, 2147483648
    %v4353 = vmul.f32 %v4352, 1.442695
    %v4354 = vpow.pop %v4353
    %v4355 = vadd.f32 %v4354, 1.0
    %v4356 = vrcp.pop %v4355
    %v4357 = vmul.f32 1.0, %v4356
    %v4358 = vmul.f32 %v4350, %v4052
    %v4359 = vmul.f32 %v4344, %v4351
    %v4360 = vadd.f32 %v4358, %v4359
    %v4361 = vtanh.pop %v4360
    %v4362 = vmul.f32 %v4357, %v4361
    %4363 = vst [vmem:[%s1475] sm:$0xff] %v4362
    %v4364 = vld [vmem:[%s1479] sm:$0xff]
    %v4365 = vld [vmem:[%s1479 + $0x8] sm:$0xff]
    %v4366 = vld [vmem:[%s1479 + $0x10] sm:$0xff]
    %v4367 = vld [vmem:[%s1479 + $0x18] sm:$0xff]
    %v4368 = vpack.c.bf16 %v4362, %v4362
    %v4369 = vld [vmem:[#allocation11] sm:$0xff]
    %v4370 = vld [vmem:[#allocation11 + $0x8] sm:$0xff]
    %v4371 = vld [vmem:[#allocation11 + $0x10] sm:$0xff]
    %v4372 = vld [vmem:[#allocation11 + $0x18] sm:$0xff]
    %v4373 = vld [vmem:[#allocation11 + $0x20] sm:$0xff]
    %v4374 = vld [vmem:[#allocation11 + $0x28] sm:$0xff]
    %v4375 = vld [vmem:[#allocation11 + $0x30] sm:$0xff]
    %v4376 = vld [vmem:[#allocation11 + $0x38] sm:$0xff]
    %v4377 = vld [vmem:[#allocation11 + $0x40] sm:$0xff]
    %v4378 = vld [vmem:[#allocation11 + $0x48] sm:$0xff]
    %v4379 = vld [vmem:[#allocation11 + $0x50] sm:$0xff]
    %v4380 = vld [vmem:[#allocation11 + $0x58] sm:$0xff]
    %v4381 = vld [vmem:[#allocation11 + $0x60] sm:$0xff]
    %v4382 = vld [vmem:[#allocation11 + $0x68] sm:$0xff]
    %v4383 = vld [vmem:[#allocation11 + $0x70] sm:$0xff]
    %v4384 = vld [vmem:[#allocation11 + $0x78] sm:$0xff]
    %v4385 = vld [vmem:[#allocation11 + $0x80] sm:$0xff]
    %v4386 = vld [vmem:[#allocation11 + $0x88] sm:$0xff]
    %v4387 = vld [vmem:[#allocation11 + $0x90] sm:$0xff]
    %v4388 = vld [vmem:[#allocation11 + $0x98] sm:$0xff]
    %v4389 = vld [vmem:[#allocation11 + $0xa0] sm:$0xff]
    %v4390 = vld [vmem:[#allocation11 + $0xa8] sm:$0xff]
    %v4391 = vld [vmem:[#allocation11 + $0xb0] sm:$0xff]
    %v4392 = vld [vmem:[#allocation11 + $0xb8] sm:$0xff]
    %v4393 = vld [vmem:[#allocation11 + $0xc0] sm:$0xff]
    %v4394 = vld [vmem:[#allocation11 + $0xc8] sm:$0xff]
    %v4395 = vld [vmem:[#allocation11 + $0xd0] sm:$0xff]
    %v4396 = vld [vmem:[#allocation11 + $0xd8] sm:$0xff]
    %v4397 = vld [vmem:[#allocation11 + $0xe0] sm:$0xff]
    %v4398 = vld [vmem:[#allocation11 + $0xe8] sm:$0xff]
    %v4399 = vld [vmem:[#allocation11 + $0xf0] sm:$0xff]
    %v4400 = vld [vmem:[#allocation11 + $0xf8] sm:$0xff]
    %v4433 = vunpack.c.l.b16 %v4369
    %v4434 = vunpack.c.h.b16 %v4369
    %v4435 = vunpack.c.l.b16 %v4370
    %v4436 = vunpack.c.h.b16 %v4370
    %v4437 = vunpack.c.l.b16 %v4371
    %v4438 = vunpack.c.h.b16 %v4371
    %v4439 = vunpack.c.l.b16 %v4372
    %v4440 = vunpack.c.h.b16 %v4372
    %v4441 = vunpack.c.l.b16 %v4373
    %v4442 = vunpack.c.h.b16 %v4373
    %v4443 = vunpack.c.l.b16 %v4374
    %v4444 = vunpack.c.h.b16 %v4374
    %v4445 = vunpack.c.l.b16 %v4375
    %v4446 = vunpack.c.h.b16 %v4375
    %v4447 = vunpack.c.l.b16 %v4376
    %v4448 = vunpack.c.h.b16 %v4376
    %v4449 = vunpack.c.l.b16 %v4377
    %v4450 = vunpack.c.h.b16 %v4377
    %v4451 = vunpack.c.l.b16 %v4378
    %v4452 = vunpack.c.h.b16 %v4378
    %v4453 = vunpack.c.l.b16 %v4379
    %v4454 = vunpack.c.h.b16 %v4379
    %v4455 = vunpack.c.l.b16 %v4380
    %v4456 = vunpack.c.h.b16 %v4380
    %v4457 = vunpack.c.l.b16 %v4381
    %v4458 = vunpack.c.h.b16 %v4381
    %v4459 = vunpack.c.l.b16 %v4382
    %v4460 = vunpack.c.h.b16 %v4382
    %v4461 = vunpack.c.l.b16 %v4383
    %v4462 = vunpack.c.h.b16 %v4383
    %v4463 = vunpack.c.l.b16 %v4384
    %v4464 = vunpack.c.h.b16 %v4384
    %v4465 = vunpack.c.l.b16 %v4385
    %v4466 = vunpack.c.h.b16 %v4385
    %v4467 = vunpack.c.l.b16 %v4386
    %v4468 = vunpack.c.h.b16 %v4386
    %v4469 = vunpack.c.l.b16 %v4387
    %v4470 = vunpack.c.h.b16 %v4387
    %v4471 = vunpack.c.l.b16 %v4388
    %v4472 = vunpack.c.h.b16 %v4388
    %v4473 = vunpack.c.l.b16 %v4389
    %v4474 = vunpack.c.h.b16 %v4389
    %v4475 = vunpack.c.l.b16 %v4390
    %v4476 = vunpack.c.h.b16 %v4390
    %v4477 = vunpack.c.l.b16 %v4391
    %v4478 = vunpack.c.h.b16 %v4391
    %v4479 = vunpack.c.l.b16 %v4392
    %v4480 = vunpack.c.h.b16 %v4392
    %v4481 = vunpack.c.l.b16 %v4393
    %v4482 = vunpack.c.h.b16 %v4393
    %v4483 = vunpack.c.l.b16 %v4394
    %v4484 = vunpack.c.h.b16 %v4394
    %v4485 = vunpack.c.l.b16 %v4395
    %v4486 = vunpack.c.h.b16 %v4395
    %v4487 = vunpack.c.l.b16 %v4396
    %v4488 = vunpack.c.h.b16 %v4396
    %v4489 = vunpack.c.l.b16 %v4397
    %v4490 = vunpack.c.h.b16 %v4397
    %v4491 = vunpack.c.l.b16 %v4398
    %v4492 = vunpack.c.h.b16 %v4398
    %v4493 = vunpack.c.l.b16 %v4399
    %v4494 = vunpack.c.h.b16 %v4399
    %v4495 = vunpack.c.l.b16 %v4400
    %v4496 = vunpack.c.h.b16 %v4400
    %v4497 = vpack.c.b16 %v4437, %v4433
    %v4498 = vpack.c.b16 %v4438, %v4434
    %v4499 = vpack.c.b16 %v4439, %v4435
    %v4500 = vpack.c.b16 %v4440, %v4436
    %v4501 = vpack.c.b16 %v4445, %v4441
    %v4502 = vpack.c.b16 %v4446, %v4442
    %v4503 = vpack.c.b16 %v4447, %v4443
    %v4504 = vpack.c.b16 %v4448, %v4444
    %v4505 = vpack.c.b16 %v4453, %v4449
    %v4506 = vpack.c.b16 %v4454, %v4450
    %v4507 = vpack.c.b16 %v4455, %v4451
    %v4508 = vpack.c.b16 %v4456, %v4452
    %v4509 = vpack.c.b16 %v4461, %v4457
    %v4510 = vpack.c.b16 %v4462, %v4458
    %v4511 = vpack.c.b16 %v4463, %v4459
    %v4512 = vpack.c.b16 %v4464, %v4460
    %v4513 = vpack.c.b16 %v4469, %v4465
    %v4514 = vpack.c.b16 %v4470, %v4466
    %v4515 = vpack.c.b16 %v4471, %v4467
    %v4516 = vpack.c.b16 %v4472, %v4468
    %v4517 = vpack.c.b16 %v4477, %v4473
    %v4518 = vpack.c.b16 %v4478, %v4474
    %v4519 = vpack.c.b16 %v4479, %v4475
    %v4520 = vpack.c.b16 %v4480, %v4476
    %v4521 = vpack.c.b16 %v4485, %v4481
    %v4522 = vpack.c.b16 %v4486, %v4482
    %v4523 = vpack.c.b16 %v4487, %v4483
    %v4524 = vpack.c.b16 %v4488, %v4484
    %v4525 = vpack.c.b16 %v4493, %v4489
    %v4526 = vpack.c.b16 %v4494, %v4490
    %v4527 = vpack.c.b16 %v4495, %v4491
    %v4528 = vpack.c.b16 %v4496, %v4492
    %4561 = vmatprep.subr.bf16.mxu0 %v4498
    %4562 = vmatpush1.bf16.msra.mxu0 %v4497
    %4563 = vmatprep.subr.bf16.mxu0 %v4502
    %4564 = vmatpush1.bf16.msra.mxu0 %v4501
    %4565 = vmatprep.subr.bf16.mxu0 %v4506
    %4566 = vmatpush1.bf16.msra.mxu0 %v4505
    %4567 = vmatprep.subr.bf16.mxu0 %v4510
    %4568 = vmatpush1.bf16.msra.mxu0 %v4509
    %4569 = vmatprep.subr.bf16.mxu0 %v4514
    %4570 = vmatpush1.bf16.msra.mxu0 %v4513
    %4571 = vmatprep.subr.bf16.mxu0 %v4518
    %4572 = vmatpush1.bf16.msra.mxu0 %v4517
    %4573 = vmatprep.subr.bf16.mxu0 %v4522
    %4574 = vmatpush1.bf16.msra.mxu0 %v4521
    %4575 = vmatprep.subr.bf16.mxu0 %v4526
    %4576 = vmatpush1.bf16.msra.mxu0 %v4525
    %4577 = vmatprep.subr.bf16.mxu0 0
    %4578 = vmatpush1.bf16.msra.mxu0 0
    %4579 = vmatprep.subr.bf16.mxu0 0
    %4580 = vmatpush1.bf16.msra.mxu0 0
    %4581 = vmatprep.subr.bf16.mxu0 0
    %4582 = vmatpush1.bf16.msra.mxu0 0
    %4583 = vmatprep.subr.bf16.mxu0 0
    %4584 = vmatpush1.bf16.msra.mxu0 0
    %4585 = vmatprep.subr.bf16.mxu0 0
    %4586 = vmatpush1.bf16.msra.mxu0 0
    %4587 = vmatprep.subr.bf16.mxu0 0
    %4588 = vmatpush1.bf16.msra.mxu0 0
    %4589 = vmatprep.subr.bf16.mxu0 0
    %4590 = vmatpush1.bf16.msra.mxu0 0
    %4591 = vmatprep.subr.bf16.mxu0 0
    %4592 = vmatpush1.bf16.msra.mxu0 0
    %4593 = vmatprep.mubr.bf16.mxu0 0
    %4594 = vmatmul.mubr.bf16.gmra.mrb[0].mxu0 %v4368
    %v4595 = vpop.f32.mrb[0].mxu0
    %v4596 = vadd.f32 0.0, %v4595
    %v4597 = vpop.f32.mrb[0].mxu0
    %v4598 = vadd.f32 0.0, %v4597
    %v4599 = vpop.f32.mrb[0].mxu0
    %v4600 = vpop.f32.mrb[0].mxu0
    %4601 = vdwg.mxu0
    %4602 = vmatprep.subr.bf16.mxu0 %v4500
    %4603 = vmatpush1.bf16.msra.mxu0 %v4499
    %4604 = vmatprep.subr.bf16.mxu0 %v4504
    %4605 = vmatpush1.bf16.msra.mxu0 %v4503
    %4606 = vmatprep.subr.bf16.mxu0 %v4508
    %4607 = vmatpush1.bf16.msra.mxu0 %v4507
    %4608 = vmatprep.subr.bf16.mxu0 %v4512
    %4609 = vmatpush1.bf16.msra.mxu0 %v4511
    %4610 = vmatprep.subr.bf16.mxu0 %v4516
    %4611 = vmatpush1.bf16.msra.mxu0 %v4515
    %4612 = vmatprep.subr.bf16.mxu0 %v4520
    %4613 = vmatpush1.bf16.msra.mxu0 %v4519
    %4614 = vmatprep.subr.bf16.mxu0 %v4524
    %4615 = vmatpush1.bf16.msra.mxu0 %v4523
    %4616 = vmatprep.subr.bf16.mxu0 %v4528
    %4617 = vmatpush1.bf16.msra.mxu0 %v4527
    %4618 = vmatprep.subr.bf16.mxu0 0
    %4619 = vmatpush1.bf16.msra.mxu0 0
    %4620 = vmatprep.subr.bf16.mxu0 0
    %4621 = vmatpush1.bf16.msra.mxu0 0
    %4622 = vmatprep.subr.bf16.mxu0 0
    %4623 = vmatpush1.bf16.msra.mxu0 0
    %4624 = vmatprep.subr.bf16.mxu0 0
    %4625 = vmatpush1.bf16.msra.mxu0 0
    %4626 = vmatprep.subr.bf16.mxu0 0
    %4627 = vmatpush1.bf16.msra.mxu0 0
    %4628 = vmatprep.subr.bf16.mxu0 0
    %4629 = vmatpush1.bf16.msra.mxu0 0
    %4630 = vmatprep.subr.bf16.mxu0 0
    %4631 = vmatpush1.bf16.msra.mxu0 0
    %4632 = vmatprep.subr.bf16.mxu0 0
    %4633 = vmatpush1.bf16.msra.mxu0 0
    %4634 = vmatprep.mubr.bf16.mxu0 0
    %4635 = vmatmul.mubr.bf16.gmra.mrb[0].mxu0 %v4368
    %v4636 = vpop.f32.mrb[0].mxu0
    %v4637 = vadd.f32 0.0, %v4636
    %v4638 = vpop.f32.mrb[0].mxu0
    %v4639 = vadd.f32 0.0, %v4638
    %v4640 = vpop.f32.mrb[0].mxu0
    %v4641 = vpop.f32.mrb[0].mxu0
    %4642 = vdwg.mxu0
    %v4643 = vadd.f32 %v4364, %v4596
    %v4644 = vadd.f32 %v4365, %v4598
    %v4645 = vadd.f32 %v4366, %v4637
    %v4646 = vadd.f32 %v4367, %v4639
    %v4647 = vxor.u32 %v4643, 2147483648
    %v4648 = vmul.f32 %v4647, 1.442695
    %v4649 = vpow.pop %v4648
    %v4650 = vadd.f32 %v4649, 1.0
    %v4651 = vrcp.pop %v4650
    %v4652 = vmul.f32 1.0, %v4651
    %v4653 = vxor.u32 %v4644, 2147483648
    %v4654 = vmul.f32 %v4653, 1.442695
    %v4655 = vpow.pop %v4654
    %v4656 = vadd.f32 %v4655, 1.0
    %v4657 = vrcp.pop %v4656
    %v4658 = vmul.f32 1.0, %v4657
    %v4659 = vtanh.pop %v4645
    %v4660 = vxor.u32 %v4646, 2147483648
    %v4661 = vmul.f32 %v4660, 1.442695
    %v4662 = vpow.pop %v4661
    %v4663 = vadd.f32 %v4662, 1.0
    %v4664 = vrcp.pop %v4663
    %v4665 = vmul.f32 1.0, %v4664
    %v4666 = vmul.f32 %v4658, %v4360
    %v4667 = vmul.f32 %v4652, %v4659
    %v4668 = vadd.f32 %v4666, %v4667
    %v4669 = vtanh.pop %v4668
    %v4670 = vmul.f32 %v4665, %v4669
    %4671 = vst [vmem:[%s1787] sm:$0xff] %v4670
    %v4672 = vld [vmem:[%s1791] sm:$0xff]
    %v4673 = vld [vmem:[%s1791 + $0x8] sm:$0xff]
    %v4674 = vld [vmem:[%s1791 + $0x10] sm:$0xff]
    %v4675 = vld [vmem:[%s1791 + $0x18] sm:$0xff]
    %v4676 = vpack.c.bf16 %v4670, %v4670
    %v4677 = vld [vmem:[#allocation11] sm:$0xff]
    %v4678 = vld [vmem:[#allocation11 + $0x8] sm:$0xff]
    %v4679 = vld [vmem:[#allocation11 + $0x10] sm:$0xff]
    %v4680 = vld [vmem:[#allocation11 + $0x18] sm:$0xff]
    %v4681 = vld [vmem:[#allocation11 + $0x20] sm:$0xff]
    %v4682 = vld [vmem:[#allocation11 + $0x28] sm:$0xff]
    %v4683 = vld [vmem:[#allocation11 + $0x30] sm:$0xff]
    %v4684 = vld [vmem:[#allocation11 + $0x38] sm:$0xff]
    %v4685 = vld [vmem:[#allocation11 + $0x40] sm:$0xff]
    %v4686 = vld [vmem:[#allocation11 + $0x48] sm:$0xff]
    %v4687 = vld [vmem:[#allocation11 + $0x50] sm:$0xff]
    %v4688 = vld [vmem:[#allocation11 + $0x58] sm:$0xff]
    %v4689 = vld [vmem:[#allocation11 + $0x60] sm:$0xff]
    %v4690 = vld [vmem:[#allocation11 + $0x68] sm:$0xff]
    %v4691 = vld [vmem:[#allocation11 + $0x70] sm:$0xff]
    %v4692 = vld [vmem:[#allocation11 + $0x78] sm:$0xff]
    %v4693 = vld [vmem:[#allocation11 + $0x80] sm:$0xff]
    %v4694 = vld [vmem:[#allocation11 + $0x88] sm:$0xff]
    %v4695 = vld [vmem:[#allocation11 + $0x90] sm:$0xff]
    %v4696 = vld [vmem:[#allocation11 + $0x98] sm:$0xff]
    %v4697 = vld [vmem:[#allocation11 + $0xa0] sm:$0xff]
    %v4698 = vld [vmem:[#allocation11 + $0xa8] sm:$0xff]
    %v4699 = vld [vmem:[#allocation11 + $0xb0] sm:$0xff]
    %v4700 = vld [vmem:[#allocation11 + $0xb8] sm:$0xff]
    %v4701 = vld [vmem:[#allocation11 + $0xc0] sm:$0xff]
    %v4702 = vld [vmem:[#allocation11 + $0xc8] sm:$0xff]
    %v4703 = vld [vmem:[#allocation11 + $0xd0] sm:$0xff]
    %v4704 = vld [vmem:[#allocation11 + $0xd8] sm:$0xff]
    %v4705 = vld [vmem:[#allocation11 + $0xe0] sm:$0xff]
    %v4706 = vld [vmem:[#allocation11 + $0xe8] sm:$0xff]
    %v4707 = vld [vmem:[#allocation11 + $0xf0] sm:$0xff]
    %v4708 = vld [vmem:[#allocation11 + $0xf8] sm:$0xff]
    %v4741 = vunpack.c.l.b16 %v4677
    %v4742 = vunpack.c.h.b16 %v4677
    %v4743 = vunpack.c.l.b16 %v4678
    %v4744 = vunpack.c.h.b16 %v4678
    %v4745 = vunpack.c.l.b16 %v4679
    %v4746 = vunpack.c.h.b16 %v4679
    %v4747 = vunpack.c.l.b16 %v4680
    %v4748 = vunpack.c.h.b16 %v4680
    %v4749 = vunpack.c.l.b16 %v4681
    %v4750 = vunpack.c.h.b16 %v4681
    %v4751 = vunpack.c.l.b16 %v4682
    %v4752 = vunpack.c.h.b16 %v4682
    %v4753 = vunpack.c.l.b16 %v4683
    %v4754 = vunpack.c.h.b16 %v4683
    %v4755 = vunpack.c.l.b16 %v4684
    %v4756 = vunpack.c.h.b16 %v4684
    %v4757 = vunpack.c.l.b16 %v4685
    %v4758 = vunpack.c.h.b16 %v4685
    %v4759 = vunpack.c.l.b16 %v4686
    %v4760 = vunpack.c.h.b16 %v4686
    %v4761 = vunpack.c.l.b16 %v4687
    %v4762 = vunpack.c.h.b16 %v4687
    %v4763 = vunpack.c.l.b16 %v4688
    %v4764 = vunpack.c.h.b16 %v4688
    %v4765 = vunpack.c.l.b16 %v4689
    %v4766 = vunpack.c.h.b16 %v4689
    %v4767 = vunpack.c.l.b16 %v4690
    %v4768 = vunpack.c.h.b16 %v4690
    %v4769 = vunpack.c.l.b16 %v4691
    %v4770 = vunpack.c.h.b16 %v4691
    %v4771 = vunpack.c.l.b16 %v4692
    %v4772 = vunpack.c.h.b16 %v4692
    %v4773 = vunpack.c.l.b16 %v4693
    %v4774 = vunpack.c.h.b16 %v4693
    %v4775 = vunpack.c.l.b16 %v4694
    %v4776 = vunpack.c.h.b16 %v4694
    %v4777 = vunpack.c.l.b16 %v4695
    %v4778 = vunpack.c.h.b16 %v4695
    %v4779 = vunpack.c.l.b16 %v4696
    %v4780 = vunpack.c.h.b16 %v4696
    %v4781 = vunpack.c.l.b16 %v4697
    %v4782 = vunpack.c.h.b16 %v4697
    %v4783 = vunpack.c.l.b16 %v4698
    %v4784 = vunpack.c.h.b16 %v4698
    %v4785 = vunpack.c.l.b16 %v4699
    %v4786 = vunpack.c.h.b16 %v4699
    %v4787 = vunpack.c.l.b16 %v4700
    %v4788 = vunpack.c.h.b16 %v4700
    %v4789 = vunpack.c.l.b16 %v4701
    %v4790 = vunpack.c.h.b16 %v4701
    %v4791 = vunpack.c.l.b16 %v4702
    %v4792 = vunpack.c.h.b16 %v4702
    %v4793 = vunpack.c.l.b16 %v4703
    %v4794 = vunpack.c.h.b16 %v4703
    %v4795 = vunpack.c.l.b16 %v4704
    %v4796 = vunpack.c.h.b16 %v4704
    %v4797 = vunpack.c.l.b16 %v4705
    %v4798 = vunpack.c.h.b16 %v4705
    %v4799 = vunpack.c.l.b16 %v4706
    %v4800 = vunpack.c.h.b16 %v4706
    %v4801 = vunpack.c.l.b16 %v4707
    %v4802 = vunpack.c.h.b16 %v4707
    %v4803 = vunpack.c.l.b16 %v4708
    %v4804 = vunpack.c.h.b16 %v4708
    %v4805 = vpack.c.b16 %v4745, %v4741
    %v4806 = vpack.c.b16 %v4746, %v4742
    %v4807 = vpack.c.b16 %v4747, %v4743
    %v4808 = vpack.c.b16 %v4748, %v4744
    %v4809 = vpack.c.b16 %v4753, %v4749
    %v4810 = vpack.c.b16 %v4754, %v4750
    %v4811 = vpack.c.b16 %v4755, %v4751
    %v4812 = vpack.c.b16 %v4756, %v4752
    %v4813 = vpack.c.b16 %v4761, %v4757
    %v4814 = vpack.c.b16 %v4762, %v4758
    %v4815 = vpack.c.b16 %v4763, %v4759
    %v4816 = vpack.c.b16 %v4764, %v4760
    %v4817 = vpack.c.b16 %v4769, %v4765
    %v4818 = vpack.c.b16 %v4770, %v4766
    %v4819 = vpack.c.b16 %v4771, %v4767
    %v4820 = vpack.c.b16 %v4772, %v4768
    %v4821 = vpack.c.b16 %v4777, %v4773
    %v4822 = vpack.c.b16 %v4778, %v4774
    %v4823 = vpack.c.b16 %v4779, %v4775
    %v4824 = vpack.c.b16 %v4780, %v4776
    %v4825 = vpack.c.b16 %v4785, %v4781
    %v4826 = vpack.c.b16 %v4786, %v4782
    %v4827 = vpack.c.b16 %v4787, %v4783
    %v4828 = vpack.c.b16 %v4788, %v4784
    %v4829 = vpack.c.b16 %v4793, %v4789
    %v4830 = vpack.c.b16 %v4794, %v4790
    %v4831 = vpack.c.b16 %v4795, %v4791
    %v4832 = vpack.c.b16 %v4796, %v4792
    %v4833 = vpack.c.b16 %v4801, %v4797
    %v4834 = vpack.c.b16 %v4802, %v4798
    %v4835 = vpack.c.b16 %v4803, %v4799
    %v4836 = vpack.c.b16 %v4804, %v4800
    %4869 = vmatprep.subr.bf16.mxu0 %v4806
    %4870 = vmatpush1.bf16.msra.mxu0 %v4805
    %4871 = vmatprep.subr.bf16.mxu0 %v4810
    %4872 = vmatpush1.bf16.msra.mxu0 %v4809
    %4873 = vmatprep.subr.bf16.mxu0 %v4814
    %4874 = vmatpush1.bf16.msra.mxu0 %v4813
    %4875 = vmatprep.subr.bf16.mxu0 %v4818
    %4876 = vmatpush1.bf16.msra.mxu0 %v4817
    %4877 = vmatprep.subr.bf16.mxu0 %v4822
    %4878 = vmatpush1.bf16.msra.mxu0 %v4821
    %4879 = vmatprep.subr.bf16.mxu0 %v4826
    %4880 = vmatpush1.bf16.msra.mxu0 %v4825
    %4881 = vmatprep.subr.bf16.mxu0 %v4830
    %4882 = vmatpush1.bf16.msra.mxu0 %v4829
    %4883 = vmatprep.subr.bf16.mxu0 %v4834
    %4884 = vmatpush1.bf16.msra.mxu0 %v4833
    %4885 = vmatprep.subr.bf16.mxu0 0
    %4886 = vmatpush1.bf16.msra.mxu0 0
    %4887 = vmatprep.subr.bf16.mxu0 0
    %4888 = vmatpush1.bf16.msra.mxu0 0
    %4889 = vmatprep.subr.bf16.mxu0 0
    %4890 = vmatpush1.bf16.msra.mxu0 0
    %4891 = vmatprep.subr.bf16.mxu0 0
    %4892 = vmatpush1.bf16.msra.mxu0 0
    %4893 = vmatprep.subr.bf16.mxu0 0
    %4894 = vmatpush1.bf16.msra.mxu0 0
    %4895 = vmatprep.subr.bf16.mxu0 0
    %4896 = vmatpush1.bf16.msra.mxu0 0
    %4897 = vmatprep.subr.bf16.mxu0 0
    %4898 = vmatpush1.bf16.msra.mxu0 0
    %4899 = vmatprep.subr.bf16.mxu0 0
    %4900 = vmatpush1.bf16.msra.mxu0 0
    %4901 = vmatprep.mubr.bf16.mxu0 0
    %4902 = vmatmul.mubr.bf16.gmra.mrb[0].mxu0 %v4676
    %v4903 = vpop.f32.mrb[0].mxu0
    %v4904 = vadd.f32 0.0, %v4903
    %v4905 = vpop.f32.mrb[0].mxu0
    %v4906 = vadd.f32 0.0, %v4905
    %v4907 = vpop.f32.mrb[0].mxu0
    %v4908 = vpop.f32.mrb[0].mxu0
    %4909 = vdwg.mxu0
    %4910 = vmatprep.subr.bf16.mxu0 %v4808
    %4911 = vmatpush1.bf16.msra.mxu0 %v4807
    %4912 = vmatprep.subr.bf16.mxu0 %v4812
    %4913 = vmatpush1.bf16.msra.mxu0 %v4811
    %4914 = vmatprep.subr.bf16.mxu0 %v4816
    %4915 = vmatpush1.bf16.msra.mxu0 %v4815
    %4916 = vmatprep.subr.bf16.mxu0 %v4820
    %4917 = vmatpush1.bf16.msra.mxu0 %v4819
    %4918 = vmatprep.subr.bf16.mxu0 %v4824
    %4919 = vmatpush1.bf16.msra.mxu0 %v4823
    %4920 = vmatprep.subr.bf16.mxu0 %v4828
    %4921 = vmatpush1.bf16.msra.mxu0 %v4827
    %4922 = vmatprep.subr.bf16.mxu0 %v4832
    %4923 = vmatpush1.bf16.msra.mxu0 %v4831
    %4924 = vmatprep.subr.bf16.mxu0 %v4836
    %4925 = vmatpush1.bf16.msra.mxu0 %v4835
    %4926 = vmatprep.subr.bf16.mxu0 0
    %4927 = vmatpush1.bf16.msra.mxu0 0
    %4928 = vmatprep.subr.bf16.mxu0 0
    %4929 = vmatpush1.bf16.msra.mxu0 0
    %4930 = vmatprep.subr.bf16.mxu0 0
    %4931 = vmatpush1.bf16.msra.mxu0 0
    %4932 = vmatprep.subr.bf16.mxu0 0
    %4933 = vmatpush1.bf16.msra.mxu0 0
    %4934 = vmatprep.subr.bf16.mxu0 0
    %4935 = vmatpush1.bf16.msra.mxu0 0
    %4936 = vmatprep.subr.bf16.mxu0 0
    %4937 = vmatpush1.bf16.msra.mxu0 0
    %4938 = vmatprep.subr.bf16.mxu0 0
    %4939 = vmatpush1.bf16.msra.mxu0 0
    %4940 = vmatprep.subr.bf16.mxu0 0
    %4941 = vmatpush1.bf16.msra.mxu0 0
    %4942 = vmatprep.mubr.bf16.mxu0 0
    %4943 = vmatmul.mubr.bf16.gmra.mrb[0].mxu0 %v4676
    %v4944 = vpop.f32.mrb[0].mxu0
    %v4945 = vadd.f32 0.0, %v4944
    %v4946 = vpop.f32.mrb[0].mxu0
    %v4947 = vadd.f32 0.0, %v4946
    %v4948 = vpop.f32.mrb[0].mxu0
    %v4949 = vpop.f32.mrb[0].mxu0
    %4950 = vdwg.mxu0
    %v4951 = vadd.f32 %v4672, %v4904
    %v4952 = vadd.f32 %v4673, %v4906
    %v4953 = vadd.f32 %v4674, %v4945
    %v4954 = vadd.f32 %v4675, %v4947
    %v4955 = vxor.u32 %v4951, 2147483648
    %v4956 = vmul.f32 %v4955, 1.442695
    %v4957 = vpow.pop %v4956
    %v4958 = vadd.f32 %v4957, 1.0
    %v4959 = vrcp.pop %v4958
    %v4960 = vmul.f32 1.0, %v4959
    %v4961 = vxor.u32 %v4952, 2147483648
    %v4962 = vmul.f32 %v4961, 1.442695
    %v4963 = vpow.pop %v4962
    %v4964 = vadd.f32 %v4963, 1.0
    %v4965 = vrcp.pop %v4964
    %v4966 = vmul.f32 1.0, %v4965
    %v4967 = vtanh.pop %v4953
    %v4968 = vxor.u32 %v4954, 2147483648
    %v4969 = vmul.f32 %v4968, 1.442695
    %v4970 = vpow.pop %v4969
    %v4971 = vadd.f32 %v4970, 1.0
    %v4972 = vrcp.pop %v4971
    %v4973 = vmul.f32 1.0, %v4972
    %v4974 = vmul.f32 %v4966, %v4668
    %v4975 = vmul.f32 %v4960, %v4967
    %v4976 = vadd.f32 %v4974, %v4975
    %v4977 = vtanh.pop %v4976
    %v4978 = vmul.f32 %v4973, %v4977
    %4979 = vst [vmem:[%s2099] sm:$0xff] %v4978
    %v4980 = vld [vmem:[%s2103] sm:$0xff]
    %v4981 = vld [vmem:[%s2103 + $0x8] sm:$0xff]
    %v4982 = vld [vmem:[%s2103 + $0x10] sm:$0xff]
    %v4983 = vld [vmem:[%s2103 + $0x18] sm:$0xff]
    %v4984 = vpack.c.bf16 %v4978, %v4978
    %v4985 = vld [vmem:[#allocation11] sm:$0xff]
    %v4986 = vld [vmem:[#allocation11 + $0x8] sm:$0xff]
    %v4987 = vld [vmem:[#allocation11 + $0x10] sm:$0xff]
    %v4988 = vld [vmem:[#allocation11 + $0x18] sm:$0xff]
    %v4989 = vld [vmem:[#allocation11 + $0x20] sm:$0xff]
    %v4990 = vld [vmem:[#allocation11 + $0x28] sm:$0xff]
    %v4991 = vld [vmem:[#allocation11 + $0x30] sm:$0xff]
    %v4992 = vld [vmem:[#allocation11 + $0x38] sm:$0xff]
    %v4993 = vld [vmem:[#allocation11 + $0x40] sm:$0xff]
    %v4994 = vld [vmem:[#allocation11 + $0x48] sm:$0xff]
    %v4995 = vld [vmem:[#allocation11 + $0x50] sm:$0xff]
    %v4996 = vld [vmem:[#allocation11 + $0x58] sm:$0xff]
    %v4997 = vld [vmem:[#allocation11 + $0x60] sm:$0xff]
    %v4998 = vld [vmem:[#allocation11 + $0x68] sm:$0xff]
    %v4999 = vld [vmem:[#allocation11 + $0x70] sm:$0xff]
    %v5000 = vld [vmem:[#allocation11 + $0x78] sm:$0xff]
    %v5001 = vld [vmem:[#allocation11 + $0x80] sm:$0xff]
    %v5002 = vld [vmem:[#allocation11 + $0x88] sm:$0xff]
    %v5003 = vld [vmem:[#allocation11 + $0x90] sm:$0xff]
    %v5004 = vld [vmem:[#allocation11 + $0x98] sm:$0xff]
    %v5005 = vld [vmem:[#allocation11 + $0xa0] sm:$0xff]
    %v5006 = vld [vmem:[#allocation11 + $0xa8] sm:$0xff]
    %v5007 = vld [vmem:[#allocation11 + $0xb0] sm:$0xff]
    %v5008 = vld [vmem:[#allocation11 + $0xb8] sm:$0xff]
    %v5009 = vld [vmem:[#allocation11 + $0xc0] sm:$0xff]
    %v5010 = vld [vmem:[#allocation11 + $0xc8] sm:$0xff]
    %v5011 = vld [vmem:[#allocation11 + $0xd0] sm:$0xff]
    %v5012 = vld [vmem:[#allocation11 + $0xd8] sm:$0xff]
    %v5013 = vld [vmem:[#allocation11 + $0xe0] sm:$0xff]
    %v5014 = vld [vmem:[#allocation11 + $0xe8] sm:$0xff]
    %v5015 = vld [vmem:[#allocation11 + $0xf0] sm:$0xff]
    %v5016 = vld [vmem:[#allocation11 + $0xf8] sm:$0xff]
    %v5049 = vunpack.c.l.b16 %v4985
    %v5050 = vunpack.c.h.b16 %v4985
    %v5051 = vunpack.c.l.b16 %v4986
    %v5052 = vunpack.c.h.b16 %v4986
    %v5053 = vunpack.c.l.b16 %v4987
    %v5054 = vunpack.c.h.b16 %v4987
    %v5055 = vunpack.c.l.b16 %v4988
    %v5056 = vunpack.c.h.b16 %v4988
    %v5057 = vunpack.c.l.b16 %v4989
    %v5058 = vunpack.c.h.b16 %v4989
    %v5059 = vunpack.c.l.b16 %v4990
    %v5060 = vunpack.c.h.b16 %v4990
    %v5061 = vunpack.c.l.b16 %v4991
    %v5062 = vunpack.c.h.b16 %v4991
    %v5063 = vunpack.c.l.b16 %v4992
    %v5064 = vunpack.c.h.b16 %v4992
    %v5065 = vunpack.c.l.b16 %v4993
    %v5066 = vunpack.c.h.b16 %v4993
    %v5067 = vunpack.c.l.b16 %v4994
    %v5068 = vunpack.c.h.b16 %v4994
    %v5069 = vunpack.c.l.b16 %v4995
    %v5070 = vunpack.c.h.b16 %v4995
    %v5071 = vunpack.c.l.b16 %v4996
    %v5072 = vunpack.c.h.b16 %v4996
    %v5073 = vunpack.c.l.b16 %v4997
    %v5074 = vunpack.c.h.b16 %v4997
    %v5075 = vunpack.c.l.b16 %v4998
    %v5076 = vunpack.c.h.b16 %v4998
    %v5077 = vunpack.c.l.b16 %v4999
    %v5078 = vunpack.c.h.b16 %v4999
    %v5079 = vunpack.c.l.b16 %v5000
    %v5080 = vunpack.c.h.b16 %v5000
    %v5081 = vunpack.c.l.b16 %v5001
    %v5082 = vunpack.c.h.b16 %v5001
    %v5083 = vunpack.c.l.b16 %v5002
    %v5084 = vunpack.c.h.b16 %v5002
    %v5085 = vunpack.c.l.b16 %v5003
    %v5086 = vunpack.c.h.b16 %v5003
    %v5087 = vunpack.c.l.b16 %v5004
    %v5088 = vunpack.c.h.b16 %v5004
    %v5089 = vunpack.c.l.b16 %v5005
    %v5090 = vunpack.c.h.b16 %v5005
    %v5091 = vunpack.c.l.b16 %v5006
    %v5092 = vunpack.c.h.b16 %v5006
    %v5093 = vunpack.c.l.b16 %v5007
    %v5094 = vunpack.c.h.b16 %v5007
    %v5095 = vunpack.c.l.b16 %v5008
    %v5096 = vunpack.c.h.b16 %v5008
    %v5097 = vunpack.c.l.b16 %v5009
    %v5098 = vunpack.c.h.b16 %v5009
    %v5099 = vunpack.c.l.b16 %v5010
    %v5100 = vunpack.c.h.b16 %v5010
    %v5101 = vunpack.c.l.b16 %v5011
    %v5102 = vunpack.c.h.b16 %v5011
    %v5103 = vunpack.c.l.b16 %v5012
    %v5104 = vunpack.c.h.b16 %v5012
    %v5105 = vunpack.c.l.b16 %v5013
    %v5106 = vunpack.c.h.b16 %v5013
    %v5107 = vunpack.c.l.b16 %v5014
    %v5108 = vunpack.c.h.b16 %v5014
    %v5109 = vunpack.c.l.b16 %v5015
    %v5110 = vunpack.c.h.b16 %v5015
    %v5111 = vunpack.c.l.b16 %v5016
    %v5112 = vunpack.c.h.b16 %v5016
    %v5113 = vpack.c.b16 %v5053, %v5049
    %v5114 = vpack.c.b16 %v5054, %v5050
    %v5115 = vpack.c.b16 %v5055, %v5051
    %v5116 = vpack.c.b16 %v5056, %v5052
    %v5117 = vpack.c.b16 %v5061, %v5057
    %v5118 = vpack.c.b16 %v5062, %v5058
    %v5119 = vpack.c.b16 %v5063, %v5059
    %v5120 = vpack.c.b16 %v5064, %v5060
    %v5121 = vpack.c.b16 %v5069, %v5065
    %v5122 = vpack.c.b16 %v5070, %v5066
    %v5123 = vpack.c.b16 %v5071, %v5067
    %v5124 = vpack.c.b16 %v5072, %v5068
    %v5125 = vpack.c.b16 %v5077, %v5073
    %v5126 = vpack.c.b16 %v5078, %v5074
    %v5127 = vpack.c.b16 %v5079, %v5075
    %v5128 = vpack.c.b16 %v5080, %v5076
    %v5129 = vpack.c.b16 %v5085, %v5081
    %v5130 = vpack.c.b16 %v5086, %v5082
    %v5131 = vpack.c.b16 %v5087, %v5083
    %v5132 = vpack.c.b16 %v5088, %v5084
    %v5133 = vpack.c.b16 %v5093, %v5089
    %v5134 = vpack.c.b16 %v5094, %v5090
    %v5135 = vpack.c.b16 %v5095, %v5091
    %v5136 = vpack.c.b16 %v5096, %v5092
    %v5137 = vpack.c.b16 %v5101, %v5097
    %v5138 = vpack.c.b16 %v5102, %v5098
    %v5139 = vpack.c.b16 %v5103, %v5099
    %v5140 = vpack.c.b16 %v5104, %v5100
    %v5141 = vpack.c.b16 %v5109, %v5105
    %v5142 = vpack.c.b16 %v5110, %v5106
    %v5143 = vpack.c.b16 %v5111, %v5107
    %v5144 = vpack.c.b16 %v5112, %v5108
    %5177 = vmatprep.subr.bf16.mxu0 %v5114
    %5178 = vmatpush1.bf16.msra.mxu0 %v5113
    %5179 = vmatprep.subr.bf16.mxu0 %v5118
    %5180 = vmatpush1.bf16.msra.mxu0 %v5117
    %5181 = vmatprep.subr.bf16.mxu0 %v5122
    %5182 = vmatpush1.bf16.msra.mxu0 %v5121
    %5183 = vmatprep.subr.bf16.mxu0 %v5126
    %5184 = vmatpush1.bf16.msra.mxu0 %v5125
    %5185 = vmatprep.subr.bf16.mxu0 %v5130
    %5186 = vmatpush1.bf16.msra.mxu0 %v5129
    %5187 = vmatprep.subr.bf16.mxu0 %v5134
    %5188 = vmatpush1.bf16.msra.mxu0 %v5133
    %5189 = vmatprep.subr.bf16.mxu0 %v5138
    %5190 = vmatpush1.bf16.msra.mxu0 %v5137
    %5191 = vmatprep.subr.bf16.mxu0 %v5142
    %5192 = vmatpush1.bf16.msra.mxu0 %v5141
    %5193 = vmatprep.subr.bf16.mxu0 0
    %5194 = vmatpush1.bf16.msra.mxu0 0
    %5195 = vmatprep.subr.bf16.mxu0 0
    %5196 = vmatpush1.bf16.msra.mxu0 0
    %5197 = vmatprep.subr.bf16.mxu0 0
    %5198 = vmatpush1.bf16.msra.mxu0 0
    %5199 = vmatprep.subr.bf16.mxu0 0
    %5200 = vmatpush1.bf16.msra.mxu0 0
    %5201 = vmatprep.subr.bf16.mxu0 0
    %5202 = vmatpush1.bf16.msra.mxu0 0
    %5203 = vmatprep.subr.bf16.mxu0 0
    %5204 = vmatpush1.bf16.msra.mxu0 0
    %5205 = vmatprep.subr.bf16.mxu0 0
    %5206 = vmatpush1.bf16.msra.mxu0 0
    %5207 = vmatprep.subr.bf16.mxu0 0
    %5208 = vmatpush1.bf16.msra.mxu0 0
    %5209 = vmatprep.mubr.bf16.mxu0 0
    %5210 = vmatmul.mubr.bf16.gmra.mrb[0].mxu0 %v4984
    %v5211 = vpop.f32.mrb[0].mxu0
    %v5212 = vadd.f32 0.0, %v5211
    %v5213 = vpop.f32.mrb[0].mxu0
    %v5214 = vadd.f32 0.0, %v5213
    %v5215 = vpop.f32.mrb[0].mxu0
    %v5216 = vpop.f32.mrb[0].mxu0
    %5217 = vdwg.mxu0
    %5218 = vmatprep.subr.bf16.mxu0 %v5116
    %5219 = vmatpush1.bf16.msra.mxu0 %v5115
    %5220 = vmatprep.subr.bf16.mxu0 %v5120
    %5221 = vmatpush1.bf16.msra.mxu0 %v5119
    %5222 = vmatprep.subr.bf16.mxu0 %v5124
    %5223 = vmatpush1.bf16.msra.mxu0 %v5123
    %5224 = vmatprep.subr.bf16.mxu0 %v5128
    %5225 = vmatpush1.bf16.msra.mxu0 %v5127
    %5226 = vmatprep.subr.bf16.mxu0 %v5132
    %5227 = vmatpush1.bf16.msra.mxu0 %v5131
    %5228 = vmatprep.subr.bf16.mxu0 %v5136
    %5229 = vmatpush1.bf16.msra.mxu0 %v5135
    %5230 = vmatprep.subr.bf16.mxu0 %v5140
    %5231 = vmatpush1.bf16.msra.mxu0 %v5139
    %5232 = vmatprep.subr.bf16.mxu0 %v5144
    %5233 = vmatpush1.bf16.msra.mxu0 %v5143
    %5234 = vmatprep.subr.bf16.mxu0 0
    %5235 = vmatpush1.bf16.msra.mxu0 0
    %5236 = vmatprep.subr.bf16.mxu0 0
    %5237 = vmatpush1.bf16.msra.mxu0 0
    %5238 = vmatprep.subr.bf16.mxu0 0
    %5239 = vmatpush1.bf16.msra.mxu0 0
    %5240 = vmatprep.subr.bf16.mxu0 0
    %5241 = vmatpush1.bf16.msra.mxu0 0
    %5242 = vmatprep.subr.bf16.mxu0 0
    %5243 = vmatpush1.bf16.msra.mxu0 0
    %5244 = vmatprep.subr.bf16.mxu0 0
    %5245 = vmatpush1.bf16.msra.mxu0 0
    %5246 = vmatprep.subr.bf16.mxu0 0
    %5247 = vmatpush1.bf16.msra.mxu0 0
    %5248 = vmatprep.subr.bf16.mxu0 0
    %5249 = vmatpush1.bf16.msra.mxu0 0
    %5250 = vmatprep.mubr.bf16.mxu0 0
    %5251 = vmatmul.mubr.bf16.gmra.mrb[0].mxu0 %v4984
    %v5252 = vpop.f32.mrb[0].mxu0
    %v5253 = vadd.f32 0.0, %v5252
    %v5254 = vpop.f32.mrb[0].mxu0
    %v5255 = vadd.f32 0.0, %v5254
    %v5256 = vpop.f32.mrb[0].mxu0
    %v5257 = vpop.f32.mrb[0].mxu0
    %5258 = vdwg.mxu0
    %v5259 = vadd.f32 %v4980, %v5212
    %v5260 = vadd.f32 %v4981, %v5214
    %v5261 = vadd.f32 %v4982, %v5253
    %v5262 = vadd.f32 %v4983, %v5255
    %v5263 = vxor.u32 %v5259, 2147483648
    %v5264 = vmul.f32 %v5263, 1.442695
    %v5265 = vpow.pop %v5264
    %v5266 = vadd.f32 %v5265, 1.0
    %v5267 = vrcp.pop %v5266
    %v5268 = vmul.f32 1.0, %v5267
    %v5269 = vxor.u32 %v5260, 2147483648
    %v5270 = vmul.f32 %v5269, 1.442695
    %v5271 = vpow.pop %v5270
    %v5272 = vadd.f32 %v5271, 1.0
    %v5273 = vrcp.pop %v5272
    %v5274 = vmul.f32 1.0, %v5273
    %v5275 = vtanh.pop %v5261
    %v5276 = vxor.u32 %v5262, 2147483648
    %v5277 = vmul.f32 %v5276, 1.442695
    %v5278 = vpow.pop %v5277
    %v5279 = vadd.f32 %v5278, 1.0
    %v5280 = vrcp.pop %v5279
    %v5281 = vmul.f32 1.0, %v5280
    %v5282 = vmul.f32 %v5274, %v4976
    %v5283 = vmul.f32 %v5268, %v5275
    %v5284 = vadd.f32 %v5282, %v5283
    %v5285 = vtanh.pop %v5284
    %v5286 = vmul.f32 %v5281, %v5285
    %5287 = vst [vmem:[%s2411] sm:$0xff] %v5286
    %v5288 = vld [vmem:[%s2415] sm:$0xff]
    %v5289 = vld [vmem:[%s2415 + $0x8] sm:$0xff]
    %v5290 = vld [vmem:[%s2415 + $0x10] sm:$0xff]
    %v5291 = vld [vmem:[%s2415 + $0x18] sm:$0xff]
    %v5292 = vpack.c.bf16 %v5286, %v5286
    %v5293 = vld [vmem:[#allocation11] sm:$0xff]
    %v5294 = vld [vmem:[#allocation11 + $0x8] sm:$0xff]
    %v5295 = vld [vmem:[#allocation11 + $0x10] sm:$0xff]
    %v5296 = vld [vmem:[#allocation11 + $0x18] sm:$0xff]
    %v5297 = vld [vmem:[#allocation11 + $0x20] sm:$0xff]
    %v5298 = vld [vmem:[#allocation11 + $0x28] sm:$0xff]
    %v5299 = vld [vmem:[#allocation11 + $0x30] sm:$0xff]
    %v5300 = vld [vmem:[#allocation11 + $0x38] sm:$0xff]
    %v5301 = vld [vmem:[#allocation11 + $0x40] sm:$0xff]
    %v5302 = vld [vmem:[#allocation11 + $0x48] sm:$0xff]
    %v5303 = vld [vmem:[#allocation11 + $0x50] sm:$0xff]
    %v5304 = vld [vmem:[#allocation11 + $0x58] sm:$0xff]
    %v5305 = vld [vmem:[#allocation11 + $0x60] sm:$0xff]
    %v5306 = vld [vmem:[#allocation11 + $0x68] sm:$0xff]
    %v5307 = vld [vmem:[#allocation11 + $0x70] sm:$0xff]
    %v5308 = vld [vmem:[#allocation11 + $0x78] sm:$0xff]
    %v5309 = vld [vmem:[#allocation11 + $0x80] sm:$0xff]
    %v5310 = vld [vmem:[#allocation11 + $0x88] sm:$0xff]
    %v5311 = vld [vmem:[#allocation11 + $0x90] sm:$0xff]
    %v5312 = vld [vmem:[#allocation11 + $0x98] sm:$0xff]
    %v5313 = vld [vmem:[#allocation11 + $0xa0] sm:$0xff]
    %v5314 = vld [vmem:[#allocation11 + $0xa8] sm:$0xff]
    %v5315 = vld [vmem:[#allocation11 + $0xb0] sm:$0xff]
    %v5316 = vld [vmem:[#allocation11 + $0xb8] sm:$0xff]
    %v5317 = vld [vmem:[#allocation11 + $0xc0] sm:$0xff]
    %v5318 = vld [vmem:[#allocation11 + $0xc8] sm:$0xff]
    %v5319 = vld [vmem:[#allocation11 + $0xd0] sm:$0xff]
    %v5320 = vld [vmem:[#allocation11 + $0xd8] sm:$0xff]
    %v5321 = vld [vmem:[#allocation11 + $0xe0] sm:$0xff]
    %v5322 = vld [vmem:[#allocation11 + $0xe8] sm:$0xff]
    %v5323 = vld [vmem:[#allocation11 + $0xf0] sm:$0xff]
    %v5324 = vld [vmem:[#allocation11 + $0xf8] sm:$0xff]
    %v5357 = vunpack.c.l.b16 %v5293
    %v5358 = vunpack.c.h.b16 %v5293
    %v5359 = vunpack.c.l.b16 %v5294
    %v5360 = vunpack.c.h.b16 %v5294
    %v5361 = vunpack.c.l.b16 %v5295
    %v5362 = vunpack.c.h.b16 %v5295
    %v5363 = vunpack.c.l.b16 %v5296
    %v5364 = vunpack.c.h.b16 %v5296
    %v5365 = vunpack.c.l.b16 %v5297
    %v5366 = vunpack.c.h.b16 %v5297
    %v5367 = vunpack.c.l.b16 %v5298
    %v5368 = vunpack.c.h.b16 %v5298
    %v5369 = vunpack.c.l.b16 %v5299
    %v5370 = vunpack.c.h.b16 %v5299
    %v5371 = vunpack.c.l.b16 %v5300
    %v5372 = vunpack.c.h.b16 %v5300
    %v5373 = vunpack.c.l.b16 %v5301
    %v5374 = vunpack.c.h.b16 %v5301
    %v5375 = vunpack.c.l.b16 %v5302
    %v5376 = vunpack.c.h.b16 %v5302
    %v5377 = vunpack.c.l.b16 %v5303
    %v5378 = vunpack.c.h.b16 %v5303
    %v5379 = vunpack.c.l.b16 %v5304
    %v5380 = vunpack.c.h.b16 %v5304
    %v5381 = vunpack.c.l.b16 %v5305
    %v5382 = vunpack.c.h.b16 %v5305
    %v5383 = vunpack.c.l.b16 %v5306
    %v5384 = vunpack.c.h.b16 %v5306
    %v5385 = vunpack.c.l.b16 %v5307
    %v5386 = vunpack.c.h.b16 %v5307
    %v5387 = vunpack.c.l.b16 %v5308
    %v5388 = vunpack.c.h.b16 %v5308
    %v5389 = vunpack.c.l.b16 %v5309
    %v5390 = vunpack.c.h.b16 %v5309
    %v5391 = vunpack.c.l.b16 %v5310
    %v5392 = vunpack.c.h.b16 %v5310
    %v5393 = vunpack.c.l.b16 %v5311
    %v5394 = vunpack.c.h.b16 %v5311
    %v5395 = vunpack.c.l.b16 %v5312
    %v5396 = vunpack.c.h.b16 %v5312
    %v5397 = vunpack.c.l.b16 %v5313
    %v5398 = vunpack.c.h.b16 %v5313
    %v5399 = vunpack.c.l.b16 %v5314
    %v5400 = vunpack.c.h.b16 %v5314
    %v5401 = vunpack.c.l.b16 %v5315
    %v5402 = vunpack.c.h.b16 %v5315
    %v5403 = vunpack.c.l.b16 %v5316
    %v5404 = vunpack.c.h.b16 %v5316
    %v5405 = vunpack.c.l.b16 %v5317
    %v5406 = vunpack.c.h.b16 %v5317
    %v5407 = vunpack.c.l.b16 %v5318
    %v5408 = vunpack.c.h.b16 %v5318
    %v5409 = vunpack.c.l.b16 %v5319
    %v5410 = vunpack.c.h.b16 %v5319
    %v5411 = vunpack.c.l.b16 %v5320
    %v5412 = vunpack.c.h.b16 %v5320
    %v5413 = vunpack.c.l.b16 %v5321
    %v5414 = vunpack.c.h.b16 %v5321
    %v5415 = vunpack.c.l.b16 %v5322
    %v5416 = vunpack.c.h.b16 %v5322
    %v5417 = vunpack.c.l.b16 %v5323
    %v5418 = vunpack.c.h.b16 %v5323
    %v5419 = vunpack.c.l.b16 %v5324
    %v5420 = vunpack.c.h.b16 %v5324
    %v5421 = vpack.c.b16 %v5361, %v5357
    %v5422 = vpack.c.b16 %v5362, %v5358
    %v5423 = vpack.c.b16 %v5363, %v5359
    %v5424 = vpack.c.b16 %v5364, %v5360
    %v5425 = vpack.c.b16 %v5369, %v5365
    %v5426 = vpack.c.b16 %v5370, %v5366
    %v5427 = vpack.c.b16 %v5371, %v5367
    %v5428 = vpack.c.b16 %v5372, %v5368
    %v5429 = vpack.c.b16 %v5377, %v5373
    %v5430 = vpack.c.b16 %v5378, %v5374
    %v5431 = vpack.c.b16 %v5379, %v5375
    %v5432 = vpack.c.b16 %v5380, %v5376
    %v5433 = vpack.c.b16 %v5385, %v5381
    %v5434 = vpack.c.b16 %v5386, %v5382
    %v5435 = vpack.c.b16 %v5387, %v5383
    %v5436 = vpack.c.b16 %v5388, %v5384
    %v5437 = vpack.c.b16 %v5393, %v5389
    %v5438 = vpack.c.b16 %v5394, %v5390
    %v5439 = vpack.c.b16 %v5395, %v5391
    %v5440 = vpack.c.b16 %v5396, %v5392
    %v5441 = vpack.c.b16 %v5401, %v5397
    %v5442 = vpack.c.b16 %v5402, %v5398
    %v5443 = vpack.c.b16 %v5403, %v5399
    %v5444 = vpack.c.b16 %v5404, %v5400
    %v5445 = vpack.c.b16 %v5409, %v5405
    %v5446 = vpack.c.b16 %v5410, %v5406
    %v5447 = vpack.c.b16 %v5411, %v5407
    %v5448 = vpack.c.b16 %v5412, %v5408
    %v5449 = vpack.c.b16 %v5417, %v5413
    %v5450 = vpack.c.b16 %v5418, %v5414
    %v5451 = vpack.c.b16 %v5419, %v5415
    %v5452 = vpack.c.b16 %v5420, %v5416
    %5485 = vmatprep.subr.bf16.mxu0 %v5422
    %5486 = vmatpush1.bf16.msra.mxu0 %v5421
    %5487 = vmatprep.subr.bf16.mxu0 %v5426
    %5488 = vmatpush1.bf16.msra.mxu0 %v5425
    %5489 = vmatprep.subr.bf16.mxu0 %v5430
    %5490 = vmatpush1.bf16.msra.mxu0 %v5429
    %5491 = vmatprep.subr.bf16.mxu0 %v5434
    %5492 = vmatpush1.bf16.msra.mxu0 %v5433
    %5493 = vmatprep.subr.bf16.mxu0 %v5438
    %5494 = vmatpush1.bf16.msra.mxu0 %v5437
    %5495 = vmatprep.subr.bf16.mxu0 %v5442
    %5496 = vmatpush1.bf16.msra.mxu0 %v5441
    %5497 = vmatprep.subr.bf16.mxu0 %v5446
    %5498 = vmatpush1.bf16.msra.mxu0 %v5445
    %5499 = vmatprep.subr.bf16.mxu0 %v5450
    %5500 = vmatpush1.bf16.msra.mxu0 %v5449
    %5501 = vmatprep.subr.bf16.mxu0 0
    %5502 = vmatpush1.bf16.msra.mxu0 0
    %5503 = vmatprep.subr.bf16.mxu0 0
    %5504 = vmatpush1.bf16.msra.mxu0 0
    %5505 = vmatprep.subr.bf16.mxu0 0
    %5506 = vmatpush1.bf16.msra.mxu0 0
    %5507 = vmatprep.subr.bf16.mxu0 0
    %5508 = vmatpush1.bf16.msra.mxu0 0
    %5509 = vmatprep.subr.bf16.mxu0 0
    %5510 = vmatpush1.bf16.msra.mxu0 0
    %5511 = vmatprep.subr.bf16.mxu0 0
    %5512 = vmatpush1.bf16.msra.mxu0 0
    %5513 = vmatprep.subr.bf16.mxu0 0
    %5514 = vmatpush1.bf16.msra.mxu0 0
    %5515 = vmatprep.subr.bf16.mxu0 0
    %5516 = vmatpush1.bf16.msra.mxu0 0
    %5517 = vmatprep.mubr.bf16.mxu0 0
    %5518 = vmatmul.mubr.bf16.gmra.mrb[0].mxu0 %v5292
    %v5519 = vpop.f32.mrb[0].mxu0
    %v5520 = vadd.f32 0.0, %v5519
    %v5521 = vpop.f32.mrb[0].mxu0
    %v5522 = vadd.f32 0.0, %v5521
    %v5523 = vpop.f32.mrb[0].mxu0
    %v5524 = vpop.f32.mrb[0].mxu0
    %5525 = vdwg.mxu0
    %5526 = vmatprep.subr.bf16.mxu0 %v5424
    %5527 = vmatpush1.bf16.msra.mxu0 %v5423
    %5528 = vmatprep.subr.bf16.mxu0 %v5428
    %5529 = vmatpush1.bf16.msra.mxu0 %v5427
    %5530 = vmatprep.subr.bf16.mxu0 %v5432
    %5531 = vmatpush1.bf16.msra.mxu0 %v5431
    %5532 = vmatprep.subr.bf16.mxu0 %v5436
    %5533 = vmatpush1.bf16.msra.mxu0 %v5435
    %5534 = vmatprep.subr.bf16.mxu0 %v5440
    %5535 = vmatpush1.bf16.msra.mxu0 %v5439
    %5536 = vmatprep.subr.bf16.mxu0 %v5444
    %5537 = vmatpush1.bf16.msra.mxu0 %v5443
    %5538 = vmatprep.subr.bf16.mxu0 %v5448
    %5539 = vmatpush1.bf16.msra.mxu0 %v5447
    %5540 = vmatprep.subr.bf16.mxu0 %v5452
    %5541 = vmatpush1.bf16.msra.mxu0 %v5451
    %5542 = vmatprep.subr.bf16.mxu0 0
    %5543 = vmatpush1.bf16.msra.mxu0 0
    %5544 = vmatprep.subr.bf16.mxu0 0
    %5545 = vmatpush1.bf16.msra.mxu0 0
    %5546 = vmatprep.subr.bf16.mxu0 0
    %5547 = vmatpush1.bf16.msra.mxu0 0
    %5548 = vmatprep.subr.bf16.mxu0 0
    %5549 = vmatpush1.bf16.msra.mxu0 0
    %5550 = vmatprep.subr.bf16.mxu0 0
    %5551 = vmatpush1.bf16.msra.mxu0 0
    %5552 = vmatprep.subr.bf16.mxu0 0
    %5553 = vmatpush1.bf16.msra.mxu0 0
    %5554 = vmatprep.subr.bf16.mxu0 0
    %5555 = vmatpush1.bf16.msra.mxu0 0
    %5556 = vmatprep.subr.bf16.mxu0 0
    %5557 = vmatpush1.bf16.msra.mxu0 0
    %5558 = vmatprep.mubr.bf16.mxu0 0
    %5559 = vmatmul.mubr.bf16.gmra.mrb[0].mxu0 %v5292
    %v5560 = vpop.f32.mrb[0].mxu0
    %v5561 = vadd.f32 0.0, %v5560
    %v5562 = vpop.f32.mrb[0].mxu0
    %v5563 = vadd.f32 0.0, %v5562
    %v5564 = vpop.f32.mrb[0].mxu0
    %v5565 = vpop.f32.mrb[0].mxu0
    %5566 = vdwg.mxu0
    %v5567 = vadd.f32 %v5288, %v5520
    %v5568 = vadd.f32 %v5289, %v5522
    %v5569 = vadd.f32 %v5290, %v5561
    %v5570 = vadd.f32 %v5291, %v5563
    %v5571 = vxor.u32 %v5567, 2147483648
    %v5572 = vmul.f32 %v5571, 1.442695
    %v5573 = vpow.pop %v5572
    %v5574 = vadd.f32 %v5573, 1.0
    %v5575 = vrcp.pop %v5574
    %v5576 = vmul.f32 1.0, %v5575
    %v5577 = vxor.u32 %v5568, 2147483648
    %v5578 = vmul.f32 %v5577, 1.442695
    %v5579 = vpow.pop %v5578
    %v5580 = vadd.f32 %v5579, 1.0
    %v5581 = vrcp.pop %v5580
    %v5582 = vmul.f32 1.0, %v5581
    %v5583 = vtanh.pop %v5569
    %v5584 = vxor.u32 %v5570, 2147483648
    %v5585 = vmul.f32 %v5584, 1.442695
    %v5586 = vpow.pop %v5585
    %v5587 = vadd.f32 %v5586, 1.0
    %v5588 = vrcp.pop %v5587
    %v5589 = vmul.f32 1.0, %v5588
    %v5590 = vmul.f32 %v5582, %v5284
    %v5591 = vmul.f32 %v5576, %v5583
    %v5592 = vadd.f32 %v5590, %v5591
    %v5593 = vtanh.pop %v5592
    %v5594 = vmul.f32 %v5589, %v5593
    %5595 = vst [vmem:[%s2723] sm:$0xff] %v5594
    %v5596 = vld [vmem:[%s2727] sm:$0xff]
    %v5597 = vld [vmem:[%s2727 + $0x8] sm:$0xff]
    %v5598 = vld [vmem:[%s2727 + $0x10] sm:$0xff]
    %v5599 = vld [vmem:[%s2727 + $0x18] sm:$0xff]
    %v5600 = vpack.c.bf16 %v5594, %v5594
    %v5601 = vld [vmem:[#allocation11] sm:$0xff]
    %v5602 = vld [vmem:[#allocation11 + $0x8] sm:$0xff]
    %v5603 = vld [vmem:[#allocation11 + $0x10] sm:$0xff]
    %v5604 = vld [vmem:[#allocation11 + $0x18] sm:$0xff]
    %v5605 = vld [vmem:[#allocation11 + $0x20] sm:$0xff]
    %v5606 = vld [vmem:[#allocation11 + $0x28] sm:$0xff]
    %v5607 = vld [vmem:[#allocation11 + $0x30] sm:$0xff]
    %v5608 = vld [vmem:[#allocation11 + $0x38] sm:$0xff]
    %v5609 = vld [vmem:[#allocation11 + $0x40] sm:$0xff]
    %v5610 = vld [vmem:[#allocation11 + $0x48] sm:$0xff]
    %v5611 = vld [vmem:[#allocation11 + $0x50] sm:$0xff]
    %v5612 = vld [vmem:[#allocation11 + $0x58] sm:$0xff]
    %v5613 = vld [vmem:[#allocation11 + $0x60] sm:$0xff]
    %v5614 = vld [vmem:[#allocation11 + $0x68] sm:$0xff]
    %v5615 = vld [vmem:[#allocation11 + $0x70] sm:$0xff]
    %v5616 = vld [vmem:[#allocation11 + $0x78] sm:$0xff]
    %v5617 = vld [vmem:[#allocation11 + $0x80] sm:$0xff]
    %v5618 = vld [vmem:[#allocation11 + $0x88] sm:$0xff]
    %v5619 = vld [vmem:[#allocation11 + $0x90] sm:$0xff]
    %v5620 = vld [vmem:[#allocation11 + $0x98] sm:$0xff]
    %v5621 = vld [vmem:[#allocation11 + $0xa0] sm:$0xff]
    %v5622 = vld [vmem:[#allocation11 + $0xa8] sm:$0xff]
    %v5623 = vld [vmem:[#allocation11 + $0xb0] sm:$0xff]
    %v5624 = vld [vmem:[#allocation11 + $0xb8] sm:$0xff]
    %v5625 = vld [vmem:[#allocation11 + $0xc0] sm:$0xff]
    %v5626 = vld [vmem:[#allocation11 + $0xc8] sm:$0xff]
    %v5627 = vld [vmem:[#allocation11 + $0xd0] sm:$0xff]
    %v5628 = vld [vmem:[#allocation11 + $0xd8] sm:$0xff]
    %v5629 = vld [vmem:[#allocation11 + $0xe0] sm:$0xff]
    %v5630 = vld [vmem:[#allocation11 + $0xe8] sm:$0xff]
    %v5631 = vld [vmem:[#allocation11 + $0xf0] sm:$0xff]
    %v5632 = vld [vmem:[#allocation11 + $0xf8] sm:$0xff]
    %v5665 = vunpack.c.l.b16 %v5601
    %v5666 = vunpack.c.h.b16 %v5601
    %v5667 = vunpack.c.l.b16 %v5602
    %v5668 = vunpack.c.h.b16 %v5602
    %v5669 = vunpack.c.l.b16 %v5603
    %v5670 = vunpack.c.h.b16 %v5603
    %v5671 = vunpack.c.l.b16 %v5604
    %v5672 = vunpack.c.h.b16 %v5604
    %v5673 = vunpack.c.l.b16 %v5605
    %v5674 = vunpack.c.h.b16 %v5605
    %v5675 = vunpack.c.l.b16 %v5606
    %v5676 = vunpack.c.h.b16 %v5606
    %v5677 = vunpack.c.l.b16 %v5607
    %v5678 = vunpack.c.h.b16 %v5607
    %v5679 = vunpack.c.l.b16 %v5608
    %v5680 = vunpack.c.h.b16 %v5608
    %v5681 = vunpack.c.l.b16 %v5609
    %v5682 = vunpack.c.h.b16 %v5609
    %v5683 = vunpack.c.l.b16 %v5610
    %v5684 = vunpack.c.h.b16 %v5610
    %v5685 = vunpack.c.l.b16 %v5611
    %v5686 = vunpack.c.h.b16 %v5611
    %v5687 = vunpack.c.l.b16 %v5612
    %v5688 = vunpack.c.h.b16 %v5612
    %v5689 = vunpack.c.l.b16 %v5613
    %v5690 = vunpack.c.h.b16 %v5613
    %v5691 = vunpack.c.l.b16 %v5614
    %v5692 = vunpack.c.h.b16 %v5614
    %v5693 = vunpack.c.l.b16 %v5615
    %v5694 = vunpack.c.h.b16 %v5615
    %v5695 = vunpack.c.l.b16 %v5616
    %v5696 = vunpack.c.h.b16 %v5616
    %v5697 = vunpack.c.l.b16 %v5617
    %v5698 = vunpack.c.h.b16 %v5617
    %v5699 = vunpack.c.l.b16 %v5618
    %v5700 = vunpack.c.h.b16 %v5618
    %v5701 = vunpack.c.l.b16 %v5619
    %v5702 = vunpack.c.h.b16 %v5619
    %v5703 = vunpack.c.l.b16 %v5620
    %v5704 = vunpack.c.h.b16 %v5620
    %v5705 = vunpack.c.l.b16 %v5621
    %v5706 = vunpack.c.h.b16 %v5621
    %v5707 = vunpack.c.l.b16 %v5622
    %v5708 = vunpack.c.h.b16 %v5622
    %v5709 = vunpack.c.l.b16 %v5623
    %v5710 = vunpack.c.h.b16 %v5623
    %v5711 = vunpack.c.l.b16 %v5624
    %v5712 = vunpack.c.h.b16 %v5624
    %v5713 = vunpack.c.l.b16 %v5625
    %v5714 = vunpack.c.h.b16 %v5625
    %v5715 = vunpack.c.l.b16 %v5626
    %v5716 = vunpack.c.h.b16 %v5626
    %v5717 = vunpack.c.l.b16 %v5627
    %v5718 = vunpack.c.h.b16 %v5627
    %v5719 = vunpack.c.l.b16 %v5628
    %v5720 = vunpack.c.h.b16 %v5628
    %v5721 = vunpack.c.l.b16 %v5629
    %v5722 = vunpack.c.h.b16 %v5629
    %v5723 = vunpack.c.l.b16 %v5630
    %v5724 = vunpack.c.h.b16 %v5630
    %v5725 = vunpack.c.l.b16 %v5631
    %v5726 = vunpack.c.h.b16 %v5631
    %v5727 = vunpack.c.l.b16 %v5632
    %v5728 = vunpack.c.h.b16 %v5632
    %v5729 = vpack.c.b16 %v5669, %v5665
    %v5730 = vpack.c.b16 %v5670, %v5666
    %v5731 = vpack.c.b16 %v5671, %v5667
    %v5732 = vpack.c.b16 %v5672, %v5668
    %v5733 = vpack.c.b16 %v5677, %v5673
    %v5734 = vpack.c.b16 %v5678, %v5674
    %v5735 = vpack.c.b16 %v5679, %v5675
    %v5736 = vpack.c.b16 %v5680, %v5676
    %v5737 = vpack.c.b16 %v5685, %v5681
    %v5738 = vpack.c.b16 %v5686, %v5682
    %v5739 = vpack.c.b16 %v5687, %v5683
    %v5740 = vpack.c.b16 %v5688, %v5684
    %v5741 = vpack.c.b16 %v5693, %v5689
    %v5742 = vpack.c.b16 %v5694, %v5690
    %v5743 = vpack.c.b16 %v5695, %v5691
    %v5744 = vpack.c.b16 %v5696, %v5692
    %v5745 = vpack.c.b16 %v5701, %v5697
    %v5746 = vpack.c.b16 %v5702, %v5698
    %v5747 = vpack.c.b16 %v5703, %v5699
    %v5748 = vpack.c.b16 %v5704, %v5700
    %v5749 = vpack.c.b16 %v5709, %v5705
    %v5750 = vpack.c.b16 %v5710, %v5706
    %v5751 = vpack.c.b16 %v5711, %v5707
    %v5752 = vpack.c.b16 %v5712, %v5708
    %v5753 = vpack.c.b16 %v5717, %v5713
    %v5754 = vpack.c.b16 %v5718, %v5714
    %v5755 = vpack.c.b16 %v5719, %v5715
    %v5756 = vpack.c.b16 %v5720, %v5716
    %v5757 = vpack.c.b16 %v5725, %v5721
    %v5758 = vpack.c.b16 %v5726, %v5722
    %v5759 = vpack.c.b16 %v5727, %v5723
    %v5760 = vpack.c.b16 %v5728, %v5724
    %5793 = vmatprep.subr.bf16.mxu0 %v5730
    %5794 = vmatpush1.bf16.msra.mxu0 %v5729
    %5795 = vmatprep.subr.bf16.mxu0 %v5734
    %5796 = vmatpush1.bf16.msra.mxu0 %v5733
    %5797 = vmatprep.subr.bf16.mxu0 %v5738
    %5798 = vmatpush1.bf16.msra.mxu0 %v5737
    %5799 = vmatprep.subr.bf16.mxu0 %v5742
    %5800 = vmatpush1.bf16.msra.mxu0 %v5741
    %5801 = vmatprep.subr.bf16.mxu0 %v5746
    %5802 = vmatpush1.bf16.msra.mxu0 %v5745
    %5803 = vmatprep.subr.bf16.mxu0 %v5750
    %5804 = vmatpush1.bf16.msra.mxu0 %v5749
    %5805 = vmatprep.subr.bf16.mxu0 %v5754
    %5806 = vmatpush1.bf16.msra.mxu0 %v5753
    %5807 = vmatprep.subr.bf16.mxu0 %v5758
    %5808 = vmatpush1.bf16.msra.mxu0 %v5757
    %5809 = vmatprep.subr.bf16.mxu0 0
    %5810 = vmatpush1.bf16.msra.mxu0 0
    %5811 = vmatprep.subr.bf16.mxu0 0
    %5812 = vmatpush1.bf16.msra.mxu0 0
    %5813 = vmatprep.subr.bf16.mxu0 0
    %5814 = vmatpush1.bf16.msra.mxu0 0
    %5815 = vmatprep.subr.bf16.mxu0 0
    %5816 = vmatpush1.bf16.msra.mxu0 0
    %5817 = vmatprep.subr.bf16.mxu0 0
    %5818 = vmatpush1.bf16.msra.mxu0 0
    %5819 = vmatprep.subr.bf16.mxu0 0
    %5820 = vmatpush1.bf16.msra.mxu0 0
    %5821 = vmatprep.subr.bf16.mxu0 0
    %5822 = vmatpush1.bf16.msra.mxu0 0
    %5823 = vmatprep.subr.bf16.mxu0 0
    %5824 = vmatpush1.bf16.msra.mxu0 0
    %5825 = vmatprep.mubr.bf16.mxu0 0
    %5826 = vmatmul.mubr.bf16.gmra.mrb[0].mxu0 %v5600
    %v5827 = vpop.f32.mrb[0].mxu0
    %v5828 = vadd.f32 0.0, %v5827
    %v5829 = vpop.f32.mrb[0].mxu0
    %v5830 = vadd.f32 0.0, %v5829
    %v5831 = vpop.f32.mrb[0].mxu0
    %v5832 = vpop.f32.mrb[0].mxu0
    %5833 = vdwg.mxu0
    %5834 = vmatprep.subr.bf16.mxu0 %v5732
    %5835 = vmatpush1.bf16.msra.mxu0 %v5731
    %5836 = vmatprep.subr.bf16.mxu0 %v5736
    %5837 = vmatpush1.bf16.msra.mxu0 %v5735
    %5838 = vmatprep.subr.bf16.mxu0 %v5740
    %5839 = vmatpush1.bf16.msra.mxu0 %v5739
    %5840 = vmatprep.subr.bf16.mxu0 %v5744
    %5841 = vmatpush1.bf16.msra.mxu0 %v5743
    %5842 = vmatprep.subr.bf16.mxu0 %v5748
    %5843 = vmatpush1.bf16.msra.mxu0 %v5747
    %5844 = vmatprep.subr.bf16.mxu0 %v5752
    %5845 = vmatpush1.bf16.msra.mxu0 %v5751
    %5846 = vmatprep.subr.bf16.mxu0 %v5756
    %5847 = vmatpush1.bf16.msra.mxu0 %v5755
    %5848 = vmatprep.subr.bf16.mxu0 %v5760
    %5849 = vmatpush1.bf16.msra.mxu0 %v5759
    %5850 = vmatprep.subr.bf16.mxu0 0
    %5851 = vmatpush1.bf16.msra.mxu0 0
    %5852 = vmatprep.subr.bf16.mxu0 0
    %5853 = vmatpush1.bf16.msra.mxu0 0
    %5854 = vmatprep.subr.bf16.mxu0 0
    %5855 = vmatpush1.bf16.msra.mxu0 0
    %5856 = vmatprep.subr.bf16.mxu0 0
    %5857 = vmatpush1.bf16.msra.mxu0 0
    %5858 = vmatprep.subr.bf16.mxu0 0
    %5859 = vmatpush1.bf16.msra.mxu0 0
    %5860 = vmatprep.subr.bf16.mxu0 0
    %5861 = vmatpush1.bf16.msra.mxu0 0
    %5862 = vmatprep.subr.bf16.mxu0 0
    %5863 = vmatpush1.bf16.msra.mxu0 0
    %5864 = vmatprep.subr.bf16.mxu0 0
    %5865 = vmatpush1.bf16.msra.mxu0 0
    %5866 = vmatprep.mubr.bf16.mxu0 0
    %5867 = vmatmul.mubr.bf16.gmra.mrb[0].mxu0 %v5600
    %v5868 = vpop.f32.mrb[0].mxu0
    %v5869 = vadd.f32 0.0, %v5868
    %v5870 = vpop.f32.mrb[0].mxu0
    %v5871 = vadd.f32 0.0, %v5870
    %v5872 = vpop.f32.mrb[0].mxu0
    %v5873 = vpop.f32.mrb[0].mxu0
    %5874 = vdwg.mxu0
    %v5875 = vadd.f32 %v5596, %v5828
    %v5876 = vadd.f32 %v5597, %v5830
    %v5877 = vadd.f32 %v5598, %v5869
    %v5878 = vadd.f32 %v5599, %v5871
    %v5879 = vxor.u32 %v5875, 2147483648
    %v5880 = vmul.f32 %v5879, 1.442695
    %v5881 = vpow.pop %v5880
    %v5882 = vadd.f32 %v5881, 1.0
    %v5883 = vrcp.pop %v5882
    %v5884 = vmul.f32 1.0, %v5883
    %v5885 = vxor.u32 %v5876, 2147483648
    %v5886 = vmul.f32 %v5885, 1.442695
    %v5887 = vpow.pop %v5886
    %v5888 = vadd.f32 %v5887, 1.0
    %v5889 = vrcp.pop %v5888
    %v5890 = vmul.f32 1.0, %v5889
    %v5891 = vtanh.pop %v5877
    %v5892 = vxor.u32 %v5878, 2147483648
    %v5893 = vmul.f32 %v5892, 1.442695
    %v5894 = vpow.pop %v5893
    %v5895 = vadd.f32 %v5894, 1.0
    %v5896 = vrcp.pop %v5895
    %v5897 = vmul.f32 1.0, %v5896
    %v5898 = vmul.f32 %v5890, %v5592
    %v5899 = vmul.f32 %v5884, %v5891
    %v5900 = vadd.f32 %v5898, %v5899
    %v5901 = vtanh.pop %v5900
    %v5902 = vmul.f32 %v5897, %v5901
    %5903 = vst [vmem:[%s3035] sm:$0xff] %v5902
    %v5904 = vld [vmem:[#allocation14] sm:$0xff]
    %v5905 = vld [vmem:[#allocation14 + $0x8] sm:$0xff]
    %v5906 = vld [vmem:[#allocation14 + $0x10] sm:$0xff]
    %v5907 = vld [vmem:[#allocation14 + $0x18] sm:$0xff]
    %v5908 = vld [vmem:[#allocation14 + $0x20] sm:$0xff]
    %v5909 = vld [vmem:[#allocation14 + $0x28] sm:$0xff]
    %v5910 = vld [vmem:[#allocation14 + $0x30] sm:$0xff]
    %v5911 = vld [vmem:[#allocation14 + $0x38] sm:$0xff]
    %v5912 = vpack.c.bf16 %v5905, %v5904
    %v5913 = vpack.c.bf16 %v5907, %v5906
    %v5914 = vpack.c.bf16 %v5909, %v5908
    %v5915 = vpack.c.bf16 %v5911, %v5910
    %v5916 = vld [vmem:[#allocation12] sm:$0xf]
    %v5917 = vld [vmem:[#allocation12 + $0x4] sm:$0xf]
    %v5918 = vld [vmem:[#allocation12 + $0x8] sm:$0xf]
    %v5919 = vld [vmem:[#allocation12 + $0xc] sm:$0xf]
    %v5920 = vld [vmem:[#allocation12 + $0x10] sm:$0xf]
    %v5921 = vld [vmem:[#allocation12 + $0x14] sm:$0xf]
    %v5922 = vld [vmem:[#allocation12 + $0x18] sm:$0xf]
    %v5923 = vld [vmem:[#allocation12 + $0x1c] sm:$0xf]
    %v5924 = vld [vmem:[#allocation12 + $0x20] sm:$0xf]
    %v5925 = vld [vmem:[#allocation12 + $0x24] sm:$0xf]
    %v5926 = vld [vmem:[#allocation12 + $0x28] sm:$0xf]
    %v5927 = vld [vmem:[#allocation12 + $0x2c] sm:$0xf]
    %v5928 = vld [vmem:[#allocation12 + $0x30] sm:$0xf]
    %v5929 = vld [vmem:[#allocation12 + $0x34] sm:$0xf]
    %v5930 = vld [vmem:[#allocation12 + $0x38] sm:$0xf]
    %v5931 = vld [vmem:[#allocation12 + $0x3c] sm:$0xf]
    %v5932 = vld [vmem:[%s8] sm:$0x1]
    %v5934 = vlaneseq
    %v5935 = vshrl.u32 %v5934, 7
    %v5936 = vsub.s32 0, %v5935
    %v5937 = vrot.slane %v5932, %v5936
    %v5955 = vunpack.c.l.b16 %v5916
    %v5956 = vunpack.c.l.b16 %v5917
    %v5957 = vunpack.c.l.b16 %v5918
    %v5958 = vunpack.c.l.b16 %v5919
    %v5959 = vunpack.c.l.b16 %v5920
    %v5960 = vunpack.c.l.b16 %v5921
    %v5961 = vunpack.c.l.b16 %v5922
    %v5962 = vunpack.c.l.b16 %v5923
    %v5963 = vunpack.c.l.b16 %v5924
    %v5964 = vunpack.c.l.b16 %v5925
    %v5965 = vunpack.c.l.b16 %v5926
    %v5966 = vunpack.c.l.b16 %v5927
    %v5967 = vunpack.c.l.b16 %v5928
    %v5968 = vunpack.c.l.b16 %v5929
    %v5969 = vunpack.c.l.b16 %v5930
    %v5970 = vunpack.c.l.b16 %v5931
    %v5971 = vpack.c.b16 %v5956, %v5955
    %v5972 = vpack.c.b16 %v5958, %v5957
    %v5973 = vpack.c.b16 %v5960, %v5959
    %v5974 = vpack.c.b16 %v5962, %v5961
    %v5975 = vpack.c.b16 %v5964, %v5963
    %v5976 = vpack.c.b16 %v5966, %v5965
    %v5977 = vpack.c.b16 %v5968, %v5967
    %v5978 = vpack.c.b16 %v5970, %v5969
    %5987 = vmatprep.subr.bf16.mxu0 0
    %5988 = vmatpush1.bf16.msra.mxu0 %v5971
    %5989 = vmatprep.subr.bf16.mxu0 0
    %5990 = vmatpush1.bf16.msra.mxu0 %v5972
    %5991 = vmatprep.subr.bf16.mxu0 0
    %5992 = vmatpush1.bf16.msra.mxu0 %v5973
    %5993 = vmatprep.subr.bf16.mxu0 0
    %5994 = vmatpush1.bf16.msra.mxu0 %v5974
    %5995 = vmatprep.subr.bf16.mxu0 0
    %5996 = vmatpush1.bf16.msra.mxu0 %v5975
    %5997 = vmatprep.subr.bf16.mxu0 0
    %5998 = vmatpush1.bf16.msra.mxu0 %v5976
    %5999 = vmatprep.subr.bf16.mxu0 0
    %6000 = vmatpush1.bf16.msra.mxu0 %v5977
    %6001 = vmatprep.subr.bf16.mxu0 0
    %6002 = vmatpush1.bf16.msra.mxu0 %v5978
    %6003 = vmatprep.subr.bf16.mxu0 0
    %6004 = vmatpush1.bf16.msra.mxu0 0
    %6005 = vmatprep.subr.bf16.mxu0 0
    %6006 = vmatpush1.bf16.msra.mxu0 0
    %6007 = vmatprep.subr.bf16.mxu0 0
    %6008 = vmatpush1.bf16.msra.mxu0 0
    %6009 = vmatprep.subr.bf16.mxu0 0
    %6010 = vmatpush1.bf16.msra.mxu0 0
    %6011 = vmatprep.subr.bf16.mxu0 0
    %6012 = vmatpush1.bf16.msra.mxu0 0
    %6013 = vmatprep.subr.bf16.mxu0 0
    %6014 = vmatpush1.bf16.msra.mxu0 0
    %6015 = vmatprep.subr.bf16.mxu0 0
    %6016 = vmatpush1.bf16.msra.mxu0 0
    %6017 = vmatprep.subr.bf16.mxu0 0
    %6018 = vmatpush1.bf16.msra.mxu0 0
    %6019 = vmatprep.mubr.bf16.mxu0 0
    %6020 = vmatmul.mubr.bf16.gmra.mrb[0].mxu0 %v5912
    %v6021 = vpop.f32.mrb[0].mxu0
    %v6022 = vadd.f32 %v5937, %v6021
    %v6023 = vpop.f32.mrb[0].mxu0
    %v6024 = vpop.f32.mrb[0].mxu0
    %v6025 = vadd.f32 %v5937, %v6024
    %v6026 = vpop.f32.mrb[0].mxu0
    %6027 = vmatprep.mubr.bf16.mxu0 0
    %6028 = vmatmul.mubr.bf16.gmra.mrb[0].mxu0 %v5913
    %v6029 = vpop.f32.mrb[0].mxu0
    %v6030 = vadd.f32 %v5937, %v6029
    %v6031 = vpop.f32.mrb[0].mxu0
    %v6032 = vpop.f32.mrb[0].mxu0
    %v6033 = vadd.f32 %v5937, %v6032
    %v6034 = vpop.f32.mrb[0].mxu0
    %6035 = vmatprep.mubr.bf16.mxu0 0
    %6036 = vmatmul.mubr.bf16.gmra.mrb[0].mxu0 %v5914
    %v6037 = vpop.f32.mrb[0].mxu0
    %v6038 = vadd.f32 %v5937, %v6037
    %v6039 = vpop.f32.mrb[0].mxu0
    %v6040 = vpop.f32.mrb[0].mxu0
    %v6041 = vadd.f32 %v5937, %v6040
    %v6042 = vpop.f32.mrb[0].mxu0
    %6043 = vmatprep.mubr.bf16.mxu0 0
    %6044 = vmatmul.mubr.bf16.gmra.mrb[0].mxu0 %v5915
    %v6045 = vpop.f32.mrb[0].mxu0
    %v6046 = vadd.f32 %v5937, %v6045
    %v6047 = vpop.f32.mrb[0].mxu0
    %v6048 = vpop.f32.mrb[0].mxu0
    %v6049 = vadd.f32 %v5937, %v6048
    %v6050 = vpop.f32.mrb[0].mxu0
    %6051 = vdwg.mxu0
    %6052 = vst [vmem:[#allocation15] sm:$0xff] %v6022
    %6053 = vst [vmem:[#allocation15 + $0x8] sm:$0xff] %v6025
    %6054 = vst [vmem:[#allocation15 + $0x10] sm:$0xff] %v6030
    %6055 = vst [vmem:[#allocation15 + $0x18] sm:$0xff] %v6033
    %6056 = vst [vmem:[#allocation15 + $0x20] sm:$0xff] %v6038
    %6057 = vst [vmem:[#allocation15 + $0x28] sm:$0xff] %v6041
    %6058 = vst [vmem:[#allocation15 + $0x30] sm:$0xff] %v6046
    %6059 = vst [vmem:[#allocation15 + $0x38] sm:$0xff] %v6049
    // Predicated region
    $region62: #{tpu_custom_call.1} parent=1 // pred_check
      _
    $region63: #{tpu_custom_call.1} parent=1 // pred_check_branch
      %6061 = sbr.rel (0) target = $region65
    $region64: #{tpu_custom_call.1} parent=1 // pred_region
      %s6063 = ssub.s32 1024, 1024
      %6064 = vsyncadd [#allocation5], %s6063
      %s6065 = sshll.u32 [#allocation14], 4
      %s6066 = int_to_ptr.vmem [resolvable:$true] %s6065
      %6071 = dma.vmem_to_hbm [thread:$0]  %s6066, 1024, %s9, [#allocation5], 128, 128, 8
    $region65: #{tpu_custom_call.1} parent=1 // pred_fallthru
      _
    // Predicated region
    $region66: #{tpu_custom_call.1} parent=1 // pred_check
      _
    $region67: #{tpu_custom_call.1} parent=1 // pred_check_branch
      %6073 = sbr.rel (0) target = $region69
    $region68: #{tpu_custom_call.1} parent=1 // pred_region
      %s6075 = ssub.s32 1024, 1024
      %6076 = vsyncadd [#allocation16], %s6075
      %s6077 = sshll.u32 [#allocation15], 4
      %s6078 = int_to_ptr.vmem [resolvable:$true] %s6077
      %6083 = dma.vmem_to_hbm [thread:$0]  %s6078, 1024, %s10, [#allocation16], 128, 128, 8
    $region69: #{tpu_custom_call.1} parent=1 // pred_fallthru
      _
    // Predicated region
    $region70: #{tpu_custom_call.1} parent=1 // pred_check
      _
    $region71: #{tpu_custom_call.1} parent=1 // pred_check_branch
      %6085 = sbr.rel (0) target = $region73
    $region72: #{tpu_custom_call.1} parent=1 // pred_region
      %6086 = dma.done [#allocation5], 1024
    $region73: #{tpu_custom_call.1} parent=1 // pred_fallthru
      _
    // Predicated region
    $region74: #{tpu_custom_call.1} parent=1 // pred_check
      _
    $region75: #{tpu_custom_call.1} parent=1 // pred_check_branch
      %6088 = sbr.rel (0) target = $region77
    $region76: #{tpu_custom_call.1} parent=1 // pred_region
      %6089 = dma.done [#allocation16], 1024
    $region77: #{tpu_custom_call.1} parent=1 // pred_fallthru
      _
    %6090 = vsyncpa [#allocation4], 1
    %6091 = vsyncpa [#allocation7], 1
    %6092 = vsyncpa [#allocation10], 1
    %6093 = vsyncpa [#allocation13], 1
    %6094 = vsyncpa [#allocation5], 1
    %6095 = vsyncpa [#allocation16], 1

</llo_original>
